<compile_context>
chip_gen: v7x
topology: tpu7x:2x2x1
jax: 0.10.0
libtpu: 0.0.40
codegen_flags: <defaults>
</compile_context>

<pallas_src>
import math
import functools

import jax
import jax.numpy as jnp
from jax.experimental import pallas as pl
from jax.experimental.pallas import tpu as pltpu

NUM_GROUPS = 32   # normalization(channels) == GroupNorm32(32, channels)
EPS = 1e-5


def cross_attention_kernel(x_ref, cond_ref, gamma_ref, beta_ref, gmat_ref,
                           wq_ref, bq_ref, wkv_ref, bkv_ref,
                           wproj_ref, bproj_ref, o_ref, qkv_ref, a_ref,
                           *, num_heads):
    # Channel-major tiles: x/cond are [C, T] (lane axis = tokens).
    x = x_ref[...].astype(jnp.float32)        # [C, T]
    cond = cond_ref[...].astype(jnp.float32)  # [C, T]
    C, T = x.shape
    ch = C // num_heads

    gamma = gamma_ref[...]        # [C, 1] f32
    beta = beta_ref[...]          # [C, 1] f32
    gmat = gmat_ref[...]          # [C, C] f32: 1/(cg*T) for same-group pairs

    def group_norm(v):
        # Relayout-free GroupNorm32 (f32 stats, biased variance like torch):
        # per-channel sums over T (lane reductions), then mix channels within
        # each group via a tiny matmul.
        s1 = jnp.sum(v, axis=1, keepdims=True)         # [C, 1]
        s2 = jnp.sum(v * v, axis=1, keepdims=True)     # [C, 1]
        mean_c = jnp.dot(gmat, s1, preferred_element_type=jnp.float32)  # [C, 1]
        ex2_c = jnp.dot(gmat, s2, preferred_element_type=jnp.float32)   # [C, 1]
        rstd_c = jax.lax.rsqrt(ex2_c - mean_c * mean_c + EPS)
        scale = rstd_c * gamma
        shift = beta - mean_c * scale
        return (v * scale + shift).astype(jnp.bfloat16)

    cn = group_norm(cond)   # feeds the q  1x1 conv
    xn = group_norm(x)      # feeds the kv 1x1 conv

    # 1x1 convs == channel matmuls: W[out,in] @ act[in,T]  (bf16 operands,
    # f32 accumulation).  The q/k role pre-scale is already baked into the
    # weights/biases on the host.  Results land directly in the qkv scratch in
    # the legacy concatenation order -> no [3C, T] f32 value is ever live.
    qkv_ref[0:C, :] = (
        jnp.dot(wq_ref[...], cn, preferred_element_type=jnp.float32)
        + bq_ref[...]).astype(jnp.bfloat16)
    qkv_ref[C:3 * C, :] = (
        jnp.dot(wkv_ref[...], xn, preferred_element_type=jnp.float32)
        + bkv_ref[...]).astype(jnp.bfloat16)

    # QKVAttentionLegacy: head h uses the 3*ch-wide block of *concatenated*
    # channels starting at 3*ch*h (q / k / v sub-slabs of ch channels each).
    # Each head writes its [ch, T] result into the a_ref scratch, so only one
    # [T, T] score block is live at a time.
    for h in range(num_heads):
        base = 3 * ch * h
        q_h = qkv_ref[base:base + ch, :]                 # [ch, T] bf16 (pre-scaled)
        k_h = qkv_ref[base + ch:base + 2 * ch, :]        # [ch, T] bf16 (pre-scaled)
        v_h = qkv_ref[base + 2 * ch:base + 3 * ch, :]    # [ch, T] bf16

        # Keys on sublanes, queries on lanes -> softmax stats are [1, T] rows.
        s = jnp.dot(k_h.T, q_h, preferred_element_type=jnp.float32)   # [T_k, T_q] f32
        m = jnp.max(s, axis=0, keepdims=True)                          # [1, T]
        p = jnp.exp(s - m)                                             # [T, T] f32, <= 1
        denom = jnp.sum(p, axis=0, keepdims=True)                      # [1, T]

        # Deferred softmax normalization: PV on the unnormalized (<=1) bf16 p,
        # then scale only the [ch, T] result (EUP reciprocal, broadcast over
        # sublanes -> T*ch instead of T*T elementwise work).
        a_h = jnp.dot(v_h, p.astype(jnp.bfloat16),
                      preferred_element_type=jnp.float32)              # [ch, T] f32
        a_h = a_h * pl.reciprocal(denom, approx=True)
        a_ref[h * ch:(h + 1) * ch, :] = a_h.astype(jnp.bfloat16)

    # proj_out 1x1 conv + residual on the *raw* x.
    h_out = jnp.dot(wproj_ref[...], a_ref[...],
                    preferred_element_type=jnp.float32) + bproj_ref[...]   # [C, T]
    o_ref[...] = (x + h_out).astype(o_ref.dtype)


def cross_attention_block(x, cond, gamma, beta, wq, bq, wkv, bkv, wproj, bproj,
                          *, num_heads):
    """x, cond: [B, C, H, W] float32. Returns [B, C, H, W]."""
    B, C, Hs, Ws = x.shape
    T = Hs * Ws
    ch = C // num_heads
    assert C % NUM_GROUPS == 0 and C % num_heads == 0

    # Channel-major activations: a pure reshape, no transpose / extra HBM pass.
    x_r = x.reshape(B, C, T)
    cond_r = cond.reshape(B, C, T)

    # Fold the legacy q/k pre-scale (1/ch**0.25 each) into the conv weights.
    # Roles are determined by *concatenated* channel index j (legacy mapping):
    # within each 3*ch block, [0,ch)=q, [ch,2ch)=k, [2ch,3ch)=v.  Concat
    # channel j < C comes from the q-conv row j, j >= C from the kv-conv row
    # j - C.  Only q/k roles are scaled; v rows are untouched.
    qk_scale = 1.0 / math.sqrt(math.sqrt(ch))
    pos_in_block = jnp.arange(3 * C) % (3 * ch)
    row_scale = jnp.where(pos_in_block < 2 * ch, qk_scale, 1.0).astype(jnp.float32)

    wq_s = (wq * row_scale[:C, None]).astype(jnp.bfloat16)          # [C, C]
    bq_s = (bq * row_scale[:C]).reshape(C, 1).astype(jnp.float32)
    wkv_s = (wkv * row_scale[C:, None]).astype(jnp.bfloat16)        # [2C, C]
    bkv_s = (bkv * row_scale[C:]).reshape(2 * C, 1).astype(jnp.float32)
    wproj_b = wproj.astype(jnp.bfloat16)                            # [C, C]
    bproj_c = bproj.reshape(C, 1).astype(jnp.float32)
    gamma_c = gamma.reshape(C, 1).astype(jnp.float32)
    beta_c = beta.reshape(C, 1).astype(jnp.float32)

    # Group-mixing matrix: (gmat @ col_sums)[c] = mean over channel c's group.
    cg = C // NUM_GROUPS
    cidx = jnp.arange(C)
    gmat = ((cidx[:, None] // cg) == (cidx[None, :] // cg)).astype(jnp.float32)
    gmat = gmat / float(cg * T)

    kernel = functools.partial(cross_attention_kernel, num_heads=num_heads)

    # Scheduler hint for XLA around the custom call.
    flops = int(B * (8 * C * C * T + 4 * C * T * T))
    transcendentals = int(B * num_heads * T * T)
    bytes_accessed = int(3 * B * C * T * 4 + 4 * C * C * 2 + C * C * 4)

    out = pl.pallas_call(
        kernel,
        out_shape=jax.ShapeDtypeStruct((B, C, T), x.dtype),
        grid=(B,),
        in_specs=[
            pl.BlockSpec((None, C, T), lambda b: (b, 0, 0)),   # x    -> [C, T]
            pl.BlockSpec((None, C, T), lambda b: (b, 0, 0)),   # cond -> [C, T]
            pl.BlockSpec((C, 1), lambda b: (0, 0)),            # gamma
            pl.BlockSpec((C, 1), lambda b: (0, 0)),            # beta
            pl.BlockSpec((C, C), lambda b: (0, 0)),            # gmat
            pl.BlockSpec((C, C), lambda b: (0, 0)),            # Wq   (pre-scaled)
            pl.BlockSpec((C, 1), lambda b: (0, 0)),            # b_q  (pre-scaled)
            pl.BlockSpec((2 * C, C), lambda b: (0, 0)),        # Wkv  (pre-scaled)
            pl.BlockSpec((2 * C, 1), lambda b: (0, 0)),        # b_kv (pre-scaled)
            pl.BlockSpec((C, C), lambda b: (0, 0)),            # Wproj
            pl.BlockSpec((C, 1), lambda b: (0, 0)),            # b_proj
        ],
        out_specs=pl.BlockSpec((None, C, T), lambda b: (b, 0, 0)),
        scratch_shapes=[
            pltpu.VMEM((3 * C, T), jnp.bfloat16),   # qkv in legacy concat order
            pltpu.VMEM((C, T), jnp.bfloat16),       # per-head attention output
        ],
        compiler_params=pltpu.CompilerParams(
            dimension_semantics=("parallel",)),
        cost_estimate=pl.CostEstimate(flops=flops,
                                      transcendentals=transcendentals,
                                      bytes_accessed=bytes_accessed),
    )(x_r, cond_r, gamma_c, beta_c, gmat, wq_s, bq_s, wkv_s, bkv_s,
      wproj_b, bproj_c)

    # Free reshape back to NCHW.
    return out.reshape(B, C, Hs, Ws)


def cross_attention_block_ref(x, cond, gamma, beta, wq, bq, wkv, bkv, wproj,
                              bproj, *, num_heads):
    """Pure-JAX f32 reference of CrossAttentionBlock._forward (legacy attention)."""
    B, C, Hs, Ws = x.shape
    T = Hs * Ws
    xr = x.reshape(B, C, T).astype(jnp.float32)
    cr = cond.reshape(B, C, T).astype(jnp.float32)
    G = NUM_GROUPS

    def gn(v):
        vg = v.reshape(B, G, (C // G) * T)
        mean = vg.mean(axis=2, keepdims=True)
        var = ((vg - mean) ** 2).mean(axis=2, keepdims=True)
        vn = ((vg - mean) / jnp.sqrt(var + EPS)).reshape(B, C, T)
        return vn * gamma[None, :, None] + beta[None, :, None]

    q = jnp.einsum('oc,bct->bot', wq, gn(cr)) + bq[None, :, None]
    kv = jnp.einsum('oc,bct->bot', wkv, gn(xr)) + bkv[None, :, None]
    qkv = jnp.concatenate([q, kv], axis=1)                         # [B, 3C, T]
    ch = C // num_heads
    qkv_h = qkv.reshape(B * num_heads, 3 * ch, T)
    qh, kh, vh = qkv_h[:, :ch], qkv_h[:, ch:2 * ch], qkv_h[:, 2 * ch:]
    scale = 1.0 / math.sqrt(math.sqrt(ch))
    w = jnp.einsum('bct,bcs->bts', qh * scale, kh * scale)
    w = jax.nn.softmax(w, axis=-1)
    a = jnp.einsum('bts,bcs->bct', w, vh).reshape(B, C, T)
    hh = jnp.einsum('oc,bct->bot', wproj, a) + bproj[None, :, None]
    return (xr + hh).reshape(B, C, Hs, Ws)


if __name__ == "__main__":
    # Small but lane-dense verification shape: T = 16*16 = 256, C = 64
    # (divisible by 32 for GroupNorm32 and by num_heads -> ch = 16).
    B, C, Hs, Ws = 2, 64, 16, 16
    num_heads = 4

    key = jax.random.PRNGKey(0)
    keys = jax.random.split(key, 10)
    x = jax.random.normal(keys[0], (B, C, Hs, Ws), dtype=jnp.float32)
    cond = jax.random.normal(keys[1], (B, C, Hs, Ws), dtype=jnp.float32)

    # Deterministic synthetic parameters (shapes match the module's __init__).
    gamma = 1.0 + 0.1 * jax.random.normal(keys[2], (C,), dtype=jnp.float32)   # norm.weight
    beta = 0.1 * jax.random.normal(keys[3], (C,), dtype=jnp.float32)          # norm.bias
    wq = 0.1 * jax.random.normal(keys[4], (C, C), dtype=jnp.float32)          # q conv (k=1)
    bq = 0.1 * jax.random.normal(keys[5], (C,), dtype=jnp.float32)
    wkv = 0.1 * jax.random.normal(keys[6], (2 * C, C), dtype=jnp.float32)     # kv conv (k=1)
    bkv = 0.1 * jax.random.normal(keys[7], (2 * C,), dtype=jnp.float32)
    # NOTE: the original module zero-initializes proj_out (zero_module); use
    # small nonzero weights so the full kernel path is numerically exercised.
    wproj = 0.1 * jax.random.normal(keys[8], (C, C), dtype=jnp.float32)       # proj_out conv
    bproj = 0.1 * jax.random.normal(keys[9], (C,), dtype=jnp.float32)

    fwd = jax.jit(functools.partial(cross_attention_block, num_heads=num_heads))
    out = jax.block_until_ready(
        fwd(x, cond, gamma, beta, wq, bq, wkv, bkv, wproj, bproj))

    ref = cross_attention_block_ref(x, cond, gamma, beta, wq, bq, wkv, bkv,
                                    wproj, bproj, num_heads=num_heads)
    assert out.shape == (B, C, Hs, Ws)
    max_err = float(jnp.max(jnp.abs(out - ref)))
    # bf16 MXU operands (incl. pre-scaled weights) + approx softmax reciprocal
    # vs. a pure-f32 reference -> allow bf16-level slack.
    assert jnp.allclose(out, ref, atol=2e-2, rtol=2e-2), max_err

    print("KERNEL_OK")
</pallas_src>

<mosaic_0001>
module attributes {stable_mosaic.version = 11 : i64} {
  func.func @cross_attention_kernel(%arg0: i32, %arg1: memref<1x64x256xf32, #tpu.memory_space<vmem>>, %arg2: memref<1x64x256xf32, #tpu.memory_space<vmem>>, %arg3: memref<64x1xf32, #tpu.memory_space<vmem>>, %arg4: memref<64x1xf32, #tpu.memory_space<vmem>>, %arg5: memref<64x64xf32, #tpu.memory_space<vmem>>, %arg6: memref<64x64xbf16, #tpu.memory_space<vmem>>, %arg7: memref<64x1xf32, #tpu.memory_space<vmem>>, %arg8: memref<128x64xbf16, #tpu.memory_space<vmem>>, %arg9: memref<128x1xf32, #tpu.memory_space<vmem>>, %arg10: memref<64x64xbf16, #tpu.memory_space<vmem>>, %arg11: memref<64x1xf32, #tpu.memory_space<vmem>>, %arg12: memref<1x64x256xf32, #tpu.memory_space<vmem>>, %arg13: memref<192x256xbf16, #tpu.memory_space<vmem>>, %arg14: memref<64x256xbf16, #tpu.memory_space<vmem>>) attributes {dimension_semantics = [#tpu.dimension_semantics<parallel>], iteration_bounds = array<i64: 2>, scalar_prefetch = 0 : i64, scratch_operands = 2 : i64, tpu.core_type = #tpu.core_type<tc>, window_params = [{transform_indices = @transform_0, window_bounds = array<i64: 1, 64, 256>}, {transform_indices = @transform_1, window_bounds = array<i64: 1, 64, 256>}, {pipeline_mode = #tpu.pipeline_mode<synchronous>, transform_indices = @transform_2, window_bounds = array<i64: 64, 1>}, {pipeline_mode = #tpu.pipeline_mode<synchronous>, transform_indices = @transform_3, window_bounds = array<i64: 64, 1>}, {pipeline_mode = #tpu.pipeline_mode<synchronous>, transform_indices = @transform_4, window_bounds = array<i64: 64, 64>}, {pipeline_mode = #tpu.pipeline_mode<synchronous>, transform_indices = @transform_5, window_bounds = array<i64: 64, 64>}, {pipeline_mode = #tpu.pipeline_mode<synchronous>, transform_indices = @transform_6, window_bounds = array<i64: 64, 1>}, {pipeline_mode = #tpu.pipeline_mode<synchronous>, transform_indices = @transform_7, window_bounds = array<i64: 128, 64>}, {pipeline_mode = #tpu.pipeline_mode<synchronous>, transform_indices = @transform_8, window_bounds = array<i64: 128, 1>}, {pipeline_mode = #tpu.pipeline_mode<synchronous>, transform_indices = @transform_9, window_bounds = array<i64: 64, 64>}, {pipeline_mode = #tpu.pipeline_mode<synchronous>, transform_indices = @transform_10, window_bounds = array<i64: 64, 1>}, {transform_indices = @transform_11, window_bounds = array<i64: 1, 64, 256>}]} {
    %c0 = arith.constant 0 : index
    %c0_0 = arith.constant 0 : index
    %c0_1 = arith.constant 0 : index
    %0 = vector.load %arg1[%c0, %c0_0, %c0_1] : memref<1x64x256xf32, #tpu.memory_space<vmem>>, vector<1x64x256xf32>
    %1 = vector.shape_cast %0 : vector<1x64x256xf32> to vector<64x256xf32>
    %c0_2 = arith.constant 0 : index
    %c0_3 = arith.constant 0 : index
    %c0_4 = arith.constant 0 : index
    %2 = vector.load %arg2[%c0_2, %c0_3, %c0_4] : memref<1x64x256xf32, #tpu.memory_space<vmem>>, vector<1x64x256xf32>
    %3 = vector.shape_cast %2 : vector<1x64x256xf32> to vector<64x256xf32>
    %c0_5 = arith.constant 0 : index
    %c0_6 = arith.constant 0 : index
    %4 = vector.load %arg3[%c0_5, %c0_6] : memref<64x1xf32, #tpu.memory_space<vmem>>, vector<64x1xf32>
    %c0_7 = arith.constant 0 : index
    %c0_8 = arith.constant 0 : index
    %5 = vector.load %arg4[%c0_7, %c0_8] : memref<64x1xf32, #tpu.memory_space<vmem>>, vector<64x1xf32>
    %c0_9 = arith.constant 0 : index
    %c0_10 = arith.constant 0 : index
    %6 = vector.load %arg5[%c0_9, %c0_10] : memref<64x64xf32, #tpu.memory_space<vmem>>, vector<64x64xf32>
    %cst = arith.constant dense<0.000000e+00> : vector<64xf32>
    %7 = vector.multi_reduction <add>, %3, %cst [1] : vector<64x256xf32> to vector<64xf32>
    %8 = vector.shape_cast %7 : vector<64xf32> to vector<64x1xf32>
    %9 = arith.mulf %3, %3 : vector<64x256xf32>
    %cst_11 = arith.constant dense<0.000000e+00> : vector<64xf32>
    %10 = vector.multi_reduction <add>, %9, %cst_11 [1] : vector<64x256xf32> to vector<64xf32>
    %11 = vector.shape_cast %10 : vector<64xf32> to vector<64x1xf32>
    %cst_12 = arith.constant dense<0.000000e+00> : vector<64x1xf32>
    %12 = tpu.matmul %6, %8, %cst_12 {dimension_numbers = #tpu.dot_dimension_numbers<[1], [0], [0], [1], [0, 0, 1, 1], [], []>} : vector<64x64xf32>, vector<64x1xf32>, vector<64x1xf32> -> vector<64x1xf32>
    %cst_13 = arith.constant dense<0.000000e+00> : vector<64x1xf32>
    %13 = tpu.matmul %6, %11, %cst_13 {dimension_numbers = #tpu.dot_dimension_numbers<[1], [0], [0], [1], [0, 0, 1, 1], [], []>} : vector<64x64xf32>, vector<64x1xf32>, vector<64x1xf32> -> vector<64x1xf32>
    %14 = arith.mulf %12, %12 : vector<64x1xf32>
    %15 = arith.subf %13, %14 : vector<64x1xf32>
    %cst_14 = arith.constant 9.99999974E-6 : f32
    %16 = vector.broadcast %cst_14 : f32 to vector<64x1xf32>
    %17 = arith.addf %15, %16 : vector<64x1xf32>
    %18 = math.rsqrt %17 : vector<64x1xf32>
    %19 = arith.mulf %18, %4 : vector<64x1xf32>
    %20 = arith.mulf %12, %19 : vector<64x1xf32>
    %21 = arith.subf %5, %20 : vector<64x1xf32>
    %22 = vector.broadcast %19 : vector<64x1xf32> to vector<64x256xf32>
    %23 = arith.mulf %3, %22 : vector<64x256xf32>
    %24 = vector.broadcast %21 : vector<64x1xf32> to vector<64x256xf32>
    %25 = arith.addf %23, %24 : vector<64x256xf32>
    %26 = arith.truncf %25 : vector<64x256xf32> to vector<64x256xbf16>
    %cst_15 = arith.constant dense<0.000000e+00> : vector<64xf32>
    %27 = vector.multi_reduction <add>, %1, %cst_15 [1] : vector<64x256xf32> to vector<64xf32>
    %28 = vector.shape_cast %27 : vector<64xf32> to vector<64x1xf32>
    %29 = arith.mulf %1, %1 : vector<64x256xf32>
    %cst_16 = arith.constant dense<0.000000e+00> : vector<64xf32>
    %30 = vector.multi_reduction <add>, %29, %cst_16 [1] : vector<64x256xf32> to vector<64xf32>
    %31 = vector.shape_cast %30 : vector<64xf32> to vector<64x1xf32>
    %cst_17 = arith.constant dense<0.000000e+00> : vector<64x1xf32>
    %32 = tpu.matmul %6, %28, %cst_17 {dimension_numbers = #tpu.dot_dimension_numbers<[1], [0], [0], [1], [0, 0, 1, 1], [], []>} : vector<64x64xf32>, vector<64x1xf32>, vector<64x1xf32> -> vector<64x1xf32>
    %cst_18 = arith.constant dense<0.000000e+00> : vector<64x1xf32>
    %33 = tpu.matmul %6, %31, %cst_18 {dimension_numbers = #tpu.dot_dimension_numbers<[1], [0], [0], [1], [0, 0, 1, 1], [], []>} : vector<64x64xf32>, vector<64x1xf32>, vector<64x1xf32> -> vector<64x1xf32>
    %34 = arith.mulf %32, %32 : vector<64x1xf32>
    %35 = arith.subf %33, %34 : vector<64x1xf32>
    %cst_19 = arith.constant 9.99999974E-6 : f32
    %36 = vector.broadcast %cst_19 : f32 to vector<64x1xf32>
    %37 = arith.addf %35, %36 : vector<64x1xf32>
    %38 = math.rsqrt %37 : vector<64x1xf32>
    %39 = arith.mulf %38, %4 : vector<64x1xf32>
    %40 = arith.mulf %32, %39 : vector<64x1xf32>
    %41 = arith.subf %5, %40 : vector<64x1xf32>
    %42 = vector.broadcast %39 : vector<64x1xf32> to vector<64x256xf32>
    %43 = arith.mulf %1, %42 : vector<64x256xf32>
    %44 = vector.broadcast %41 : vector<64x1xf32> to vector<64x256xf32>
    %45 = arith.addf %43, %44 : vector<64x256xf32>
    %46 = arith.truncf %45 : vector<64x256xf32> to vector<64x256xbf16>
    %c0_20 = arith.constant 0 : index
    %c0_21 = arith.constant 0 : index
    %47 = vector.load %arg6[%c0_20, %c0_21] : memref<64x64xbf16, #tpu.memory_space<vmem>>, vector<64x64xbf16>
    %cst_22 = arith.constant dense<0.000000e+00> : vector<64x256xf32>
    %48 = tpu.matmul %47, %26, %cst_22 {dimension_numbers = #tpu.dot_dimension_numbers<[1], [0], [0], [1], [0, 0, 1, 1], [], []>} : vector<64x64xbf16>, vector<64x256xbf16>, vector<64x256xf32> -> vector<64x256xf32>
    %c0_23 = arith.constant 0 : index
    %c0_24 = arith.constant 0 : index
    %49 = vector.load %arg7[%c0_23, %c0_24] : memref<64x1xf32, #tpu.memory_space<vmem>>, vector<64x1xf32>
    %50 = vector.broadcast %49 : vector<64x1xf32> to vector<64x256xf32>
    %51 = arith.addf %48, %50 : vector<64x256xf32>
    %52 = arith.truncf %51 : vector<64x256xf32> to vector<64x256xbf16>
    %c0_25 = arith.constant 0 : index
    %c0_26 = arith.constant 0 : index
    %53 = vector.load %arg13[%c0_25, %c0_26] : memref<192x256xbf16, #tpu.memory_space<vmem>>, vector<64x256xbf16>
    tpu.vector_store %arg13[%c0_25, %c0_26], %52 {strides = array<i32>} : memref<192x256xbf16, #tpu.memory_space<vmem>>, vector<64x256xbf16>,
    %c0_27 = arith.constant 0 : index
    %c0_28 = arith.constant 0 : index
    %54 = vector.load %arg8[%c0_27, %c0_28] : memref<128x64xbf16, #tpu.memory_space<vmem>>, vector<128x64xbf16>
    %cst_29 = arith.constant dense<0.000000e+00> : vector<128x256xf32>
    %55 = tpu.matmul %54, %46, %cst_29 {dimension_numbers = #tpu.dot_dimension_numbers<[1], [0], [0], [1], [0, 0, 1, 1], [], []>} : vector<128x64xbf16>, vector<64x256xbf16>, vector<128x256xf32> -> vector<128x256xf32>
    %c0_30 = arith.constant 0 : index
    %c0_31 = arith.constant 0 : index
    %56 = vector.load %arg9[%c0_30, %c0_31] : memref<128x1xf32, #tpu.memory_space<vmem>>, vector<128x1xf32>
    %57 = vector.broadcast %56 : vector<128x1xf32> to vector<128x256xf32>
    %58 = arith.addf %55, %57 : vector<128x256xf32>
    %59 = arith.truncf %58 : vector<128x256xf32> to vector<128x256xbf16>
    %c64 = arith.constant 64 : index
    %c0_32 = arith.constant 0 : index
    %60 = vector.load %arg13[%c64, %c0_32] : memref<192x256xbf16, #tpu.memory_space<vmem>>, vector<128x256xbf16>
    tpu.vector_store %arg13[%c64, %c0_32], %59 {strides = array<i32>} : memref<192x256xbf16, #tpu.memory_space<vmem>>, vector<128x256xbf16>,
    %c0_33 = arith.constant 0 : index
    %c0_34 = arith.constant 0 : index
    %61 = vector.load %arg13[%c0_33, %c0_34] : memref<192x256xbf16, #tpu.memory_space<vmem>>, vector<16x256xbf16>
    %c16 = arith.constant 16 : index
    %c0_35 = arith.constant 0 : index
    %62 = vector.load %arg13[%c16, %c0_35] : memref<192x256xbf16, #tpu.memory_space<vmem>>, vector<16x256xbf16>
    %c32 = arith.constant 32 : index
    %c0_36 = arith.constant 0 : index
    %63 = vector.load %arg13[%c32, %c0_36] : memref<192x256xbf16, #tpu.memory_space<vmem>>, vector<16x256xbf16>
    %64 = tpu.transpose %62, [1, 0] : vector<16x256xbf16> -> vector<256x16xbf16>
    %cst_37 = arith.constant dense<0.000000e+00> : vector<256x256xf32>
    %65 = tpu.matmul %64, %61, %cst_37 {dimension_numbers = #tpu.dot_dimension_numbers<[1], [0], [0], [1], [0, 0, 1, 1], [], []>} : vector<256x16xbf16>, vector<16x256xbf16>, vector<256x256xf32> -> vector<256x256xf32>
    %cst_38 = arith.constant dense<0xFF800000> : vector<256xf32>
    %66 = vector.multi_reduction <maximumf>, %65, %cst_38 [0] : vector<256x256xf32> to vector<256xf32>
    %67 = vector.shape_cast %66 : vector<256xf32> to vector<1x256xf32>
    %68 = vector.broadcast %67 : vector<1x256xf32> to vector<256x256xf32>
    %69 = arith.subf %65, %68 : vector<256x256xf32>
    %70 = math.exp %69 : vector<256x256xf32>
    %cst_39 = arith.constant dense<0.000000e+00> : vector<256xf32>
    %71 = vector.multi_reduction <add>, %70, %cst_39 [0] : vector<256x256xf32> to vector<256xf32>
    %72 = vector.shape_cast %71 : vector<256xf32> to vector<1x256xf32>
    %73 = arith.truncf %70 : vector<256x256xf32> to vector<256x256xbf16>
    %cst_40 = arith.constant dense<0.000000e+00> : vector<16x256xf32>
    %74 = tpu.matmul %63, %73, %cst_40 {dimension_numbers = #tpu.dot_dimension_numbers<[1], [0], [0], [1], [0, 0, 1, 1], [], []>} : vector<16x256xbf16>, vector<256x256xbf16>, vector<16x256xf32> -> vector<16x256xf32>
    %75 = tpu.reciprocal %72 {approx = true} : vector<1x256xf32> -> vector<1x256xf32>
    %76 = vector.broadcast %75 : vector<1x256xf32> to vector<16x256xf32>
    %77 = arith.mulf %74, %76 : vector<16x256xf32>
    %78 = arith.truncf %77 : vector<16x256xf32> to vector<16x256xbf16>
    %c0_41 = arith.constant 0 : index
    %c0_42 = arith.constant 0 : index
    %79 = vector.load %arg14[%c0_41, %c0_42] : memref<64x256xbf16, #tpu.memory_space<vmem>>, vector<16x256xbf16>
    tpu.vector_store %arg14[%c0_41, %c0_42], %78 {strides = array<i32>} : memref<64x256xbf16, #tpu.memory_space<vmem>>, vector<16x256xbf16>,
    %c48 = arith.constant 48 : index
    %c0_43 = arith.constant 0 : index
    %80 = vector.load %arg13[%c48, %c0_43] : memref<192x256xbf16, #tpu.memory_space<vmem>>, vector<16x256xbf16>
    %c64_44 = arith.constant 64 : index
    %c0_45 = arith.constant 0 : index
    %81 = vector.load %arg13[%c64_44, %c0_45] : memref<192x256xbf16, #tpu.memory_space<vmem>>, vector<16x256xbf16>
    %c80 = arith.constant 80 : index
    %c0_46 = arith.constant 0 : index
    %82 = vector.load %arg13[%c80, %c0_46] : memref<192x256xbf16, #tpu.memory_space<vmem>>, vector<16x256xbf16>
    %83 = tpu.transpose %81, [1, 0] : vector<16x256xbf16> -> vector<256x16xbf16>
    %cst_47 = arith.constant dense<0.000000e+00> : vector<256x256xf32>
    %84 = tpu.matmul %83, %80, %cst_47 {dimension_numbers = #tpu.dot_dimension_numbers<[1], [0], [0], [1], [0, 0, 1, 1], [], []>} : vector<256x16xbf16>, vector<16x256xbf16>, vector<256x256xf32> -> vector<256x256xf32>
    %cst_48 = arith.constant dense<0xFF800000> : vector<256xf32>
    %85 = vector.multi_reduction <maximumf>, %84, %cst_48 [0] : vector<256x256xf32> to vector<256xf32>
    %86 = vector.shape_cast %85 : vector<256xf32> to vector<1x256xf32>
    %87 = vector.broadcast %86 : vector<1x256xf32> to vector<256x256xf32>
    %88 = arith.subf %84, %87 : vector<256x256xf32>
    %89 = math.exp %88 : vector<256x256xf32>
    %cst_49 = arith.constant dense<0.000000e+00> : vector<256xf32>
    %90 = vector.multi_reduction <add>, %89, %cst_49 [0] : vector<256x256xf32> to vector<256xf32>
    %91 = vector.shape_cast %90 : vector<256xf32> to vector<1x256xf32>
    %92 = arith.truncf %89 : vector<256x256xf32> to vector<256x256xbf16>
    %cst_50 = arith.constant dense<0.000000e+00> : vector<16x256xf32>
    %93 = tpu.matmul %82, %92, %cst_50 {dimension_numbers = #tpu.dot_dimension_numbers<[1], [0], [0], [1], [0, 0, 1, 1], [], []>} : vector<16x256xbf16>, vector<256x256xbf16>, vector<16x256xf32> -> vector<16x256xf32>
    %94 = tpu.reciprocal %91 {approx = true} : vector<1x256xf32> -> vector<1x256xf32>
    %95 = vector.broadcast %94 : vector<1x256xf32> to vector<16x256xf32>
    %96 = arith.mulf %93, %95 : vector<16x256xf32>
    %97 = arith.truncf %96 : vector<16x256xf32> to vector<16x256xbf16>
    %c16_51 = arith.constant 16 : index
    %c0_52 = arith.constant 0 : index
    %98 = vector.load %arg14[%c16_51, %c0_52] : memref<64x256xbf16, #tpu.memory_space<vmem>>, vector<16x256xbf16>
    tpu.vector_store %arg14[%c16_51, %c0_52], %97 {strides = array<i32>} : memref<64x256xbf16, #tpu.memory_space<vmem>>, vector<16x256xbf16>,
    %c96 = arith.constant 96 : index
    %c0_53 = arith.constant 0 : index
    %99 = vector.load %arg13[%c96, %c0_53] : memref<192x256xbf16, #tpu.memory_space<vmem>>, vector<16x256xbf16>
    %c112 = arith.constant 112 : index
    %c0_54 = arith.constant 0 : index
    %100 = vector.load %arg13[%c112, %c0_54] : memref<192x256xbf16, #tpu.memory_space<vmem>>, vector<16x256xbf16>
    %c128 = arith.constant 128 : index
    %c0_55 = arith.constant 0 : index
    %101 = vector.load %arg13[%c128, %c0_55] : memref<192x256xbf16, #tpu.memory_space<vmem>>, vector<16x256xbf16>
    %102 = tpu.transpose %100, [1, 0] : vector<16x256xbf16> -> vector<256x16xbf16>
    %cst_56 = arith.constant dense<0.000000e+00> : vector<256x256xf32>
    %103 = tpu.matmul %102, %99, %cst_56 {dimension_numbers = #tpu.dot_dimension_numbers<[1], [0], [0], [1], [0, 0, 1, 1], [], []>} : vector<256x16xbf16>, vector<16x256xbf16>, vector<256x256xf32> -> vector<256x256xf32>
    %cst_57 = arith.constant dense<0xFF800000> : vector<256xf32>
    %104 = vector.multi_reduction <maximumf>, %103, %cst_57 [0] : vector<256x256xf32> to vector<256xf32>
    %105 = vector.shape_cast %104 : vector<256xf32> to vector<1x256xf32>
    %106 = vector.broadcast %105 : vector<1x256xf32> to vector<256x256xf32>
    %107 = arith.subf %103, %106 : vector<256x256xf32>
    %108 = math.exp %107 : vector<256x256xf32>
    %cst_58 = arith.constant dense<0.000000e+00> : vector<256xf32>
    %109 = vector.multi_reduction <add>, %108, %cst_58 [0] : vector<256x256xf32> to vector<256xf32>
    %110 = vector.shape_cast %109 : vector<256xf32> to vector<1x256xf32>
    %111 = arith.truncf %108 : vector<256x256xf32> to vector<256x256xbf16>
    %cst_59 = arith.constant dense<0.000000e+00> : vector<16x256xf32>
    %112 = tpu.matmul %101, %111, %cst_59 {dimension_numbers = #tpu.dot_dimension_numbers<[1], [0], [0], [1], [0, 0, 1, 1], [], []>} : vector<16x256xbf16>, vector<256x256xbf16>, vector<16x256xf32> -> vector<16x256xf32>
    %113 = tpu.reciprocal %110 {approx = true} : vector<1x256xf32> -> vector<1x256xf32>
    %114 = vector.broadcast %113 : vector<1x256xf32> to vector<16x256xf32>
    %115 = arith.mulf %112, %114 : vector<16x256xf32>
    %116 = arith.truncf %115 : vector<16x256xf32> to vector<16x256xbf16>
    %c32_60 = arith.constant 32 : index
    %c0_61 = arith.constant 0 : index
    %117 = vector.load %arg14[%c32_60, %c0_61] : memref<64x256xbf16, #tpu.memory_space<vmem>>, vector<16x256xbf16>
    tpu.vector_store %arg14[%c32_60, %c0_61], %116 {strides = array<i32>} : memref<64x256xbf16, #tpu.memory_space<vmem>>, vector<16x256xbf16>,
    %c144 = arith.constant 144 : index
    %c0_62 = arith.constant 0 : index
    %118 = vector.load %arg13[%c144, %c0_62] : memref<192x256xbf16, #tpu.memory_space<vmem>>, vector<16x256xbf16>
    %c160 = arith.constant 160 : index
    %c0_63 = arith.constant 0 : index
    %119 = vector.load %arg13[%c160, %c0_63] : memref<192x256xbf16, #tpu.memory_space<vmem>>, vector<16x256xbf16>
    %c176 = arith.constant 176 : index
    %c0_64 = arith.constant 0 : index
    %120 = vector.load %arg13[%c176, %c0_64] : memref<192x256xbf16, #tpu.memory_space<vmem>>, vector<16x256xbf16>
    %121 = tpu.transpose %119, [1, 0] : vector<16x256xbf16> -> vector<256x16xbf16>
    %cst_65 = arith.constant dense<0.000000e+00> : vector<256x256xf32>
    %122 = tpu.matmul %121, %118, %cst_65 {dimension_numbers = #tpu.dot_dimension_numbers<[1], [0], [0], [1], [0, 0, 1, 1], [], []>} : vector<256x16xbf16>, vector<16x256xbf16>, vector<256x256xf32> -> vector<256x256xf32>
    %cst_66 = arith.constant dense<0xFF800000> : vector<256xf32>
    %123 = vector.multi_reduction <maximumf>, %122, %cst_66 [0] : vector<256x256xf32> to vector<256xf32>
    %124 = vector.shape_cast %123 : vector<256xf32> to vector<1x256xf32>
    %125 = vector.broadcast %124 : vector<1x256xf32> to vector<256x256xf32>
    %126 = arith.subf %122, %125 : vector<256x256xf32>
    %127 = math.exp %126 : vector<256x256xf32>
    %cst_67 = arith.constant dense<0.000000e+00> : vector<256xf32>
    %128 = vector.multi_reduction <add>, %127, %cst_67 [0] : vector<256x256xf32> to vector<256xf32>
    %129 = vector.shape_cast %128 : vector<256xf32> to vector<1x256xf32>
    %130 = arith.truncf %127 : vector<256x256xf32> to vector<256x256xbf16>
    %cst_68 = arith.constant dense<0.000000e+00> : vector<16x256xf32>
    %131 = tpu.matmul %120, %130, %cst_68 {dimension_numbers = #tpu.dot_dimension_numbers<[1], [0], [0], [1], [0, 0, 1, 1], [], []>} : vector<16x256xbf16>, vector<256x256xbf16>, vector<16x256xf32> -> vector<16x256xf32>
    %132 = tpu.reciprocal %129 {approx = true} : vector<1x256xf32> -> vector<1x256xf32>
    %133 = vector.broadcast %132 : vector<1x256xf32> to vector<16x256xf32>
    %134 = arith.mulf %131, %133 : vector<16x256xf32>
    %135 = arith.truncf %134 : vector<16x256xf32> to vector<16x256xbf16>
    %c48_69 = arith.constant 48 : index
    %c0_70 = arith.constant 0 : index
    %136 = vector.load %arg14[%c48_69, %c0_70] : memref<64x256xbf16, #tpu.memory_space<vmem>>, vector<16x256xbf16>
    tpu.vector_store %arg14[%c48_69, %c0_70], %135 {strides = array<i32>} : memref<64x256xbf16, #tpu.memory_space<vmem>>, vector<16x256xbf16>,
    %c0_71 = arith.constant 0 : index
    %c0_72 = arith.constant 0 : index
    %137 = vector.load %arg10[%c0_71, %c0_72] : memref<64x64xbf16, #tpu.memory_space<vmem>>, vector<64x64xbf16>
    %c0_73 = arith.constant 0 : index
    %c0_74 = arith.constant 0 : index
    %138 = vector.load %arg14[%c0_73, %c0_74] : memref<64x256xbf16, #tpu.memory_space<vmem>>, vector<64x256xbf16>
    %cst_75 = arith.constant dense<0.000000e+00> : vector<64x256xf32>
    %139 = tpu.matmul %137, %138, %cst_75 {dimension_numbers = #tpu.dot_dimension_numbers<[1], [0], [0], [1], [0, 0, 1, 1], [], []>} : vector<64x64xbf16>, vector<64x256xbf16>, vector<64x256xf32> -> vector<64x256xf32>
    %c0_76 = arith.constant 0 : index
    %c0_77 = arith.constant 0 : index
    %140 = vector.load %arg11[%c0_76, %c0_77] : memref<64x1xf32, #tpu.memory_space<vmem>>, vector<64x1xf32>
    %141 = vector.broadcast %140 : vector<64x1xf32> to vector<64x256xf32>
    %142 = arith.addf %139, %141 : vector<64x256xf32>
    %143 = arith.addf %1, %142 : vector<64x256xf32>
    %c0_78 = arith.constant 0 : index
    %c0_79 = arith.constant 0 : index
    %c0_80 = arith.constant 0 : index
    %144 = vector.load %arg12[%c0_78, %c0_79, %c0_80] : memref<1x64x256xf32, #tpu.memory_space<vmem>>, vector<1x64x256xf32>
    %145 = vector.shape_cast %144 : vector<1x64x256xf32> to vector<64x256xf32>
    %146 = vector.shape_cast %143 : vector<64x256xf32> to vector<1x64x256xf32>
    tpu.vector_store %arg12[%c0_78, %c0_79, %c0_80], %146 {strides = array<i32>} : memref<1x64x256xf32, #tpu.memory_space<vmem>>, vector<1x64x256xf32>,
    return
  }
  func.func @transform_0(%arg0: i32) -> (i32, i32, i32) {
    %c0_i32 = arith.constant 0 : i32
    %c0_i32_0 = arith.constant 0 : i32
    %c0_i32_1 = arith.constant 0 : i32
    return %arg0, %c0_i32, %c0_i32_0 : i32, i32, i32
  }
  func.func @transform_1(%arg0: i32) -> (i32, i32, i32) {
    %c0_i32 = arith.constant 0 : i32
    %c0_i32_0 = arith.constant 0 : i32
    %c0_i32_1 = arith.constant 0 : i32
    return %arg0, %c0_i32, %c0_i32_0 : i32, i32, i32
  }
  func.func @transform_2(%arg0: i32) -> (i32, i32) {
    %c0_i32 = arith.constant 0 : i32
    %c0_i32_0 = arith.constant 0 : i32
    %c0_i32_1 = arith.constant 0 : i32
    return %c0_i32, %c0_i32_0 : i32, i32
  }
  func.func @transform_3(%arg0: i32) -> (i32, i32) {
    %c0_i32 = arith.constant 0 : i32
    %c0_i32_0 = arith.constant 0 : i32
    %c0_i32_1 = arith.constant 0 : i32
    return %c0_i32, %c0_i32_0 : i32, i32
  }
  func.func @transform_4(%arg0: i32) -> (i32, i32) {
    %c0_i32 = arith.constant 0 : i32
    %c0_i32_0 = arith.constant 0 : i32
    %c0_i32_1 = arith.constant 0 : i32
    return %c0_i32, %c0_i32_0 : i32, i32
  }
  func.func @transform_5(%arg0: i32) -> (i32, i32) {
    %c0_i32 = arith.constant 0 : i32
    %c0_i32_0 = arith.constant 0 : i32
    %c0_i32_1 = arith.constant 0 : i32
    return %c0_i32, %c0_i32_0 : i32, i32
  }
  func.func @transform_6(%arg0: i32) -> (i32, i32) {
    %c0_i32 = arith.constant 0 : i32
    %c0_i32_0 = arith.constant 0 : i32
    %c0_i32_1 = arith.constant 0 : i32
    return %c0_i32, %c0_i32_0 : i32, i32
  }
  func.func @transform_7(%arg0: i32) -> (i32, i32) {
    %c0_i32 = arith.constant 0 : i32
    %c0_i32_0 = arith.constant 0 : i32
    %c0_i32_1 = arith.constant 0 : i32
    return %c0_i32, %c0_i32_0 : i32, i32
  }
  func.func @transform_8(%arg0: i32) -> (i32, i32) {
    %c0_i32 = arith.constant 0 : i32
    %c0_i32_0 = arith.constant 0 : i32
    %c0_i32_1 = arith.constant 0 : i32
    return %c0_i32, %c0_i32_0 : i32, i32
  }
  func.func @transform_9(%arg0: i32) -> (i32, i32) {
    %c0_i32 = arith.constant 0 : i32
    %c0_i32_0 = arith.constant 0 : i32
    %c0_i32_1 = arith.constant 0 : i32
    return %c0_i32, %c0_i32_0 : i32, i32
  }
  func.func @transform_10(%arg0: i32) -> (i32, i32) {
    %c0_i32 = arith.constant 0 : i32
    %c0_i32_0 = arith.constant 0 : i32
    %c0_i32_1 = arith.constant 0 : i32
    return %c0_i32, %c0_i32_0 : i32, i32
  }
  func.func @transform_11(%arg0: i32) -> (i32, i32, i32) {
    %c0_i32 = arith.constant 0 : i32
    %c0_i32_0 = arith.constant 0 : i32
    %c0_i32_1 = arith.constant 0 : i32
    return %arg0, %c0_i32, %c0_i32_0 : i32, i32, i32
  }
}

</mosaic_0001>

<llo_original>
// kernel: cross_attention_block.1
$region0: #{cross_attention_block.1}
  #allocation0 [shape = 'u32[]', space=smem, size = 0x4, offset = 0x4, fixed_abs, tag = 'smem constant byte address 0x4 - core index']
  #allocation1 [shape = 'u32[144,128]{1,0:T(1,128)}', space=vmem, size = 0x12000, scoped, tag = 'internal scratch']
  #allocation2 [shape = 'bf16[192,256]{1,0:T(16,128)(2,1)}', space=vmem, size = 0x18000, scoped, tag = 'scratch operand']
  #allocation3 [shape = 'bf16[64,256]{1,0:T(16,128)(2,1)}', space=vmem, size = 0x8000, scoped, tag = 'scratch operand']
  %s0 = inlined_call_operand.vmem [shape: f32[2,64,256], index: 0, kind: input, shape index: {}]
  %s1 = inlined_call_operand.vmem [shape: f32[2,64,256], index: 1, kind: input, shape index: {}]
  %s2 = inlined_call_operand.vmem [shape: f32[64,1], index: 2, kind: input, shape index: {}]
  %s3 = inlined_call_operand.vmem [shape: f32[64,1], index: 3, kind: input, shape index: {}]
  %s4 = inlined_call_operand.vmem [shape: f32[64,64], index: 4, kind: input, shape index: {}]
  %s5 = inlined_call_operand.vmem [shape: bf16[64,64], index: 5, kind: input, shape index: {}]
  %s6 = inlined_call_operand.vmem [shape: f32[64,1], index: 6, kind: input, shape index: {}]
  %s7 = inlined_call_operand.vmem [shape: bf16[128,64], index: 7, kind: input, shape index: {}]
  %s8 = inlined_call_operand.vmem [shape: f32[128,1], index: 8, kind: input, shape index: {}]
  %s9 = inlined_call_operand.vmem [shape: bf16[64,64], index: 9, kind: input, shape index: {}]
  %s10 = inlined_call_operand.vmem [shape: f32[64,1], index: 10, kind: input, shape index: {}]
  %s11 = inlined_call_operand.vmem [shape: f32[2,64,256], index: 11, kind: output, shape index: {}]
  %s12 = sld [smem:[#allocation0]]
  $region77: #{cross_attention_block.1} parent=0
    _
  %s14 = ssub.s32 1, %s12
  %s15 = scalar_select 0, %s14, %s12
  loop: start=0, step=1, limit=4
  $region2: #{cross_attention_block.1} parent=0 // loop_pre_header
    _
  $region3: #{cross_attention_block.1} parent=0 // loop_header
    %s17 = sphi 0, %s21
    %p18 = scmp.ge.s32.totalorder %s17, 4
    %s27 = sphi 0, %s29
    %s30 = sphi 0, %s27
    %s31 = sphi 0, %s30
    %s47 = sphi 0, %s31
    %s53 = sphi 0, %s55
    %s56 = sphi 0, %s53
    %s57 = sphi 0, %s56
    %s73 = sphi 0, %s57
    %s77 = sphi 0, %s77
    %s79 = sphi 0, %s77
    %s80 = sphi 0, %s79
    %s94 = sphi 0, %s80
    %s98 = sphi 0, %s98
    %s100 = sphi 0, %s98
    %s101 = sphi 0, %s100
    %s115 = sphi 0, %s101
    %s119 = sphi 0, %s119
    %s121 = sphi 0, %s119
    %s122 = sphi 0, %s121
    %s136 = sphi 0, %s122
    %s140 = sphi 0, %s140
    %s142 = sphi 0, %s140
    %s143 = sphi 0, %s142
    %s157 = sphi 0, %s143
    %s161 = sphi 0, %s161
    %s163 = sphi 0, %s161
    %s164 = sphi 0, %s163
    %s178 = sphi 0, %s164
    %s182 = sphi 0, %s182
    %s184 = sphi 0, %s182
    %s185 = sphi 0, %s184
    %s199 = sphi 0, %s185
    %s203 = sphi 0, %s203
    %s205 = sphi 0, %s203
    %s206 = sphi 0, %s205
    %s220 = sphi 0, %s206
    %s224 = sphi 0, %s224
    %s226 = sphi 0, %s224
    %s227 = sphi 0, %s226
    %s241 = sphi 0, %s227
    %s245 = sphi 0, %s245
    %s247 = sphi 0, %s245
    %s248 = sphi 0, %s247
    %s262 = sphi 0, %s248
    %s268 = sphi 0, %s270
    %s271 = sphi 0, %s268
    %s272 = sphi 0, %s271
    %s288 = sphi 0, %s272
  $region4: #{cross_attention_block.1} parent=0 // loop_header_branch
    %20 = sbr.rel (%p18) target = $region8
  $region5: #{cross_attention_block.1} parent=0 // loop_body
    %s22 = ssub.s32 %s17, 1
    %s23 = ssub.s32 %s17, 2
    %s24 = sadd.s32 %s17, 1
    %s25 = ssub.s32 %s17, %s24
    %p26 = scmp.eq.s32.totalorder %s25, 0
    %s28 = sadd.s32 %s27, 1
    %s29 = scalar_select %p26, %s27, %s28
    %p32 = pneg %p26
    %p33 = scmp.eq.s32.totalorder %s17, 1
    %p34 = por %p32, %p33
    %p35 = scmp.ne.s32.totalorder %s27, %s30
    %p36 = scmp.eq.s32.totalorder %s17, 0
    %p37 = por %p35, %p36
    %p38 = scmp.ne.s32.totalorder %s27, %s30
    %p39 = scmp.eq.s32.totalorder %s22, 1
    %p40 = por %p38, %p39
    %p41 = scmp.ne.s32.totalorder %s30, %s31
    %p42 = scmp.eq.s32.totalorder %s22, 0
    %p43 = por %p41, %p42
    %p44 = scmp.ne.s32.totalorder %s30, %s31
    %p45 = scmp.eq.s32.totalorder %s23, 1
    %p46 = por %p44, %p45
    %p48 = scmp.ne.s32.totalorder %s31, %s47
    %p49 = scmp.eq.s32.totalorder %s23, 0
    %p50 = por %p48, %p49
    %s51 = ssub.s32 %s17, %s24
    %p52 = scmp.eq.s32.totalorder %s51, 0
    %s54 = sadd.s32 %s53, 1
    %s55 = scalar_select %p52, %s53, %s54
    %p58 = pneg %p52
    %p59 = scmp.eq.s32.totalorder %s17, 1
    %p60 = por %p58, %p59
    %p61 = scmp.ne.s32.totalorder %s53, %s56
    %p62 = scmp.eq.s32.totalorder %s17, 0
    %p63 = por %p61, %p62
    %p64 = scmp.ne.s32.totalorder %s53, %s56
    %p65 = scmp.eq.s32.totalorder %s22, 1
    %p66 = por %p64, %p65
    %p67 = scmp.ne.s32.totalorder %s56, %s57
    %p68 = scmp.eq.s32.totalorder %s22, 0
    %p69 = por %p67, %p68
    %p70 = scmp.ne.s32.totalorder %s56, %s57
    %p71 = scmp.eq.s32.totalorder %s23, 1
    %p72 = por %p70, %p71
    %p74 = scmp.ne.s32.totalorder %s57, %s73
    %p75 = scmp.eq.s32.totalorder %s23, 0
    %p76 = por %p74, %p75
    %s78 = sadd.s32 %s77, 1
    %p81 = scmp.eq.s32.totalorder %s17, 1
    %p82 = scmp.ne.s32.totalorder %s77, %s79
    %p83 = scmp.eq.s32.totalorder %s17, 0
    %p84 = por %p82, %p83
    %p85 = scmp.ne.s32.totalorder %s77, %s79
    %p86 = scmp.eq.s32.totalorder %s22, 1
    %p87 = por %p85, %p86
    %p88 = scmp.ne.s32.totalorder %s79, %s80
    %p89 = scmp.eq.s32.totalorder %s22, 0
    %p90 = por %p88, %p89
    %p91 = scmp.ne.s32.totalorder %s79, %s80
    %p92 = scmp.eq.s32.totalorder %s23, 1
    %p93 = por %p91, %p92
    %p95 = scmp.ne.s32.totalorder %s80, %s94
    %p96 = scmp.eq.s32.totalorder %s23, 0
    %p97 = por %p95, %p96
    %s99 = sadd.s32 %s98, 1
    %p102 = scmp.eq.s32.totalorder %s17, 1
    %p103 = scmp.ne.s32.totalorder %s98, %s100
    %p104 = scmp.eq.s32.totalorder %s17, 0
    %p105 = por %p103, %p104
    %p106 = scmp.ne.s32.totalorder %s98, %s100
    %p107 = scmp.eq.s32.totalorder %s22, 1
    %p108 = por %p106, %p107
    %p109 = scmp.ne.s32.totalorder %s100, %s101
    %p110 = scmp.eq.s32.totalorder %s22, 0
    %p111 = por %p109, %p110
    %p112 = scmp.ne.s32.totalorder %s100, %s101
    %p113 = scmp.eq.s32.totalorder %s23, 1
    %p114 = por %p112, %p113
    %p116 = scmp.ne.s32.totalorder %s101, %s115
    %p117 = scmp.eq.s32.totalorder %s23, 0
    %p118 = por %p116, %p117
    %s120 = sadd.s32 %s119, 1
    %p123 = scmp.eq.s32.totalorder %s17, 1
    %p124 = scmp.ne.s32.totalorder %s119, %s121
    %p125 = scmp.eq.s32.totalorder %s17, 0
    %p126 = por %p124, %p125
    %p127 = scmp.ne.s32.totalorder %s119, %s121
    %p128 = scmp.eq.s32.totalorder %s22, 1
    %p129 = por %p127, %p128
    %p130 = scmp.ne.s32.totalorder %s121, %s122
    %p131 = scmp.eq.s32.totalorder %s22, 0
    %p132 = por %p130, %p131
    %p133 = scmp.ne.s32.totalorder %s121, %s122
    %p134 = scmp.eq.s32.totalorder %s23, 1
    %p135 = por %p133, %p134
    %p137 = scmp.ne.s32.totalorder %s122, %s136
    %p138 = scmp.eq.s32.totalorder %s23, 0
    %p139 = por %p137, %p138
    %s141 = sadd.s32 %s140, 1
    %p144 = scmp.eq.s32.totalorder %s17, 1
    %p145 = scmp.ne.s32.totalorder %s140, %s142
    %p146 = scmp.eq.s32.totalorder %s17, 0
    %p147 = por %p145, %p146
    %p148 = scmp.ne.s32.totalorder %s140, %s142
    %p149 = scmp.eq.s32.totalorder %s22, 1
    %p150 = por %p148, %p149
    %p151 = scmp.ne.s32.totalorder %s142, %s143
    %p152 = scmp.eq.s32.totalorder %s22, 0
    %p153 = por %p151, %p152
    %p154 = scmp.ne.s32.totalorder %s142, %s143
    %p155 = scmp.eq.s32.totalorder %s23, 1
    %p156 = por %p154, %p155
    %p158 = scmp.ne.s32.totalorder %s143, %s157
    %p159 = scmp.eq.s32.totalorder %s23, 0
    %p160 = por %p158, %p159
    %s162 = sadd.s32 %s161, 1
    %p165 = scmp.eq.s32.totalorder %s17, 1
    %p166 = scmp.ne.s32.totalorder %s161, %s163
    %p167 = scmp.eq.s32.totalorder %s17, 0
    %p168 = por %p166, %p167
    %p169 = scmp.ne.s32.totalorder %s161, %s163
    %p170 = scmp.eq.s32.totalorder %s22, 1
    %p171 = por %p169, %p170
    %p172 = scmp.ne.s32.totalorder %s163, %s164
    %p173 = scmp.eq.s32.totalorder %s22, 0
    %p174 = por %p172, %p173
    %p175 = scmp.ne.s32.totalorder %s163, %s164
    %p176 = scmp.eq.s32.totalorder %s23, 1
    %p177 = por %p175, %p176
    %p179 = scmp.ne.s32.totalorder %s164, %s178
    %p180 = scmp.eq.s32.totalorder %s23, 0
    %p181 = por %p179, %p180
    %s183 = sadd.s32 %s182, 1
    %p186 = scmp.eq.s32.totalorder %s17, 1
    %p187 = scmp.ne.s32.totalorder %s182, %s184
    %p188 = scmp.eq.s32.totalorder %s17, 0
    %p189 = por %p187, %p188
    %p190 = scmp.ne.s32.totalorder %s182, %s184
    %p191 = scmp.eq.s32.totalorder %s22, 1
    %p192 = por %p190, %p191
    %p193 = scmp.ne.s32.totalorder %s184, %s185
    %p194 = scmp.eq.s32.totalorder %s22, 0
    %p195 = por %p193, %p194
    %p196 = scmp.ne.s32.totalorder %s184, %s185
    %p197 = scmp.eq.s32.totalorder %s23, 1
    %p198 = por %p196, %p197
    %p200 = scmp.ne.s32.totalorder %s185, %s199
    %p201 = scmp.eq.s32.totalorder %s23, 0
    %p202 = por %p200, %p201
    %s204 = sadd.s32 %s203, 1
    %p207 = scmp.eq.s32.totalorder %s17, 1
    %p208 = scmp.ne.s32.totalorder %s203, %s205
    %p209 = scmp.eq.s32.totalorder %s17, 0
    %p210 = por %p208, %p209
    %p211 = scmp.ne.s32.totalorder %s203, %s205
    %p212 = scmp.eq.s32.totalorder %s22, 1
    %p213 = por %p211, %p212
    %p214 = scmp.ne.s32.totalorder %s205, %s206
    %p215 = scmp.eq.s32.totalorder %s22, 0
    %p216 = por %p214, %p215
    %p217 = scmp.ne.s32.totalorder %s205, %s206
    %p218 = scmp.eq.s32.totalorder %s23, 1
    %p219 = por %p217, %p218
    %p221 = scmp.ne.s32.totalorder %s206, %s220
    %p222 = scmp.eq.s32.totalorder %s23, 0
    %p223 = por %p221, %p222
    %s225 = sadd.s32 %s224, 1
    %p228 = scmp.eq.s32.totalorder %s17, 1
    %p229 = scmp.ne.s32.totalorder %s224, %s226
    %p230 = scmp.eq.s32.totalorder %s17, 0
    %p231 = por %p229, %p230
    %p232 = scmp.ne.s32.totalorder %s224, %s226
    %p233 = scmp.eq.s32.totalorder %s22, 1
    %p234 = por %p232, %p233
    %p235 = scmp.ne.s32.totalorder %s226, %s227
    %p236 = scmp.eq.s32.totalorder %s22, 0
    %p237 = por %p235, %p236
    %p238 = scmp.ne.s32.totalorder %s226, %s227
    %p239 = scmp.eq.s32.totalorder %s23, 1
    %p240 = por %p238, %p239
    %p242 = scmp.ne.s32.totalorder %s227, %s241
    %p243 = scmp.eq.s32.totalorder %s23, 0
    %p244 = por %p242, %p243
    %s246 = sadd.s32 %s245, 1
    %p249 = scmp.eq.s32.totalorder %s17, 1
    %p250 = scmp.ne.s32.totalorder %s245, %s247
    %p251 = scmp.eq.s32.totalorder %s17, 0
    %p252 = por %p250, %p251
    %p253 = scmp.ne.s32.totalorder %s245, %s247
    %p254 = scmp.eq.s32.totalorder %s22, 1
    %p255 = por %p253, %p254
    %p256 = scmp.ne.s32.totalorder %s247, %s248
    %p257 = scmp.eq.s32.totalorder %s22, 0
    %p258 = por %p256, %p257
    %p259 = scmp.ne.s32.totalorder %s247, %s248
    %p260 = scmp.eq.s32.totalorder %s23, 1
    %p261 = por %p259, %p260
    %p263 = scmp.ne.s32.totalorder %s248, %s262
    %p264 = scmp.eq.s32.totalorder %s23, 0
    %p265 = por %p263, %p264
    %s266 = ssub.s32 %s17, %s24
    %p267 = scmp.eq.s32.totalorder %s266, 0
    %s269 = sadd.s32 %s268, 1
    %s270 = scalar_select %p267, %s268, %s269
    %p273 = pneg %p267
    %p274 = scmp.eq.s32.totalorder %s17, 1
    %p275 = por %p273, %p274
    %p276 = scmp.ne.s32.totalorder %s268, %s271
    %p277 = scmp.eq.s32.totalorder %s17, 0
    %p278 = por %p276, %p277
    %p279 = scmp.ne.s32.totalorder %s268, %s271
    %p280 = scmp.eq.s32.totalorder %s22, 1
    %p281 = por %p279, %p280
    %p282 = scmp.ne.s32.totalorder %s271, %s272
    %p283 = scmp.eq.s32.totalorder %s22, 0
    %p284 = por %p282, %p283
    %p285 = scmp.ne.s32.totalorder %s271, %s272
    %p286 = scmp.eq.s32.totalorder %s23, 1
    %p287 = por %p285, %p286
    %p289 = scmp.ne.s32.totalorder %s272, %s288
    %p290 = scmp.eq.s32.totalorder %s23, 0
    %p291 = por %p289, %p290
    %p292 = scmp.le.s32.totalorder 1, %s17
    %p293 = scmp.lt.s32.totalorder %s17, 3
    %p294 = pnand %p292, %p293
    %p295 = pneg %p294
    // Predicated region
    $region9: #{cross_attention_block.1} parent=5 // pred_check
      _
    $region10: #{cross_attention_block.1} parent=5 // pred_check_branch
      %297 = sbr.rel (%p294) target = $region12
    $region11: #{cross_attention_block.1} parent=5 // pred_region
      %s298 = ssub.s32 %s17, 1
      // Predicated region
      $region13: #{cross_attention_block.1} parent=11 // pred_check
        %p299 = pneg %p90
      $region14: #{cross_attention_block.1} parent=11 // pred_check_branch
        %301 = sbr.rel (%p299) target = $region16
      $region15: #{cross_attention_block.1} parent=11 // pred_region
        _
      $region16: #{cross_attention_block.1} parent=11 // pred_fallthru
        _
      // Predicated region
      $region17: #{cross_attention_block.1} parent=11 // pred_check
        %p302 = pneg %p111
      $region18: #{cross_attention_block.1} parent=11 // pred_check_branch
        %304 = sbr.rel (%p302) target = $region20
      $region19: #{cross_attention_block.1} parent=11 // pred_region
        _
      $region20: #{cross_attention_block.1} parent=11 // pred_fallthru
        _
      // Predicated region
      $region21: #{cross_attention_block.1} parent=11 // pred_check
        %p305 = pneg %p132
      $region22: #{cross_attention_block.1} parent=11 // pred_check_branch
        %307 = sbr.rel (%p305) target = $region24
      $region23: #{cross_attention_block.1} parent=11 // pred_region
        _
      $region24: #{cross_attention_block.1} parent=11 // pred_fallthru
        _
      // Predicated region
      $region25: #{cross_attention_block.1} parent=11 // pred_check
        %p308 = pneg %p153
      $region26: #{cross_attention_block.1} parent=11 // pred_check_branch
        %310 = sbr.rel (%p308) target = $region28
      $region27: #{cross_attention_block.1} parent=11 // pred_region
        _
      $region28: #{cross_attention_block.1} parent=11 // pred_fallthru
        _
      // Predicated region
      $region29: #{cross_attention_block.1} parent=11 // pred_check
        %p311 = pneg %p174
      $region30: #{cross_attention_block.1} parent=11 // pred_check_branch
        %313 = sbr.rel (%p311) target = $region32
      $region31: #{cross_attention_block.1} parent=11 // pred_region
        _
      $region32: #{cross_attention_block.1} parent=11 // pred_fallthru
        _
      // Predicated region
      $region33: #{cross_attention_block.1} parent=11 // pred_check
        %p314 = pneg %p195
      $region34: #{cross_attention_block.1} parent=11 // pred_check_branch
        %316 = sbr.rel (%p314) target = $region36
      $region35: #{cross_attention_block.1} parent=11 // pred_region
        _
      $region36: #{cross_attention_block.1} parent=11 // pred_fallthru
        _
      // Predicated region
      $region37: #{cross_attention_block.1} parent=11 // pred_check
        %p317 = pneg %p216
      $region38: #{cross_attention_block.1} parent=11 // pred_check_branch
        %319 = sbr.rel (%p317) target = $region40
      $region39: #{cross_attention_block.1} parent=11 // pred_region
        _
      $region40: #{cross_attention_block.1} parent=11 // pred_fallthru
        _
      // Predicated region
      $region41: #{cross_attention_block.1} parent=11 // pred_check
        %p320 = pneg %p237
      $region42: #{cross_attention_block.1} parent=11 // pred_check_branch
        %322 = sbr.rel (%p320) target = $region44
      $region43: #{cross_attention_block.1} parent=11 // pred_region
        _
      $region44: #{cross_attention_block.1} parent=11 // pred_fallthru
        _
      // Predicated region
      $region45: #{cross_attention_block.1} parent=11 // pred_check
        %p323 = pneg %p258
      $region46: #{cross_attention_block.1} parent=11 // pred_check_branch
        %325 = sbr.rel (%p323) target = $region48
      $region47: #{cross_attention_block.1} parent=11 // pred_region
        _
      $region48: #{cross_attention_block.1} parent=11 // pred_fallthru
        _
    $region12: #{cross_attention_block.1} parent=5 // pred_fallthru
      _
    %p326 = scmp.lt.s32.totalorder %s17, 2
    // Predicated region
    $region49: #{cross_attention_block.1} parent=5 // pred_check
      %p327 = pneg %p326
    $region50: #{cross_attention_block.1} parent=5 // pred_check_branch
      %329 = sbr.rel (%p327) target = $region52
    $region51: #{cross_attention_block.1} parent=5 // pred_region
      // Predicated region
      $region53: #{cross_attention_block.1} parent=51 // pred_check
        %p330 = pneg %p37
      $region54: #{cross_attention_block.1} parent=51 // pred_check_branch
        %332 = sbr.rel (%p330) target = $region56
      $region55: #{cross_attention_block.1} parent=51 // pred_region
        %p333 = scmp.lt.s32.totalorder %s17, 1
        %s334 = scalar_select %p333, %s17, 1
        %s335 = smul.addr %s334, 16
        %s336 = smul.addr %s335, 8
        %s337 = scalar_lea.vmem %s0, %s336
      $region56: #{cross_attention_block.1} parent=51 // pred_fallthru
        _
      // Predicated region
      $region57: #{cross_attention_block.1} parent=51 // pred_check
        %p338 = pneg %p63
      $region58: #{cross_attention_block.1} parent=51 // pred_check_branch
        %340 = sbr.rel (%p338) target = $region60
      $region59: #{cross_attention_block.1} parent=51 // pred_region
        %p341 = scmp.lt.s32.totalorder %s17, 1
        %s342 = scalar_select %p341, %s17, 1
        %s343 = smul.addr %s342, 16
        %s344 = smul.addr %s343, 8
        %s345 = scalar_lea.vmem %s1, %s344
      $region60: #{cross_attention_block.1} parent=51 // pred_fallthru
        _
    $region52: #{cross_attention_block.1} parent=5 // pred_fallthru
      _
    %p346 = scmp.le.s32.totalorder 1, %s17
    %p347 = scmp.lt.s32.totalorder %s17, 3
    %p348 = pnand %p346, %p347
    %p349 = pneg %p348
    // Predicated region
    $region61: #{cross_attention_block.1} parent=5 // pred_check
      _
    $region62: #{cross_attention_block.1} parent=5 // pred_check_branch
      %351 = sbr.rel (%p348) target = $region64
    $region63: #{cross_attention_block.1} parent=5 // pred_region
      %s352 = ssub.s32 %s17, 1
      %p353 = scmp.lt.s32.totalorder %s22, 1
      %s354 = scalar_select %p353, %s22, 1
      %s355 = smul.addr %s354, 16
      %s356 = smul.addr %s355, 8
      %s357 = scalar_lea.vmem %s0, %s356
      %p358 = pneg %p43
      %p359 = pneg %p40
      %p360 = scmp.lt.s32.totalorder %s22, 1
      %s361 = scalar_select %p360, %s22, 1
      %s362 = smul.addr %s361, 16
      %s363 = smul.addr %s362, 8
      %s364 = scalar_lea.vmem %s1, %s363
      %p365 = pneg %p69
      %p366 = pneg %p66
      %p367 = pneg %p90
      %p368 = pneg %p87
      %p369 = pneg %p111
      %p370 = pneg %p108
      %p371 = pneg %p132
      %p372 = pneg %p129
      %p373 = pneg %p153
      %p374 = pneg %p150
      %p375 = pneg %p174
      %p376 = pneg %p171
      %p377 = pneg %p195
      %p378 = pneg %p192
      %p379 = pneg %p216
      %p380 = pneg %p213
      %p381 = pneg %p237
      %p382 = pneg %p234
      %p383 = pneg %p258
      %p384 = pneg %p255
      %p385 = pneg %p284
      %p386 = pneg %p281
      %p387 = scmp.lt.s32.totalorder %s22, 1
      %s388 = scalar_select %p387, %s22, 1
      %s389 = smul.addr %s388, 16
      %s390 = smul.addr %s389, 8
      %s391 = scalar_lea.vmem %s11, %s390
      %p392 = scmp.lt.s32.totalorder %s22, 1
      %s393 = scalar_select %p392, %s22, 1
      %s394 = smul.addr %s393, 16
      %s395 = smul.addr %s394, 8
      %s396 = scalar_lea.vmem %s0, %s395
      %p397 = scmp.lt.s32.totalorder %s22, 1
      %s398 = scalar_select %p397, %s22, 1
      %s399 = smul.addr %s398, 16
      %s400 = smul.addr %s399, 8
      %s401 = scalar_lea.vmem %s1, %s400
      %p402 = scmp.lt.s32.totalorder %s22, 1
      %s403 = scalar_select %p402, %s22, 1
      %s404 = smul.addr %s403, 16
      %s405 = smul.addr %s404, 8
      %s406 = scalar_lea.vmem %s11, %s405
      %v408 = vld [vmem:[%s396] sm:$0xff]
      %v409 = vld [vmem:[%s396 + $0x8] sm:$0xff]
      %v410 = vld [vmem:[%s396 + $0x10] sm:$0xff]
      %v411 = vld [vmem:[%s396 + $0x18] sm:$0xff]
      %v412 = vld [vmem:[%s396 + $0x20] sm:$0xff]
      %v413 = vld [vmem:[%s396 + $0x28] sm:$0xff]
      %v414 = vld [vmem:[%s396 + $0x30] sm:$0xff]
      %v415 = vld [vmem:[%s396 + $0x38] sm:$0xff]
      %v416 = vld [vmem:[%s396 + $0x40] sm:$0xff]
      %v417 = vld [vmem:[%s396 + $0x48] sm:$0xff]
      %v418 = vld [vmem:[%s396 + $0x50] sm:$0xff]
      %v419 = vld [vmem:[%s396 + $0x58] sm:$0xff]
      %v420 = vld [vmem:[%s396 + $0x60] sm:$0xff]
      %v421 = vld [vmem:[%s396 + $0x68] sm:$0xff]
      %v422 = vld [vmem:[%s396 + $0x70] sm:$0xff]
      %v423 = vld [vmem:[%s396 + $0x78] sm:$0xff]
      %v424 = vld [vmem:[%s401] sm:$0xff]
      %v425 = vld [vmem:[%s401 + $0x8] sm:$0xff]
      %v426 = vld [vmem:[%s401 + $0x10] sm:$0xff]
      %v427 = vld [vmem:[%s401 + $0x18] sm:$0xff]
      %v428 = vld [vmem:[%s401 + $0x20] sm:$0xff]
      %v429 = vld [vmem:[%s401 + $0x28] sm:$0xff]
      %v430 = vld [vmem:[%s401 + $0x30] sm:$0xff]
      %v431 = vld [vmem:[%s401 + $0x38] sm:$0xff]
      %v432 = vld [vmem:[%s401 + $0x40] sm:$0xff]
      %v433 = vld [vmem:[%s401 + $0x48] sm:$0xff]
      %v434 = vld [vmem:[%s401 + $0x50] sm:$0xff]
      %v435 = vld [vmem:[%s401 + $0x58] sm:$0xff]
      %v436 = vld [vmem:[%s401 + $0x60] sm:$0xff]
      %v437 = vld [vmem:[%s401 + $0x68] sm:$0xff]
      %v438 = vld [vmem:[%s401 + $0x70] sm:$0xff]
      %v439 = vld [vmem:[%s401 + $0x78] sm:$0xff]
      %v440 = vld [vmem:[%s2] sm:$0xff]
      %v441 = vld [vmem:[%s2 + $0x8] sm:$0xff]
      %v442 = vld [vmem:[%s2 + $0x10] sm:$0xff]
      %v443 = vld [vmem:[%s2 + $0x18] sm:$0xff]
      %v444 = vld [vmem:[%s2 + $0x20] sm:$0xff]
      %v445 = vld [vmem:[%s2 + $0x28] sm:$0xff]
      %v446 = vld [vmem:[%s2 + $0x30] sm:$0xff]
      %v447 = vld [vmem:[%s2 + $0x38] sm:$0xff]
      %v448 = vld [vmem:[%s3] sm:$0xff]
      %v449 = vld [vmem:[%s3 + $0x8] sm:$0xff]
      %v450 = vld [vmem:[%s3 + $0x10] sm:$0xff]
      %v451 = vld [vmem:[%s3 + $0x18] sm:$0xff]
      %v452 = vld [vmem:[%s3 + $0x20] sm:$0xff]
      %v453 = vld [vmem:[%s3 + $0x28] sm:$0xff]
      %v454 = vld [vmem:[%s3 + $0x30] sm:$0xff]
      %v455 = vld [vmem:[%s3 + $0x38] sm:$0xff]
      %v456 = vld [vmem:[%s4] sm:$0xff]
      %v457 = vld [vmem:[%s4 + $0x8] sm:$0xff]
      %v458 = vld [vmem:[%s4 + $0x10] sm:$0xff]
      %v459 = vld [vmem:[%s4 + $0x18] sm:$0xff]
      %v460 = vld [vmem:[%s4 + $0x20] sm:$0xff]
      %v461 = vld [vmem:[%s4 + $0x28] sm:$0xff]
      %v462 = vld [vmem:[%s4 + $0x30] sm:$0xff]
      %v463 = vld [vmem:[%s4 + $0x38] sm:$0xff]
      %v464 = vadd.f32 %v424, %v425
      %465 = vadd.xlane.f32.xlu0 %v464
      %v466 = vpop.xlane.xlu0 %465
      %v467 = vadd.f32 %v426, %v427
      %468 = vadd.xlane.f32.xlu0 %v467
      %v469 = vpop.xlane.xlu0 %468
      %v470 = vadd.f32 %v428, %v429
      %471 = vadd.xlane.f32.xlu0 %v470
      %v472 = vpop.xlane.xlu0 %471
      %v473 = vadd.f32 %v430, %v431
      %474 = vadd.xlane.f32.xlu0 %v473
      %v475 = vpop.xlane.xlu0 %474
      %v476 = vadd.f32 %v432, %v433
      %477 = vadd.xlane.f32.xlu0 %v476
      %v478 = vpop.xlane.xlu0 %477
      %v479 = vadd.f32 %v434, %v435
      %480 = vadd.xlane.f32.xlu0 %v479
      %v481 = vpop.xlane.xlu0 %480
      %v482 = vadd.f32 %v436, %v437
      %483 = vadd.xlane.f32.xlu0 %v482
      %v484 = vpop.xlane.xlu0 %483
      %v485 = vadd.f32 %v438, %v439
      %486 = vadd.xlane.f32.xlu0 %v485
      %v487 = vpop.xlane.xlu0 %486
      %v488 = vmul.f32 %v424, %v424
      %v489 = vmul.f32 %v425, %v425
      %v490 = vmul.f32 %v426, %v426
      %v491 = vmul.f32 %v427, %v427
      %v492 = vmul.f32 %v428, %v428
      %v493 = vmul.f32 %v429, %v429
      %v494 = vmul.f32 %v430, %v430
      %v495 = vmul.f32 %v431, %v431
      %v496 = vmul.f32 %v432, %v432
      %v497 = vmul.f32 %v433, %v433
      %v498 = vmul.f32 %v434, %v434
      %v499 = vmul.f32 %v435, %v435
      %v500 = vmul.f32 %v436, %v436
      %v501 = vmul.f32 %v437, %v437
      %v502 = vmul.f32 %v438, %v438
      %v503 = vmul.f32 %v439, %v439
      %v504 = vadd.f32 %v488, %v489
      %505 = vadd.xlane.f32.xlu0 %v504
      %v506 = vpop.xlane.xlu0 %505
      %v507 = vadd.f32 %v490, %v491
      %508 = vadd.xlane.f32.xlu0 %v507
      %v509 = vpop.xlane.xlu0 %508
      %v510 = vadd.f32 %v492, %v493
      %511 = vadd.xlane.f32.xlu0 %v510
      %v512 = vpop.xlane.xlu0 %511
      %v513 = vadd.f32 %v494, %v495
      %514 = vadd.xlane.f32.xlu0 %v513
      %v515 = vpop.xlane.xlu0 %514
      %v516 = vadd.f32 %v496, %v497
      %517 = vadd.xlane.f32.xlu0 %v516
      %v518 = vpop.xlane.xlu0 %517
      %v519 = vadd.f32 %v498, %v499
      %520 = vadd.xlane.f32.xlu0 %v519
      %v521 = vpop.xlane.xlu0 %520
      %v522 = vadd.f32 %v500, %v501
      %523 = vadd.xlane.f32.xlu0 %v522
      %v524 = vpop.xlane.xlu0 %523
      %v525 = vadd.f32 %v502, %v503
      %526 = vadd.xlane.f32.xlu0 %v525
      %v527 = vpop.xlane.xlu0 %526
      %vm528 = vcmask 523264
      %v530 = vsel %vm528, %v456, 0
      %v533 = vsel %vm528, %v457, 0
      %v536 = vsel %vm528, %v458, 0
      %v539 = vsel %vm528, %v459, 0
      %v542 = vsel %vm528, %v460, 0
      %v545 = vsel %vm528, %v461, 0
      %v548 = vsel %vm528, %v462, 0
      %v551 = vsel %vm528, %v463, 0
      %553 = vmatprep.subr.mxu0 0.0
      %554 = vmatpush1.msra.mxu0 %v466
      %555 = vmatprep.subr.mxu0 0.0
      %556 = vmatpush1.msra.mxu0 %v469
      %557 = vmatprep.subr.mxu0 0.0
      %558 = vmatpush1.msra.mxu0 %v472
      %559 = vmatprep.subr.mxu0 0.0
      %560 = vmatpush1.msra.mxu0 %v475
      %561 = vmatprep.subr.mxu0 0.0
      %562 = vmatpush1.msra.mxu0 %v478
      %563 = vmatprep.subr.mxu0 0.0
      %564 = vmatpush1.msra.mxu0 %v481
      %565 = vmatprep.subr.mxu0 0.0
      %566 = vmatpush1.msra.mxu0 %v484
      %567 = vmatprep.subr.mxu0 0.0
      %568 = vmatpush1.msra.mxu0 %v487
      %569 = vmatprep.subr.mxu0 0.0
      %570 = vmatpush1.msra.mxu0 0.0
      %571 = vmatprep.subr.mxu0 0.0
      %572 = vmatpush1.msra.mxu0 0.0
      %573 = vmatprep.subr.mxu0 0.0
      %574 = vmatpush1.msra.mxu0 0.0
      %575 = vmatprep.subr.mxu0 0.0
      %576 = vmatpush1.msra.mxu0 0.0
      %577 = vmatprep.subr.mxu0 0.0
      %578 = vmatpush1.msra.mxu0 0.0
      %579 = vmatprep.subr.mxu0 0.0
      %580 = vmatpush1.msra.mxu0 0.0
      %581 = vmatprep.subr.mxu0 0.0
      %582 = vmatpush1.msra.mxu0 0.0
      %583 = vmatprep.subr.mxu0 0.0
      %584 = vmatpush1.msra.mxu0 0.0
      %585 = vmatprep.subr.mxu0 0.0
      %586 = vmatpush1.msra.mxu0 0.0
      %587 = vmatprep.subr.mxu0 0.0
      %588 = vmatpush1.msra.mxu0 0.0
      %589 = vmatprep.subr.mxu0 0.0
      %590 = vmatpush1.msra.mxu0 0.0
      %591 = vmatprep.subr.mxu0 0.0
      %592 = vmatpush1.msra.mxu0 0.0
      %593 = vmatprep.subr.mxu0 0.0
      %594 = vmatpush1.msra.mxu0 0.0
      %595 = vmatprep.subr.mxu0 0.0
      %596 = vmatpush1.msra.mxu0 0.0
      %597 = vmatprep.subr.mxu0 0.0
      %598 = vmatpush1.msra.mxu0 0.0
      %599 = vmatprep.subr.mxu0 0.0
      %600 = vmatpush1.msra.mxu0 0.0
      %601 = vmatprep.subr.mxu0 0.0
      %602 = vmatpush1.msra.mxu0 0.0
      %603 = vmatprep.subr.mxu0 0.0
      %604 = vmatpush1.msra.mxu0 0.0
      %605 = vmatprep.subr.mxu0 0.0
      %606 = vmatpush1.msra.mxu0 0.0
      %607 = vmatprep.subr.mxu0 0.0
      %608 = vmatpush1.msra.mxu0 0.0
      %609 = vmatprep.subr.mxu0 0.0
      %610 = vmatpush1.msra.mxu0 0.0
      %611 = vmatprep.subr.mxu0 0.0
      %612 = vmatpush1.msra.mxu0 0.0
      %613 = vmatprep.subr.mxu0 0.0
      %614 = vmatpush1.msra.mxu0 0.0
      %615 = vmatprep.subr.mxu0 0.0
      %616 = vmatpush1.msra.mxu0 0.0
      %617 = vmatprep.mubr.f32.mxu0 0.0
      %618 = vmatmul.mubr.f32.gmra.mrb[0].mxu0 %v530
      %v619 = vpop.f32.mrb[0].mxu0
      %v620 = vadd.f32 0.0, %v619
      %v621 = vpop.f32.mrb[0].mxu0
      %622 = vmatprep.mubr.f32.mxu0 0.0
      %623 = vmatmul.mubr.f32.gmra.mrb[0].mxu0 %v533
      %v624 = vpop.f32.mrb[0].mxu0
      %v625 = vadd.f32 0.0, %v624
      %v626 = vpop.f32.mrb[0].mxu0
      %627 = vmatprep.mubr.f32.mxu0 0.0
      %628 = vmatmul.mubr.f32.gmra.mrb[0].mxu0 %v536
      %v629 = vpop.f32.mrb[0].mxu0
      %v630 = vadd.f32 0.0, %v629
      %v631 = vpop.f32.mrb[0].mxu0
      %632 = vmatprep.mubr.f32.mxu0 0.0
      %633 = vmatmul.mubr.f32.gmra.mrb[0].mxu0 %v539
      %v634 = vpop.f32.mrb[0].mxu0
      %v635 = vadd.f32 0.0, %v634
      %v636 = vpop.f32.mrb[0].mxu0
      %637 = vmatprep.mubr.f32.mxu0 0.0
      %638 = vmatmul.mubr.f32.gmra.mrb[0].mxu0 %v542
      %v639 = vpop.f32.mrb[0].mxu0
      %v640 = vadd.f32 0.0, %v639
      %v641 = vpop.f32.mrb[0].mxu0
      %642 = vmatprep.mubr.f32.mxu0 0.0
      %643 = vmatmul.mubr.f32.gmra.mrb[0].mxu0 %v545
      %v644 = vpop.f32.mrb[0].mxu0
      %v645 = vadd.f32 0.0, %v644
      %v646 = vpop.f32.mrb[0].mxu0
      %647 = vmatprep.mubr.f32.mxu0 0.0
      %648 = vmatmul.mubr.f32.gmra.mrb[0].mxu0 %v548
      %v649 = vpop.f32.mrb[0].mxu0
      %v650 = vadd.f32 0.0, %v649
      %v651 = vpop.f32.mrb[0].mxu0
      %652 = vmatprep.mubr.f32.mxu0 0.0
      %653 = vmatmul.mubr.f32.gmra.mrb[0].mxu0 %v551
      %v654 = vpop.f32.mrb[0].mxu0
      %v655 = vadd.f32 0.0, %v654
      %v656 = vpop.f32.mrb[0].mxu0
      %657 = vdwg.mxu0
      %658 = vmatprep.subr.mxu0 0.0
      %659 = vmatpush1.msra.mxu0 %v506
      %660 = vmatprep.subr.mxu0 0.0
      %661 = vmatpush1.msra.mxu0 %v509
      %662 = vmatprep.subr.mxu0 0.0
      %663 = vmatpush1.msra.mxu0 %v512
      %664 = vmatprep.subr.mxu0 0.0
      %665 = vmatpush1.msra.mxu0 %v515
      %666 = vmatprep.subr.mxu0 0.0
      %667 = vmatpush1.msra.mxu0 %v518
      %668 = vmatprep.subr.mxu0 0.0
      %669 = vmatpush1.msra.mxu0 %v521
      %670 = vmatprep.subr.mxu0 0.0
      %671 = vmatpush1.msra.mxu0 %v524
      %672 = vmatprep.subr.mxu0 0.0
      %673 = vmatpush1.msra.mxu0 %v527
      %674 = vmatprep.subr.mxu0 0.0
      %675 = vmatpush1.msra.mxu0 0.0
      %676 = vmatprep.subr.mxu0 0.0
      %677 = vmatpush1.msra.mxu0 0.0
      %678 = vmatprep.subr.mxu0 0.0
      %679 = vmatpush1.msra.mxu0 0.0
      %680 = vmatprep.subr.mxu0 0.0
      %681 = vmatpush1.msra.mxu0 0.0
      %682 = vmatprep.subr.mxu0 0.0
      %683 = vmatpush1.msra.mxu0 0.0
      %684 = vmatprep.subr.mxu0 0.0
      %685 = vmatpush1.msra.mxu0 0.0
      %686 = vmatprep.subr.mxu0 0.0
      %687 = vmatpush1.msra.mxu0 0.0
      %688 = vmatprep.subr.mxu0 0.0
      %689 = vmatpush1.msra.mxu0 0.0
      %690 = vmatprep.subr.mxu0 0.0
      %691 = vmatpush1.msra.mxu0 0.0
      %692 = vmatprep.subr.mxu0 0.0
      %693 = vmatpush1.msra.mxu0 0.0
      %694 = vmatprep.subr.mxu0 0.0
      %695 = vmatpush1.msra.mxu0 0.0
      %696 = vmatprep.subr.mxu0 0.0
      %697 = vmatpush1.msra.mxu0 0.0
      %698 = vmatprep.subr.mxu0 0.0
      %699 = vmatpush1.msra.mxu0 0.0
      %700 = vmatprep.subr.mxu0 0.0
      %701 = vmatpush1.msra.mxu0 0.0
      %702 = vmatprep.subr.mxu0 0.0
      %703 = vmatpush1.msra.mxu0 0.0
      %704 = vmatprep.subr.mxu0 0.0
      %705 = vmatpush1.msra.mxu0 0.0
      %706 = vmatprep.subr.mxu0 0.0
      %707 = vmatpush1.msra.mxu0 0.0
      %708 = vmatprep.subr.mxu0 0.0
      %709 = vmatpush1.msra.mxu0 0.0
      %710 = vmatprep.subr.mxu0 0.0
      %711 = vmatpush1.msra.mxu0 0.0
      %712 = vmatprep.subr.mxu0 0.0
      %713 = vmatpush1.msra.mxu0 0.0
      %714 = vmatprep.subr.mxu0 0.0
      %715 = vmatpush1.msra.mxu0 0.0
      %716 = vmatprep.subr.mxu0 0.0
      %717 = vmatpush1.msra.mxu0 0.0
      %718 = vmatprep.subr.mxu0 0.0
      %719 = vmatpush1.msra.mxu0 0.0
      %720 = vmatprep.subr.mxu0 0.0
      %721 = vmatpush1.msra.mxu0 0.0
      %722 = vmatprep.mubr.f32.mxu0 0.0
      %723 = vmatmul.mubr.f32.gmra.mrb[0].mxu0 %v530
      %v724 = vpop.f32.mrb[0].mxu0
      %v725 = vadd.f32 0.0, %v724
      %v726 = vpop.f32.mrb[0].mxu0
      %727 = vmatprep.mubr.f32.mxu0 0.0
      %728 = vmatmul.mubr.f32.gmra.mrb[0].mxu0 %v533
      %v729 = vpop.f32.mrb[0].mxu0
      %v730 = vadd.f32 0.0, %v729
      %v731 = vpop.f32.mrb[0].mxu0
      %732 = vmatprep.mubr.f32.mxu0 0.0
      %733 = vmatmul.mubr.f32.gmra.mrb[0].mxu0 %v536
      %v734 = vpop.f32.mrb[0].mxu0
      %v735 = vadd.f32 0.0, %v734
      %v736 = vpop.f32.mrb[0].mxu0
      %737 = vmatprep.mubr.f32.mxu0 0.0
      %738 = vmatmul.mubr.f32.gmra.mrb[0].mxu0 %v539
      %v739 = vpop.f32.mrb[0].mxu0
      %v740 = vadd.f32 0.0, %v739
      %v741 = vpop.f32.mrb[0].mxu0
      %742 = vmatprep.mubr.f32.mxu0 0.0
      %743 = vmatmul.mubr.f32.gmra.mrb[0].mxu0 %v542
      %v744 = vpop.f32.mrb[0].mxu0
      %v745 = vadd.f32 0.0, %v744
      %v746 = vpop.f32.mrb[0].mxu0
      %747 = vmatprep.mubr.f32.mxu0 0.0
      %748 = vmatmul.mubr.f32.gmra.mrb[0].mxu0 %v545
      %v749 = vpop.f32.mrb[0].mxu0
      %v750 = vadd.f32 0.0, %v749
      %v751 = vpop.f32.mrb[0].mxu0
      %752 = vmatprep.mubr.f32.mxu0 0.0
      %753 = vmatmul.mubr.f32.gmra.mrb[0].mxu0 %v548
      %v754 = vpop.f32.mrb[0].mxu0
      %v755 = vadd.f32 0.0, %v754
      %v756 = vpop.f32.mrb[0].mxu0
      %757 = vmatprep.mubr.f32.mxu0 0.0
      %758 = vmatmul.mubr.f32.gmra.mrb[0].mxu0 %v551
      %v759 = vpop.f32.mrb[0].mxu0
      %v760 = vadd.f32 0.0, %v759
      %v761 = vpop.f32.mrb[0].mxu0
      %762 = vdwg.mxu0
      %v763 = vmul.f32 %v620, %v620
      %v764 = vmul.f32 %v625, %v625
      %v765 = vmul.f32 %v630, %v630
      %v766 = vmul.f32 %v635, %v635
      %v767 = vmul.f32 %v640, %v640
      %v768 = vmul.f32 %v645, %v645
      %v769 = vmul.f32 %v650, %v650
      %v770 = vmul.f32 %v655, %v655
      %v771 = vsub.f32 %v725, %v763
      %v772 = vsub.f32 %v730, %v764
      %v773 = vsub.f32 %v735, %v765
      %v774 = vsub.f32 %v740, %v766
      %v775 = vsub.f32 %v745, %v767
      %v776 = vsub.f32 %v750, %v768
      %v777 = vsub.f32 %v755, %v769
      %v778 = vsub.f32 %v760, %v770
      %v779 = vadd.f32 %v771, 1e-05
      %v780 = vadd.f32 %v772, 1e-05
      %v781 = vadd.f32 %v773, 1e-05
      %v782 = vadd.f32 %v774, 1e-05
      %v783 = vadd.f32 %v775, 1e-05
      %v784 = vadd.f32 %v776, 1e-05
      %v785 = vadd.f32 %v777, 1e-05
      %v786 = vadd.f32 %v778, 1e-05
      %v787 = vrsqrt.pop %v779
      %v788 = vrsqrt.pop %v780
      %v789 = vrsqrt.pop %v781
      %v790 = vrsqrt.pop %v782
      %v791 = vrsqrt.pop %v783
      %v792 = vrsqrt.pop %v784
      %v793 = vrsqrt.pop %v785
      %v794 = vrsqrt.pop %v786
      %v795 = vmul.f32 %v787, %v440
      %v796 = vmul.f32 %v788, %v441
      %v797 = vmul.f32 %v789, %v442
      %v798 = vmul.f32 %v790, %v443
      %v799 = vmul.f32 %v791, %v444
      %v800 = vmul.f32 %v792, %v445
      %v801 = vmul.f32 %v793, %v446
      %v802 = vmul.f32 %v794, %v447
      %v803 = vmul.f32 %v620, %v795
      %v804 = vmul.f32 %v625, %v796
      %v805 = vmul.f32 %v630, %v797
      %v806 = vmul.f32 %v635, %v798
      %v807 = vmul.f32 %v640, %v799
      %v808 = vmul.f32 %v645, %v800
      %v809 = vmul.f32 %v650, %v801
      %v810 = vmul.f32 %v655, %v802
      %v811 = vsub.f32 %v448, %v803
      %v812 = vsub.f32 %v449, %v804
      %v813 = vsub.f32 %v450, %v805
      %v814 = vsub.f32 %v451, %v806
      %v815 = vsub.f32 %v452, %v807
      %v816 = vsub.f32 %v453, %v808
      %v817 = vsub.f32 %v454, %v809
      %v818 = vsub.f32 %v455, %v810
      %820 = vset.pattern.permute.xlu0 0
      %821 = vperm.xlu0 %820, %v795
      %v822 = vpop.permute.xlu0 %821
      %825 = vset.pattern.permute.xlu0 0
      %826 = vperm.xlu0 %825, %v796
      %v827 = vpop.permute.xlu0 %826
      %830 = vset.pattern.permute.xlu0 0
      %831 = vperm.xlu0 %830, %v797
      %v832 = vpop.permute.xlu0 %831
      %835 = vset.pattern.permute.xlu0 0
      %836 = vperm.xlu0 %835, %v798
      %v837 = vpop.permute.xlu0 %836
      %840 = vset.pattern.permute.xlu0 0
      %841 = vperm.xlu0 %840, %v799
      %v842 = vpop.permute.xlu0 %841
      %845 = vset.pattern.permute.xlu0 0
      %846 = vperm.xlu0 %845, %v800
      %v847 = vpop.permute.xlu0 %846
      %850 = vset.pattern.permute.xlu0 0
      %851 = vperm.xlu0 %850, %v801
      %v852 = vpop.permute.xlu0 %851
      %855 = vset.pattern.permute.xlu0 0
      %856 = vperm.xlu0 %855, %v802
      %v857 = vpop.permute.xlu0 %856
      %v859 = vmul.f32 %v424, %v822
      %v860 = vmul.f32 %v425, %v822
      %v861 = vmul.f32 %v426, %v827
      %v862 = vmul.f32 %v427, %v827
      %v863 = vmul.f32 %v428, %v832
      %v864 = vmul.f32 %v429, %v832
      %v865 = vmul.f32 %v430, %v837
      %v866 = vmul.f32 %v431, %v837
      %v867 = vmul.f32 %v432, %v842
      %v868 = vmul.f32 %v433, %v842
      %v869 = vmul.f32 %v434, %v847
      %v870 = vmul.f32 %v435, %v847
      %v871 = vmul.f32 %v436, %v852
      %v872 = vmul.f32 %v437, %v852
      %v873 = vmul.f32 %v438, %v857
      %v874 = vmul.f32 %v439, %v857
      %876 = vset.pattern.permute.xlu0 0
      %877 = vperm.xlu0 %876, %v811
      %v878 = vpop.permute.xlu0 %877
      %881 = vset.pattern.permute.xlu0 0
      %882 = vperm.xlu0 %881, %v812
      %v883 = vpop.permute.xlu0 %882
      %886 = vset.pattern.permute.xlu0 0
      %887 = vperm.xlu0 %886, %v813
      %v888 = vpop.permute.xlu0 %887
      %891 = vset.pattern.permute.xlu0 0
      %892 = vperm.xlu0 %891, %v814
      %v893 = vpop.permute.xlu0 %892
      %896 = vset.pattern.permute.xlu0 0
      %897 = vperm.xlu0 %896, %v815
      %v898 = vpop.permute.xlu0 %897
      %901 = vset.pattern.permute.xlu0 0
      %902 = vperm.xlu0 %901, %v816
      %v903 = vpop.permute.xlu0 %902
      %906 = vset.pattern.permute.xlu0 0
      %907 = vperm.xlu0 %906, %v817
      %v908 = vpop.permute.xlu0 %907
      %911 = vset.pattern.permute.xlu0 0
      %912 = vperm.xlu0 %911, %v818
      %v913 = vpop.permute.xlu0 %912
      %v915 = vadd.f32 %v859, %v878
      %v916 = vadd.f32 %v860, %v878
      %v917 = vadd.f32 %v861, %v883
      %v918 = vadd.f32 %v862, %v883
      %v919 = vadd.f32 %v863, %v888
      %v920 = vadd.f32 %v864, %v888
      %v921 = vadd.f32 %v865, %v893
      %v922 = vadd.f32 %v866, %v893
      %v923 = vadd.f32 %v867, %v898
      %v924 = vadd.f32 %v868, %v898
      %v925 = vadd.f32 %v869, %v903
      %v926 = vadd.f32 %v870, %v903
      %v927 = vadd.f32 %v871, %v908
      %v928 = vadd.f32 %v872, %v908
      %v929 = vadd.f32 %v873, %v913
      %v930 = vadd.f32 %v874, %v913
      %v931 = vpack.c.bf16 %v917, %v915
      %v932 = vpack.c.bf16 %v918, %v916
      %v933 = vpack.c.bf16 %v921, %v919
      %v934 = vpack.c.bf16 %v922, %v920
      %v935 = vpack.c.bf16 %v925, %v923
      %v936 = vpack.c.bf16 %v926, %v924
      %v937 = vpack.c.bf16 %v929, %v927
      %v938 = vpack.c.bf16 %v930, %v928
      %v939 = vadd.f32 %v408, %v409
      %940 = vadd.xlane.f32.xlu0 %v939
      %v941 = vpop.xlane.xlu0 %940
      %v942 = vadd.f32 %v410, %v411
      %943 = vadd.xlane.f32.xlu0 %v942
      %v944 = vpop.xlane.xlu0 %943
      %v945 = vadd.f32 %v412, %v413
      %946 = vadd.xlane.f32.xlu0 %v945
      %v947 = vpop.xlane.xlu0 %946
      %v948 = vadd.f32 %v414, %v415
      %949 = vadd.xlane.f32.xlu0 %v948
      %v950 = vpop.xlane.xlu0 %949
      %v951 = vadd.f32 %v416, %v417
      %952 = vadd.xlane.f32.xlu0 %v951
      %v953 = vpop.xlane.xlu0 %952
      %v954 = vadd.f32 %v418, %v419
      %955 = vadd.xlane.f32.xlu0 %v954
      %v956 = vpop.xlane.xlu0 %955
      %v957 = vadd.f32 %v420, %v421
      %958 = vadd.xlane.f32.xlu0 %v957
      %v959 = vpop.xlane.xlu0 %958
      %v960 = vadd.f32 %v422, %v423
      %961 = vadd.xlane.f32.xlu0 %v960
      %v962 = vpop.xlane.xlu0 %961
      %v963 = vmul.f32 %v408, %v408
      %v964 = vmul.f32 %v409, %v409
      %v965 = vmul.f32 %v410, %v410
      %v966 = vmul.f32 %v411, %v411
      %v967 = vmul.f32 %v412, %v412
      %v968 = vmul.f32 %v413, %v413
      %v969 = vmul.f32 %v414, %v414
      %v970 = vmul.f32 %v415, %v415
      %v971 = vmul.f32 %v416, %v416
      %v972 = vmul.f32 %v417, %v417
      %v973 = vmul.f32 %v418, %v418
      %v974 = vmul.f32 %v419, %v419
      %v975 = vmul.f32 %v420, %v420
      %v976 = vmul.f32 %v421, %v421
      %v977 = vmul.f32 %v422, %v422
      %v978 = vmul.f32 %v423, %v423
      %v979 = vadd.f32 %v963, %v964
      %980 = vadd.xlane.f32.xlu0 %v979
      %v981 = vpop.xlane.xlu0 %980
      %v982 = vadd.f32 %v965, %v966
      %983 = vadd.xlane.f32.xlu0 %v982
      %v984 = vpop.xlane.xlu0 %983
      %v985 = vadd.f32 %v967, %v968
      %986 = vadd.xlane.f32.xlu0 %v985
      %v987 = vpop.xlane.xlu0 %986
      %v988 = vadd.f32 %v969, %v970
      %989 = vadd.xlane.f32.xlu0 %v988
      %v990 = vpop.xlane.xlu0 %989
      %v991 = vadd.f32 %v971, %v972
      %992 = vadd.xlane.f32.xlu0 %v991
      %v993 = vpop.xlane.xlu0 %992
      %v994 = vadd.f32 %v973, %v974
      %995 = vadd.xlane.f32.xlu0 %v994
      %v996 = vpop.xlane.xlu0 %995
      %v997 = vadd.f32 %v975, %v976
      %998 = vadd.xlane.f32.xlu0 %v997
      %v999 = vpop.xlane.xlu0 %998
      %v1000 = vadd.f32 %v977, %v978
      %1001 = vadd.xlane.f32.xlu0 %v1000
      %v1002 = vpop.xlane.xlu0 %1001
      %1003 = vmatprep.subr.mxu0 0.0
      %1004 = vmatpush1.msra.mxu0 %v941
      %1005 = vmatprep.subr.mxu0 0.0
      %1006 = vmatpush1.msra.mxu0 %v944
      %1007 = vmatprep.subr.mxu0 0.0
      %1008 = vmatpush1.msra.mxu0 %v947
      %1009 = vmatprep.subr.mxu0 0.0
      %1010 = vmatpush1.msra.mxu0 %v950
      %1011 = vmatprep.subr.mxu0 0.0
      %1012 = vmatpush1.msra.mxu0 %v953
      %1013 = vmatprep.subr.mxu0 0.0
      %1014 = vmatpush1.msra.mxu0 %v956
      %1015 = vmatprep.subr.mxu0 0.0
      %1016 = vmatpush1.msra.mxu0 %v959
      %1017 = vmatprep.subr.mxu0 0.0
      %1018 = vmatpush1.msra.mxu0 %v962
      %1019 = vmatprep.subr.mxu0 0.0
      %1020 = vmatpush1.msra.mxu0 0.0
      %1021 = vmatprep.subr.mxu0 0.0
      %1022 = vmatpush1.msra.mxu0 0.0
      %1023 = vmatprep.subr.mxu0 0.0
      %1024 = vmatpush1.msra.mxu0 0.0
      %1025 = vmatprep.subr.mxu0 0.0
      %1026 = vmatpush1.msra.mxu0 0.0
      %1027 = vmatprep.subr.mxu0 0.0
      %1028 = vmatpush1.msra.mxu0 0.0
      %1029 = vmatprep.subr.mxu0 0.0
      %1030 = vmatpush1.msra.mxu0 0.0
      %1031 = vmatprep.subr.mxu0 0.0
      %1032 = vmatpush1.msra.mxu0 0.0
      %1033 = vmatprep.subr.mxu0 0.0
      %1034 = vmatpush1.msra.mxu0 0.0
      %1035 = vmatprep.subr.mxu0 0.0
      %1036 = vmatpush1.msra.mxu0 0.0
      %1037 = vmatprep.subr.mxu0 0.0
      %1038 = vmatpush1.msra.mxu0 0.0
      %1039 = vmatprep.subr.mxu0 0.0
      %1040 = vmatpush1.msra.mxu0 0.0
      %1041 = vmatprep.subr.mxu0 0.0
      %1042 = vmatpush1.msra.mxu0 0.0
      %1043 = vmatprep.subr.mxu0 0.0
      %1044 = vmatpush1.msra.mxu0 0.0
      %1045 = vmatprep.subr.mxu0 0.0
      %1046 = vmatpush1.msra.mxu0 0.0
      %1047 = vmatprep.subr.mxu0 0.0
      %1048 = vmatpush1.msra.mxu0 0.0
      %1049 = vmatprep.subr.mxu0 0.0
      %1050 = vmatpush1.msra.mxu0 0.0
      %1051 = vmatprep.subr.mxu0 0.0
      %1052 = vmatpush1.msra.mxu0 0.0
      %1053 = vmatprep.subr.mxu0 0.0
      %1054 = vmatpush1.msra.mxu0 0.0
      %1055 = vmatprep.subr.mxu0 0.0
      %1056 = vmatpush1.msra.mxu0 0.0
      %1057 = vmatprep.subr.mxu0 0.0
      %1058 = vmatpush1.msra.mxu0 0.0
      %1059 = vmatprep.subr.mxu0 0.0
      %1060 = vmatpush1.msra.mxu0 0.0
      %1061 = vmatprep.subr.mxu0 0.0
      %1062 = vmatpush1.msra.mxu0 0.0
      %1063 = vmatprep.subr.mxu0 0.0
      %1064 = vmatpush1.msra.mxu0 0.0
      %1065 = vmatprep.subr.mxu0 0.0
      %1066 = vmatpush1.msra.mxu0 0.0
      %1067 = vmatprep.mubr.f32.mxu0 0.0
      %1068 = vmatmul.mubr.f32.gmra.mrb[0].mxu0 %v530
      %v1069 = vpop.f32.mrb[0].mxu0
      %v1070 = vadd.f32 0.0, %v1069
      %v1071 = vpop.f32.mrb[0].mxu0
      %1072 = vmatprep.mubr.f32.mxu0 0.0
      %1073 = vmatmul.mubr.f32.gmra.mrb[0].mxu0 %v533
      %v1074 = vpop.f32.mrb[0].mxu0
      %v1075 = vadd.f32 0.0, %v1074
      %v1076 = vpop.f32.mrb[0].mxu0
      %1077 = vmatprep.mubr.f32.mxu0 0.0
      %1078 = vmatmul.mubr.f32.gmra.mrb[0].mxu0 %v536
      %v1079 = vpop.f32.mrb[0].mxu0
      %v1080 = vadd.f32 0.0, %v1079
      %v1081 = vpop.f32.mrb[0].mxu0
      %1082 = vmatprep.mubr.f32.mxu0 0.0
      %1083 = vmatmul.mubr.f32.gmra.mrb[0].mxu0 %v539
      %v1084 = vpop.f32.mrb[0].mxu0
      %v1085 = vadd.f32 0.0, %v1084
      %v1086 = vpop.f32.mrb[0].mxu0
      %1087 = vmatprep.mubr.f32.mxu0 0.0
      %1088 = vmatmul.mubr.f32.gmra.mrb[0].mxu0 %v542
      %v1089 = vpop.f32.mrb[0].mxu0
      %v1090 = vadd.f32 0.0, %v1089
      %v1091 = vpop.f32.mrb[0].mxu0
      %1092 = vmatprep.mubr.f32.mxu0 0.0
      %1093 = vmatmul.mubr.f32.gmra.mrb[0].mxu0 %v545
      %v1094 = vpop.f32.mrb[0].mxu0
      %v1095 = vadd.f32 0.0, %v1094
      %v1096 = vpop.f32.mrb[0].mxu0
      %1097 = vmatprep.mubr.f32.mxu0 0.0
      %1098 = vmatmul.mubr.f32.gmra.mrb[0].mxu0 %v548
      %v1099 = vpop.f32.mrb[0].mxu0
      %v1100 = vadd.f32 0.0, %v1099
      %v1101 = vpop.f32.mrb[0].mxu0
      %1102 = vmatprep.mubr.f32.mxu0 0.0
      %1103 = vmatmul.mubr.f32.gmra.mrb[0].mxu0 %v551
      %v1104 = vpop.f32.mrb[0].mxu0
      %v1105 = vadd.f32 0.0, %v1104
      %v1106 = vpop.f32.mrb[0].mxu0
      %1107 = vdwg.mxu0
      %1108 = vmatprep.subr.mxu0 0.0
      %1109 = vmatpush1.msra.mxu0 %v981
      %1110 = vmatprep.subr.mxu0 0.0
      %1111 = vmatpush1.msra.mxu0 %v984
      %1112 = vmatprep.subr.mxu0 0.0
      %1113 = vmatpush1.msra.mxu0 %v987
      %1114 = vmatprep.subr.mxu0 0.0
      %1115 = vmatpush1.msra.mxu0 %v990
      %1116 = vmatprep.subr.mxu0 0.0
      %1117 = vmatpush1.msra.mxu0 %v993
      %1118 = vmatprep.subr.mxu0 0.0
      %1119 = vmatpush1.msra.mxu0 %v996
      %1120 = vmatprep.subr.mxu0 0.0
      %1121 = vmatpush1.msra.mxu0 %v999
      %1122 = vmatprep.subr.mxu0 0.0
      %1123 = vmatpush1.msra.mxu0 %v1002
      %1124 = vmatprep.subr.mxu0 0.0
      %1125 = vmatpush1.msra.mxu0 0.0
      %1126 = vmatprep.subr.mxu0 0.0
      %1127 = vmatpush1.msra.mxu0 0.0
      %1128 = vmatprep.subr.mxu0 0.0
      %1129 = vmatpush1.msra.mxu0 0.0
      %1130 = vmatprep.subr.mxu0 0.0
      %1131 = vmatpush1.msra.mxu0 0.0
      %1132 = vmatprep.subr.mxu0 0.0
      %1133 = vmatpush1.msra.mxu0 0.0
      %1134 = vmatprep.subr.mxu0 0.0
      %1135 = vmatpush1.msra.mxu0 0.0
      %1136 = vmatprep.subr.mxu0 0.0
      %1137 = vmatpush1.msra.mxu0 0.0
      %1138 = vmatprep.subr.mxu0 0.0
      %1139 = vmatpush1.msra.mxu0 0.0
      %1140 = vmatprep.subr.mxu0 0.0
      %1141 = vmatpush1.msra.mxu0 0.0
      %1142 = vmatprep.subr.mxu0 0.0
      %1143 = vmatpush1.msra.mxu0 0.0
      %1144 = vmatprep.subr.mxu0 0.0
      %1145 = vmatpush1.msra.mxu0 0.0
      %1146 = vmatprep.subr.mxu0 0.0
      %1147 = vmatpush1.msra.mxu0 0.0
      %1148 = vmatprep.subr.mxu0 0.0
      %1149 = vmatpush1.msra.mxu0 0.0
      %1150 = vmatprep.subr.mxu0 0.0
      %1151 = vmatpush1.msra.mxu0 0.0
      %1152 = vmatprep.subr.mxu0 0.0
      %1153 = vmatpush1.msra.mxu0 0.0
      %1154 = vmatprep.subr.mxu0 0.0
      %1155 = vmatpush1.msra.mxu0 0.0
      %1156 = vmatprep.subr.mxu0 0.0
      %1157 = vmatpush1.msra.mxu0 0.0
      %1158 = vmatprep.subr.mxu0 0.0
      %1159 = vmatpush1.msra.mxu0 0.0
      %1160 = vmatprep.subr.mxu0 0.0
      %1161 = vmatpush1.msra.mxu0 0.0
      %1162 = vmatprep.subr.mxu0 0.0
      %1163 = vmatpush1.msra.mxu0 0.0
      %1164 = vmatprep.subr.mxu0 0.0
      %1165 = vmatpush1.msra.mxu0 0.0
      %1166 = vmatprep.subr.mxu0 0.0
      %1167 = vmatpush1.msra.mxu0 0.0
      %1168 = vmatprep.subr.mxu0 0.0
      %1169 = vmatpush1.msra.mxu0 0.0
      %1170 = vmatprep.subr.mxu0 0.0
      %1171 = vmatpush1.msra.mxu0 0.0
      %1172 = vmatprep.mubr.f32.mxu0 0.0
      %1173 = vmatmul.mubr.f32.gmra.mrb[0].mxu0 %v530
      %v1174 = vpop.f32.mrb[0].mxu0
      %v1175 = vadd.f32 0.0, %v1174
      %v1176 = vpop.f32.mrb[0].mxu0
      %1177 = vmatprep.mubr.f32.mxu0 0.0
      %1178 = vmatmul.mubr.f32.gmra.mrb[0].mxu0 %v533
      %v1179 = vpop.f32.mrb[0].mxu0
      %v1180 = vadd.f32 0.0, %v1179
      %v1181 = vpop.f32.mrb[0].mxu0
      %1182 = vmatprep.mubr.f32.mxu0 0.0
      %1183 = vmatmul.mubr.f32.gmra.mrb[0].mxu0 %v536
      %v1184 = vpop.f32.mrb[0].mxu0
      %v1185 = vadd.f32 0.0, %v1184
      %v1186 = vpop.f32.mrb[0].mxu0
      %1187 = vmatprep.mubr.f32.mxu0 0.0
      %1188 = vmatmul.mubr.f32.gmra.mrb[0].mxu0 %v539
      %v1189 = vpop.f32.mrb[0].mxu0
      %v1190 = vadd.f32 0.0, %v1189
      %v1191 = vpop.f32.mrb[0].mxu0
      %1192 = vmatprep.mubr.f32.mxu0 0.0
      %1193 = vmatmul.mubr.f32.gmra.mrb[0].mxu0 %v542
      %v1194 = vpop.f32.mrb[0].mxu0
      %v1195 = vadd.f32 0.0, %v1194
      %v1196 = vpop.f32.mrb[0].mxu0
      %1197 = vmatprep.mubr.f32.mxu0 0.0
      %1198 = vmatmul.mubr.f32.gmra.mrb[0].mxu0 %v545
      %v1199 = vpop.f32.mrb[0].mxu0
      %v1200 = vadd.f32 0.0, %v1199
      %v1201 = vpop.f32.mrb[0].mxu0
      %1202 = vmatprep.mubr.f32.mxu0 0.0
      %1203 = vmatmul.mubr.f32.gmra.mrb[0].mxu0 %v548
      %v1204 = vpop.f32.mrb[0].mxu0
      %v1205 = vadd.f32 0.0, %v1204
      %v1206 = vpop.f32.mrb[0].mxu0
      %1207 = vmatprep.mubr.f32.mxu0 0.0
      %1208 = vmatmul.mubr.f32.gmra.mrb[0].mxu0 %v551
      %v1209 = vpop.f32.mrb[0].mxu0
      %v1210 = vadd.f32 0.0, %v1209
      %v1211 = vpop.f32.mrb[0].mxu0
      %1212 = vdwg.mxu0
      %v1213 = vmul.f32 %v1070, %v1070
      %v1214 = vmul.f32 %v1075, %v1075
      %v1215 = vmul.f32 %v1080, %v1080
      %v1216 = vmul.f32 %v1085, %v1085
      %v1217 = vmul.f32 %v1090, %v1090
      %v1218 = vmul.f32 %v1095, %v1095
      %v1219 = vmul.f32 %v1100, %v1100
      %v1220 = vmul.f32 %v1105, %v1105
      %v1221 = vsub.f32 %v1175, %v1213
      %v1222 = vsub.f32 %v1180, %v1214
      %v1223 = vsub.f32 %v1185, %v1215
      %v1224 = vsub.f32 %v1190, %v1216
      %v1225 = vsub.f32 %v1195, %v1217
      %v1226 = vsub.f32 %v1200, %v1218
      %v1227 = vsub.f32 %v1205, %v1219
      %v1228 = vsub.f32 %v1210, %v1220
      %v1229 = vadd.f32 %v1221, 1e-05
      %v1230 = vadd.f32 %v1222, 1e-05
      %v1231 = vadd.f32 %v1223, 1e-05
      %v1232 = vadd.f32 %v1224, 1e-05
      %v1233 = vadd.f32 %v1225, 1e-05
      %v1234 = vadd.f32 %v1226, 1e-05
      %v1235 = vadd.f32 %v1227, 1e-05
      %v1236 = vadd.f32 %v1228, 1e-05
      %v1237 = vrsqrt.pop %v1229
      %v1238 = vrsqrt.pop %v1230
      %v1239 = vrsqrt.pop %v1231
      %v1240 = vrsqrt.pop %v1232
      %v1241 = vrsqrt.pop %v1233
      %v1242 = vrsqrt.pop %v1234
      %v1243 = vrsqrt.pop %v1235
      %v1244 = vrsqrt.pop %v1236
      %v1245 = vmul.f32 %v1237, %v440
      %v1246 = vmul.f32 %v1238, %v441
      %v1247 = vmul.f32 %v1239, %v442
      %v1248 = vmul.f32 %v1240, %v443
      %v1249 = vmul.f32 %v1241, %v444
      %v1250 = vmul.f32 %v1242, %v445
      %v1251 = vmul.f32 %v1243, %v446
      %v1252 = vmul.f32 %v1244, %v447
      %v1253 = vmul.f32 %v1070, %v1245
      %v1254 = vmul.f32 %v1075, %v1246
      %v1255 = vmul.f32 %v1080, %v1247
      %v1256 = vmul.f32 %v1085, %v1248
      %v1257 = vmul.f32 %v1090, %v1249
      %v1258 = vmul.f32 %v1095, %v1250
      %v1259 = vmul.f32 %v1100, %v1251
      %v1260 = vmul.f32 %v1105, %v1252
      %v1261 = vsub.f32 %v448, %v1253
      %v1262 = vsub.f32 %v449, %v1254
      %v1263 = vsub.f32 %v450, %v1255
      %v1264 = vsub.f32 %v451, %v1256
      %v1265 = vsub.f32 %v452, %v1257
      %v1266 = vsub.f32 %v453, %v1258
      %v1267 = vsub.f32 %v454, %v1259
      %v1268 = vsub.f32 %v455, %v1260
      %1270 = vset.pattern.permute.xlu0 0
      %1271 = vperm.xlu0 %1270, %v1245
      %v1272 = vpop.permute.xlu0 %1271
      %1275 = vset.pattern.permute.xlu0 0
      %1276 = vperm.xlu0 %1275, %v1246
      %v1277 = vpop.permute.xlu0 %1276
      %1280 = vset.pattern.permute.xlu0 0
      %1281 = vperm.xlu0 %1280, %v1247
      %v1282 = vpop.permute.xlu0 %1281
      %1285 = vset.pattern.permute.xlu0 0
      %1286 = vperm.xlu0 %1285, %v1248
      %v1287 = vpop.permute.xlu0 %1286
      %1290 = vset.pattern.permute.xlu0 0
      %1291 = vperm.xlu0 %1290, %v1249
      %v1292 = vpop.permute.xlu0 %1291
      %1295 = vset.pattern.permute.xlu0 0
      %1296 = vperm.xlu0 %1295, %v1250
      %v1297 = vpop.permute.xlu0 %1296
      %1300 = vset.pattern.permute.xlu0 0
      %1301 = vperm.xlu0 %1300, %v1251
      %v1302 = vpop.permute.xlu0 %1301
      %1305 = vset.pattern.permute.xlu0 0
      %1306 = vperm.xlu0 %1305, %v1252
      %v1307 = vpop.permute.xlu0 %1306
      %v1309 = vmul.f32 %v408, %v1272
      %v1310 = vmul.f32 %v409, %v1272
      %v1311 = vmul.f32 %v410, %v1277
      %v1312 = vmul.f32 %v411, %v1277
      %v1313 = vmul.f32 %v412, %v1282
      %v1314 = vmul.f32 %v413, %v1282
      %v1315 = vmul.f32 %v414, %v1287
      %v1316 = vmul.f32 %v415, %v1287
      %v1317 = vmul.f32 %v416, %v1292
      %v1318 = vmul.f32 %v417, %v1292
      %v1319 = vmul.f32 %v418, %v1297
      %v1320 = vmul.f32 %v419, %v1297
      %v1321 = vmul.f32 %v420, %v1302
      %v1322 = vmul.f32 %v421, %v1302
      %v1323 = vmul.f32 %v422, %v1307
      %v1324 = vmul.f32 %v423, %v1307
      %1326 = vset.pattern.permute.xlu0 0
      %1327 = vperm.xlu0 %1326, %v1261
      %v1328 = vpop.permute.xlu0 %1327
      %1331 = vset.pattern.permute.xlu0 0
      %1332 = vperm.xlu0 %1331, %v1262
      %v1333 = vpop.permute.xlu0 %1332
      %1336 = vset.pattern.permute.xlu0 0
      %1337 = vperm.xlu0 %1336, %v1263
      %v1338 = vpop.permute.xlu0 %1337
      %1341 = vset.pattern.permute.xlu0 0
      %1342 = vperm.xlu0 %1341, %v1264
      %v1343 = vpop.permute.xlu0 %1342
      %1346 = vset.pattern.permute.xlu0 0
      %1347 = vperm.xlu0 %1346, %v1265
      %v1348 = vpop.permute.xlu0 %1347
      %1351 = vset.pattern.permute.xlu0 0
      %1352 = vperm.xlu0 %1351, %v1266
      %v1353 = vpop.permute.xlu0 %1352
      %1356 = vset.pattern.permute.xlu0 0
      %1357 = vperm.xlu0 %1356, %v1267
      %v1358 = vpop.permute.xlu0 %1357
      %1361 = vset.pattern.permute.xlu0 0
      %1362 = vperm.xlu0 %1361, %v1268
      %v1363 = vpop.permute.xlu0 %1362
      %v1365 = vadd.f32 %v1309, %v1328
      %v1366 = vadd.f32 %v1310, %v1328
      %v1367 = vadd.f32 %v1311, %v1333
      %v1368 = vadd.f32 %v1312, %v1333
      %v1369 = vadd.f32 %v1313, %v1338
      %v1370 = vadd.f32 %v1314, %v1338
      %v1371 = vadd.f32 %v1315, %v1343
      %v1372 = vadd.f32 %v1316, %v1343
      %v1373 = vadd.f32 %v1317, %v1348
      %v1374 = vadd.f32 %v1318, %v1348
      %v1375 = vadd.f32 %v1319, %v1353
      %v1376 = vadd.f32 %v1320, %v1353
      %v1377 = vadd.f32 %v1321, %v1358
      %v1378 = vadd.f32 %v1322, %v1358
      %v1379 = vadd.f32 %v1323, %v1363
      %v1380 = vadd.f32 %v1324, %v1363
      %v1381 = vpack.c.bf16 %v1367, %v1365
      %v1382 = vpack.c.bf16 %v1368, %v1366
      %v1383 = vpack.c.bf16 %v1371, %v1369
      %v1384 = vpack.c.bf16 %v1372, %v1370
      %v1385 = vpack.c.bf16 %v1375, %v1373
      %v1386 = vpack.c.bf16 %v1376, %v1374
      %v1387 = vpack.c.bf16 %v1379, %v1377
      %v1388 = vpack.c.bf16 %v1380, %v1378
      %v1389 = vld [vmem:[%s5] sm:$0xf]
      %v1390 = vld [vmem:[%s5 + $0x4] sm:$0xf]
      %v1391 = vld [vmem:[%s5 + $0x8] sm:$0xf]
      %v1392 = vld [vmem:[%s5 + $0xc] sm:$0xf]
      %v1393 = vld [vmem:[%s5 + $0x10] sm:$0xf]
      %v1394 = vld [vmem:[%s5 + $0x14] sm:$0xf]
      %v1395 = vld [vmem:[%s5 + $0x18] sm:$0xf]
      %v1396 = vld [vmem:[%s5 + $0x1c] sm:$0xf]
      %v1397 = vld [vmem:[%s6] sm:$0xff]
      %v1398 = vld [vmem:[%s6 + $0x8] sm:$0xff]
      %v1399 = vld [vmem:[%s6 + $0x10] sm:$0xff]
      %v1400 = vld [vmem:[%s6 + $0x18] sm:$0xff]
      %v1401 = vld [vmem:[%s6 + $0x20] sm:$0xff]
      %v1402 = vld [vmem:[%s6 + $0x28] sm:$0xff]
      %v1403 = vld [vmem:[%s6 + $0x30] sm:$0xff]
      %v1404 = vld [vmem:[%s6 + $0x38] sm:$0xff]
      %1406 = vset.pattern.permute.xlu0 0
      %1407 = vperm.xlu0 %1406, %v1397
      %v1408 = vpop.permute.xlu0 %1407
      %1411 = vset.pattern.permute.xlu0 0
      %1412 = vperm.xlu0 %1411, %v1398
      %v1413 = vpop.permute.xlu0 %1412
      %1416 = vset.pattern.permute.xlu0 0
      %1417 = vperm.xlu0 %1416, %v1399
      %v1418 = vpop.permute.xlu0 %1417
      %1421 = vset.pattern.permute.xlu0 0
      %1422 = vperm.xlu0 %1421, %v1400
      %v1423 = vpop.permute.xlu0 %1422
      %1426 = vset.pattern.permute.xlu0 0
      %1427 = vperm.xlu0 %1426, %v1401
      %v1428 = vpop.permute.xlu0 %1427
      %1431 = vset.pattern.permute.xlu0 0
      %1432 = vperm.xlu0 %1431, %v1402
      %v1433 = vpop.permute.xlu0 %1432
      %1436 = vset.pattern.permute.xlu0 0
      %1437 = vperm.xlu0 %1436, %v1403
      %v1438 = vpop.permute.xlu0 %1437
      %1441 = vset.pattern.permute.xlu0 0
      %1442 = vperm.xlu0 %1441, %v1404
      %v1443 = vpop.permute.xlu0 %1442
      %v1453 = vunpack.c.l.b16 %v1389
      %v1454 = vunpack.c.l.b16 %v1390
      %v1455 = vunpack.c.l.b16 %v1391
      %v1456 = vunpack.c.l.b16 %v1392
      %v1457 = vunpack.c.l.b16 %v1393
      %v1458 = vunpack.c.l.b16 %v1394
      %v1459 = vunpack.c.l.b16 %v1395
      %v1460 = vunpack.c.l.b16 %v1396
      %v1461 = vpack.c.b16 %v1454, %v1453
      %v1462 = vpack.c.b16 %v1456, %v1455
      %v1463 = vpack.c.b16 %v1458, %v1457
      %v1464 = vpack.c.b16 %v1460, %v1459
      %v1466 = vsel %vm528, %v1461, 0
      %v1469 = vsel %vm528, %v1462, 0
      %v1472 = vsel %vm528, %v1463, 0
      %v1475 = vsel %vm528, %v1464, 0
      %1477 = vmatprep.subr.bf16.mxu0 %v932
      %1478 = vmatpush1.bf16.msra.mxu0 %v931
      %1479 = vmatprep.subr.bf16.mxu0 %v934
      %1480 = vmatpush1.bf16.msra.mxu0 %v933
      %1481 = vmatprep.subr.bf16.mxu0 %v936
      %1482 = vmatpush1.bf16.msra.mxu0 %v935
      %1483 = vmatprep.subr.bf16.mxu0 %v938
      %1484 = vmatpush1.bf16.msra.mxu0 %v937
      %1485 = vmatprep.subr.bf16.mxu0 0
      %1486 = vmatpush1.bf16.msra.mxu0 0
      %1487 = vmatprep.subr.bf16.mxu0 0
      %1488 = vmatpush1.bf16.msra.mxu0 0
      %1489 = vmatprep.subr.bf16.mxu0 0
      %1490 = vmatpush1.bf16.msra.mxu0 0
      %1491 = vmatprep.subr.bf16.mxu0 0
      %1492 = vmatpush1.bf16.msra.mxu0 0
      %1493 = vmatprep.subr.bf16.mxu0 0
      %1494 = vmatpush1.bf16.msra.mxu0 0
      %1495 = vmatprep.subr.bf16.mxu0 0
      %1496 = vmatpush1.bf16.msra.mxu0 0
      %1497 = vmatprep.subr.bf16.mxu0 0
      %1498 = vmatpush1.bf16.msra.mxu0 0
      %1499 = vmatprep.subr.bf16.mxu0 0
      %1500 = vmatpush1.bf16.msra.mxu0 0
      %1501 = vmatprep.subr.bf16.mxu0 0
      %1502 = vmatpush1.bf16.msra.mxu0 0
      %1503 = vmatprep.subr.bf16.mxu0 0
      %1504 = vmatpush1.bf16.msra.mxu0 0
      %1505 = vmatprep.subr.bf16.mxu0 0
      %1506 = vmatpush1.bf16.msra.mxu0 0
      %1507 = vmatprep.subr.bf16.mxu0 0
      %1508 = vmatpush1.bf16.msra.mxu0 0
      %1509 = vmatprep.mubr.bf16.mxu0 0
      %1510 = vmatmul.mubr.bf16.gmra.mrb[0].mxu0 %v1466
      %v1511 = vpop.f32.mrb[0].mxu0
      %v1512 = vadd.f32 %v1408, %v1511
      %v1513 = vpop.f32.mrb[0].mxu0
      %v1514 = vadd.f32 %v1408, %v1513
      %v1515 = vpop.f32.mrb[0].mxu0
      %v1516 = vadd.f32 %v1413, %v1515
      %v1517 = vpop.f32.mrb[0].mxu0
      %v1518 = vadd.f32 %v1413, %v1517
      %1519 = vmatprep.mubr.bf16.mxu0 0
      %1520 = vmatmul.mubr.bf16.gmra.mrb[0].mxu0 %v1469
      %v1521 = vpop.f32.mrb[0].mxu0
      %v1522 = vadd.f32 %v1418, %v1521
      %v1523 = vpop.f32.mrb[0].mxu0
      %v1524 = vadd.f32 %v1418, %v1523
      %v1525 = vpop.f32.mrb[0].mxu0
      %v1526 = vadd.f32 %v1423, %v1525
      %v1527 = vpop.f32.mrb[0].mxu0
      %v1528 = vadd.f32 %v1423, %v1527
      %1529 = vmatprep.mubr.bf16.mxu0 0
      %1530 = vmatmul.mubr.bf16.gmra.mrb[0].mxu0 %v1472
      %v1531 = vpop.f32.mrb[0].mxu0
      %v1532 = vadd.f32 %v1428, %v1531
      %v1533 = vpop.f32.mrb[0].mxu0
      %v1534 = vadd.f32 %v1428, %v1533
      %v1535 = vpop.f32.mrb[0].mxu0
      %v1536 = vadd.f32 %v1433, %v1535
      %v1537 = vpop.f32.mrb[0].mxu0
      %v1538 = vadd.f32 %v1433, %v1537
      %1539 = vmatprep.mubr.bf16.mxu0 0
      %1540 = vmatmul.mubr.bf16.gmra.mrb[0].mxu0 %v1475
      %v1541 = vpop.f32.mrb[0].mxu0
      %v1542 = vadd.f32 %v1438, %v1541
      %v1543 = vpop.f32.mrb[0].mxu0
      %v1544 = vadd.f32 %v1438, %v1543
      %v1545 = vpop.f32.mrb[0].mxu0
      %v1546 = vadd.f32 %v1443, %v1545
      %v1547 = vpop.f32.mrb[0].mxu0
      %v1548 = vadd.f32 %v1443, %v1547
      %1549 = vdwg.mxu0
      %v1550 = vpack.c.bf16 %v1516, %v1512
      %v1551 = vpack.c.bf16 %v1518, %v1514
      %v1552 = vpack.c.bf16 %v1526, %v1522
      %v1553 = vpack.c.bf16 %v1528, %v1524
      %v1554 = vpack.c.bf16 %v1536, %v1532
      %v1555 = vpack.c.bf16 %v1538, %v1534
      %v1556 = vpack.c.bf16 %v1546, %v1542
      %v1557 = vpack.c.bf16 %v1548, %v1544
      %1558 = vst [vmem:[#allocation2] sm:$0xff] %v1550
      %1559 = vst [vmem:[#allocation2 + $0x8] sm:$0xff] %v1551
      %1560 = vst [vmem:[#allocation2 + $0x10] sm:$0xff] %v1552
      %1561 = vst [vmem:[#allocation2 + $0x18] sm:$0xff] %v1553
      %1562 = vst [vmem:[#allocation2 + $0x20] sm:$0xff] %v1554
      %1563 = vst [vmem:[#allocation2 + $0x28] sm:$0xff] %v1555
      %1564 = vst [vmem:[#allocation2 + $0x30] sm:$0xff] %v1556
      %1565 = vst [vmem:[#allocation2 + $0x38] sm:$0xff] %v1557
      %v1566 = vld [vmem:[%s7] sm:$0xf]
      %v1567 = vld [vmem:[%s7 + $0x4] sm:$0xf]
      %v1568 = vld [vmem:[%s7 + $0x8] sm:$0xf]
      %v1569 = vld [vmem:[%s7 + $0xc] sm:$0xf]
      %v1570 = vld [vmem:[%s7 + $0x10] sm:$0xf]
      %v1571 = vld [vmem:[%s7 + $0x14] sm:$0xf]
      %v1572 = vld [vmem:[%s7 + $0x18] sm:$0xf]
      %v1573 = vld [vmem:[%s7 + $0x1c] sm:$0xf]
      %v1574 = vld [vmem:[%s7 + $0x20] sm:$0xf]
      %v1575 = vld [vmem:[%s7 + $0x24] sm:$0xf]
      %v1576 = vld [vmem:[%s7 + $0x28] sm:$0xf]
      %v1577 = vld [vmem:[%s7 + $0x2c] sm:$0xf]
      %v1578 = vld [vmem:[%s7 + $0x30] sm:$0xf]
      %v1579 = vld [vmem:[%s7 + $0x34] sm:$0xf]
      %v1580 = vld [vmem:[%s7 + $0x38] sm:$0xf]
      %v1581 = vld [vmem:[%s7 + $0x3c] sm:$0xf]
      %v1582 = vld [vmem:[%s8] sm:$0xff]
      %v1583 = vld [vmem:[%s8 + $0x8] sm:$0xff]
      %v1584 = vld [vmem:[%s8 + $0x10] sm:$0xff]
      %v1585 = vld [vmem:[%s8 + $0x18] sm:$0xff]
      %v1586 = vld [vmem:[%s8 + $0x20] sm:$0xff]
      %v1587 = vld [vmem:[%s8 + $0x28] sm:$0xff]
      %v1588 = vld [vmem:[%s8 + $0x30] sm:$0xff]
      %v1589 = vld [vmem:[%s8 + $0x38] sm:$0xff]
      %v1590 = vld [vmem:[%s8 + $0x40] sm:$0xff]
      %v1591 = vld [vmem:[%s8 + $0x48] sm:$0xff]
      %v1592 = vld [vmem:[%s8 + $0x50] sm:$0xff]
      %v1593 = vld [vmem:[%s8 + $0x58] sm:$0xff]
      %v1594 = vld [vmem:[%s8 + $0x60] sm:$0xff]
      %v1595 = vld [vmem:[%s8 + $0x68] sm:$0xff]
      %v1596 = vld [vmem:[%s8 + $0x70] sm:$0xff]
      %v1597 = vld [vmem:[%s8 + $0x78] sm:$0xff]
      %1599 = vset.pattern.permute.xlu0 0
      %1600 = vperm.xlu0 %1599, %v1582
      %v1601 = vpop.permute.xlu0 %1600
      %1604 = vset.pattern.permute.xlu0 0
      %1605 = vperm.xlu0 %1604, %v1583
      %v1606 = vpop.permute.xlu0 %1605
      %1609 = vset.pattern.permute.xlu0 0
      %1610 = vperm.xlu0 %1609, %v1584
      %v1611 = vpop.permute.xlu0 %1610
      %1614 = vset.pattern.permute.xlu0 0
      %1615 = vperm.xlu0 %1614, %v1585
      %v1616 = vpop.permute.xlu0 %1615
      %1619 = vset.pattern.permute.xlu0 0
      %1620 = vperm.xlu0 %1619, %v1586
      %v1621 = vpop.permute.xlu0 %1620
      %1624 = vset.pattern.permute.xlu0 0
      %1625 = vperm.xlu0 %1624, %v1587
      %v1626 = vpop.permute.xlu0 %1625
      %1629 = vset.pattern.permute.xlu0 0
      %1630 = vperm.xlu0 %1629, %v1588
      %v1631 = vpop.permute.xlu0 %1630
      %1634 = vset.pattern.permute.xlu0 0
      %1635 = vperm.xlu0 %1634, %v1589
      %v1636 = vpop.permute.xlu0 %1635
      %1639 = vset.pattern.permute.xlu0 0
      %1640 = vperm.xlu0 %1639, %v1590
      %v1641 = vpop.permute.xlu0 %1640
      %1644 = vset.pattern.permute.xlu0 0
      %1645 = vperm.xlu0 %1644, %v1591
      %v1646 = vpop.permute.xlu0 %1645
      %1649 = vset.pattern.permute.xlu0 0
      %1650 = vperm.xlu0 %1649, %v1592
      %v1651 = vpop.permute.xlu0 %1650
      %1654 = vset.pattern.permute.xlu0 0
      %1655 = vperm.xlu0 %1654, %v1593
      %v1656 = vpop.permute.xlu0 %1655
      %1659 = vset.pattern.permute.xlu0 0
      %1660 = vperm.xlu0 %1659, %v1594
      %v1661 = vpop.permute.xlu0 %1660
      %1664 = vset.pattern.permute.xlu0 0
      %1665 = vperm.xlu0 %1664, %v1595
      %v1666 = vpop.permute.xlu0 %1665
      %1669 = vset.pattern.permute.xlu0 0
      %1670 = vperm.xlu0 %1669, %v1596
      %v1671 = vpop.permute.xlu0 %1670
      %1674 = vset.pattern.permute.xlu0 0
      %1675 = vperm.xlu0 %1674, %v1597
      %v1676 = vpop.permute.xlu0 %1675
      %v1694 = vunpack.c.l.b16 %v1566
      %v1695 = vunpack.c.l.b16 %v1567
      %v1696 = vunpack.c.l.b16 %v1568
      %v1697 = vunpack.c.l.b16 %v1569
      %v1698 = vunpack.c.l.b16 %v1570
      %v1699 = vunpack.c.l.b16 %v1571
      %v1700 = vunpack.c.l.b16 %v1572
      %v1701 = vunpack.c.l.b16 %v1573
      %v1702 = vunpack.c.l.b16 %v1574
      %v1703 = vunpack.c.l.b16 %v1575
      %v1704 = vunpack.c.l.b16 %v1576
      %v1705 = vunpack.c.l.b16 %v1577
      %v1706 = vunpack.c.l.b16 %v1578
      %v1707 = vunpack.c.l.b16 %v1579
      %v1708 = vunpack.c.l.b16 %v1580
      %v1709 = vunpack.c.l.b16 %v1581
      %v1710 = vpack.c.b16 %v1695, %v1694
      %v1711 = vpack.c.b16 %v1697, %v1696
      %v1712 = vpack.c.b16 %v1699, %v1698
      %v1713 = vpack.c.b16 %v1701, %v1700
      %v1714 = vpack.c.b16 %v1703, %v1702
      %v1715 = vpack.c.b16 %v1705, %v1704
      %v1716 = vpack.c.b16 %v1707, %v1706
      %v1717 = vpack.c.b16 %v1709, %v1708
      %v1719 = vsel %vm528, %v1710, 0
      %v1722 = vsel %vm528, %v1711, 0
      %v1725 = vsel %vm528, %v1712, 0
      %v1728 = vsel %vm528, %v1713, 0
      %v1731 = vsel %vm528, %v1714, 0
      %v1734 = vsel %vm528, %v1715, 0
      %v1737 = vsel %vm528, %v1716, 0
      %v1740 = vsel %vm528, %v1717, 0
      %1742 = vmatprep.subr.bf16.mxu0 %v1382
      %1743 = vmatpush1.bf16.msra.mxu0 %v1381
      %1744 = vmatprep.subr.bf16.mxu0 %v1384
      %1745 = vmatpush1.bf16.msra.mxu0 %v1383
      %1746 = vmatprep.subr.bf16.mxu0 %v1386
      %1747 = vmatpush1.bf16.msra.mxu0 %v1385
      %1748 = vmatprep.subr.bf16.mxu0 %v1388
      %1749 = vmatpush1.bf16.msra.mxu0 %v1387
      %1750 = vmatprep.subr.bf16.mxu0 0
      %1751 = vmatpush1.bf16.msra.mxu0 0
      %1752 = vmatprep.subr.bf16.mxu0 0
      %1753 = vmatpush1.bf16.msra.mxu0 0
      %1754 = vmatprep.subr.bf16.mxu0 0
      %1755 = vmatpush1.bf16.msra.mxu0 0
      %1756 = vmatprep.subr.bf16.mxu0 0
      %1757 = vmatpush1.bf16.msra.mxu0 0
      %1758 = vmatprep.subr.bf16.mxu0 0
      %1759 = vmatpush1.bf16.msra.mxu0 0
      %1760 = vmatprep.subr.bf16.mxu0 0
      %1761 = vmatpush1.bf16.msra.mxu0 0
      %1762 = vmatprep.subr.bf16.mxu0 0
      %1763 = vmatpush1.bf16.msra.mxu0 0
      %1764 = vmatprep.subr.bf16.mxu0 0
      %1765 = vmatpush1.bf16.msra.mxu0 0
      %1766 = vmatprep.subr.bf16.mxu0 0
      %1767 = vmatpush1.bf16.msra.mxu0 0
      %1768 = vmatprep.subr.bf16.mxu0 0
      %1769 = vmatpush1.bf16.msra.mxu0 0
      %1770 = vmatprep.subr.bf16.mxu0 0
      %1771 = vmatpush1.bf16.msra.mxu0 0
      %1772 = vmatprep.subr.bf16.mxu0 0
      %1773 = vmatpush1.bf16.msra.mxu0 0
      %1774 = vmatprep.mubr.bf16.mxu0 0
      %1775 = vmatmul.mubr.bf16.gmra.mrb[0].mxu0 %v1719
      %v1776 = vpop.f32.mrb[0].mxu0
      %v1777 = vadd.f32 %v1601, %v1776
      %v1778 = vpop.f32.mrb[0].mxu0
      %v1779 = vadd.f32 %v1601, %v1778
      %v1780 = vpop.f32.mrb[0].mxu0
      %v1781 = vadd.f32 %v1606, %v1780
      %v1782 = vpop.f32.mrb[0].mxu0
      %v1783 = vadd.f32 %v1606, %v1782
      %1784 = vmatprep.mubr.bf16.mxu0 0
      %1785 = vmatmul.mubr.bf16.gmra.mrb[0].mxu0 %v1722
      %v1786 = vpop.f32.mrb[0].mxu0
      %v1787 = vadd.f32 %v1611, %v1786
      %v1788 = vpop.f32.mrb[0].mxu0
      %v1789 = vadd.f32 %v1611, %v1788
      %v1790 = vpop.f32.mrb[0].mxu0
      %v1791 = vadd.f32 %v1616, %v1790
      %v1792 = vpop.f32.mrb[0].mxu0
      %v1793 = vadd.f32 %v1616, %v1792
      %1794 = vmatprep.mubr.bf16.mxu0 0
      %1795 = vmatmul.mubr.bf16.gmra.mrb[0].mxu0 %v1725
      %v1796 = vpop.f32.mrb[0].mxu0
      %v1797 = vadd.f32 %v1621, %v1796
      %v1798 = vpop.f32.mrb[0].mxu0
      %v1799 = vadd.f32 %v1621, %v1798
      %v1800 = vpop.f32.mrb[0].mxu0
      %v1801 = vadd.f32 %v1626, %v1800
      %v1802 = vpop.f32.mrb[0].mxu0
      %v1803 = vadd.f32 %v1626, %v1802
      %1804 = vmatprep.mubr.bf16.mxu0 0
      %1805 = vmatmul.mubr.bf16.gmra.mrb[0].mxu0 %v1728
      %v1806 = vpop.f32.mrb[0].mxu0
      %v1807 = vadd.f32 %v1631, %v1806
      %v1808 = vpop.f32.mrb[0].mxu0
      %v1809 = vadd.f32 %v1631, %v1808
      %v1810 = vpop.f32.mrb[0].mxu0
      %v1811 = vadd.f32 %v1636, %v1810
      %v1812 = vpop.f32.mrb[0].mxu0
      %v1813 = vadd.f32 %v1636, %v1812
      %1814 = vmatprep.mubr.bf16.mxu0 0
      %1815 = vmatmul.mubr.bf16.gmra.mrb[0].mxu0 %v1731
      %v1816 = vpop.f32.mrb[0].mxu0
      %v1817 = vadd.f32 %v1641, %v1816
      %v1818 = vpop.f32.mrb[0].mxu0
      %v1819 = vadd.f32 %v1641, %v1818
      %v1820 = vpop.f32.mrb[0].mxu0
      %v1821 = vadd.f32 %v1646, %v1820
      %v1822 = vpop.f32.mrb[0].mxu0
      %v1823 = vadd.f32 %v1646, %v1822
      %1824 = vmatprep.mubr.bf16.mxu0 0
      %1825 = vmatmul.mubr.bf16.gmra.mrb[0].mxu0 %v1734
      %v1826 = vpop.f32.mrb[0].mxu0
      %v1827 = vadd.f32 %v1651, %v1826
      %v1828 = vpop.f32.mrb[0].mxu0
      %v1829 = vadd.f32 %v1651, %v1828
      %v1830 = vpop.f32.mrb[0].mxu0
      %v1831 = vadd.f32 %v1656, %v1830
      %v1832 = vpop.f32.mrb[0].mxu0
      %v1833 = vadd.f32 %v1656, %v1832
      %1834 = vmatprep.mubr.bf16.mxu0 0
      %1835 = vmatmul.mubr.bf16.gmra.mrb[0].mxu0 %v1737
      %v1836 = vpop.f32.mrb[0].mxu0
      %v1837 = vadd.f32 %v1661, %v1836
      %v1838 = vpop.f32.mrb[0].mxu0
      %v1839 = vadd.f32 %v1661, %v1838
      %v1840 = vpop.f32.mrb[0].mxu0
      %v1841 = vadd.f32 %v1666, %v1840
      %v1842 = vpop.f32.mrb[0].mxu0
      %v1843 = vadd.f32 %v1666, %v1842
      %1844 = vmatprep.mubr.bf16.mxu0 0
      %1845 = vmatmul.mubr.bf16.gmra.mrb[0].mxu0 %v1740
      %v1846 = vpop.f32.mrb[0].mxu0
      %v1847 = vadd.f32 %v1671, %v1846
      %v1848 = vpop.f32.mrb[0].mxu0
      %v1849 = vadd.f32 %v1671, %v1848
      %v1850 = vpop.f32.mrb[0].mxu0
      %v1851 = vadd.f32 %v1676, %v1850
      %v1852 = vpop.f32.mrb[0].mxu0
      %v1853 = vadd.f32 %v1676, %v1852
      %1854 = vdwg.mxu0
      %v1855 = vpack.c.bf16 %v1781, %v1777
      %v1856 = vpack.c.bf16 %v1783, %v1779
      %v1857 = vpack.c.bf16 %v1791, %v1787
      %v1858 = vpack.c.bf16 %v1793, %v1789
      %v1859 = vpack.c.bf16 %v1801, %v1797
      %v1860 = vpack.c.bf16 %v1803, %v1799
      %v1861 = vpack.c.bf16 %v1811, %v1807
      %v1862 = vpack.c.bf16 %v1813, %v1809
      %v1863 = vpack.c.bf16 %v1821, %v1817
      %v1864 = vpack.c.bf16 %v1823, %v1819
      %v1865 = vpack.c.bf16 %v1831, %v1827
      %v1866 = vpack.c.bf16 %v1833, %v1829
      %v1867 = vpack.c.bf16 %v1841, %v1837
      %v1868 = vpack.c.bf16 %v1843, %v1839
      %v1869 = vpack.c.bf16 %v1851, %v1847
      %v1870 = vpack.c.bf16 %v1853, %v1849
      %1871 = vst [vmem:[#allocation2 + $0x40] sm:$0xff] %v1855
      %1872 = vst [vmem:[#allocation2 + $0x48] sm:$0xff] %v1856
      %1873 = vst [vmem:[#allocation2 + $0x50] sm:$0xff] %v1857
      %1874 = vst [vmem:[#allocation2 + $0x58] sm:$0xff] %v1858
      %1875 = vst [vmem:[#allocation2 + $0x60] sm:$0xff] %v1859
      %1876 = vst [vmem:[#allocation2 + $0x68] sm:$0xff] %v1860
      %1877 = vst [vmem:[#allocation2 + $0x70] sm:$0xff] %v1861
      %1878 = vst [vmem:[#allocation2 + $0x78] sm:$0xff] %v1862
      %1879 = vst [vmem:[#allocation2 + $0x80] sm:$0xff] %v1863
      %1880 = vst [vmem:[#allocation2 + $0x88] sm:$0xff] %v1864
      %1881 = vst [vmem:[#allocation2 + $0x90] sm:$0xff] %v1865
      %1882 = vst [vmem:[#allocation2 + $0x98] sm:$0xff] %v1866
      %1883 = vst [vmem:[#allocation2 + $0xa0] sm:$0xff] %v1867
      %1884 = vst [vmem:[#allocation2 + $0xa8] sm:$0xff] %v1868
      %1885 = vst [vmem:[#allocation2 + $0xb0] sm:$0xff] %v1869
      %1886 = vst [vmem:[#allocation2 + $0xb8] sm:$0xff] %v1870
      %v1887 = vld [vmem:[#allocation2] sm:$0xff]
      %v1888 = vld [vmem:[#allocation2 + $0x8] sm:$0xff]
      %v1889 = vld [vmem:[#allocation2 + $0x10] sm:$0xff]
      %v1890 = vld [vmem:[#allocation2 + $0x18] sm:$0xff]
      %v1891 = vld [vmem:[#allocation2 + $0x20] sm:$0xff]
      %v1892 = vld [vmem:[#allocation2 + $0x28] sm:$0xff]
      %1893 = vxpose.xlu0.c.b16.start [1/8] %v1889, 128
      %1894 = vxpose.xlu0.c.b16.cont [2/8] 0, 128
      %1895 = vxpose.xlu0.c.b16.cont [3/8] 0, 128
      %1896 = vxpose.xlu0.c.b16.cont [4/8] 0, 128
      %1897 = vxpose.xlu0.c.b16.cont [5/8] 0, 128
      %1898 = vxpose.xlu0.c.b16.cont [6/8] 0, 128
      %1899 = vxpose.xlu0.c.b16.cont [7/8] 0, 128
      %1900 = vxpose.xlu0.c.b16.end [8/8] 0, 128
      %v1901 = vpop.trf.xlu0
      %v1902 = vpop.trf.xlu0
      %v1903 = vpop.trf.xlu0
      %v1904 = vpop.trf.xlu0
      %v1905 = vpop.trf.xlu0
      %v1906 = vpop.trf.xlu0
      %v1907 = vpop.trf.xlu0
      %v1908 = vpop.trf.xlu0
      %1909 = vxpose.xlu0.c.b16.start [1/8] %v1890, 128
      %1910 = vxpose.xlu0.c.b16.cont [2/8] 0, 128
      %1911 = vxpose.xlu0.c.b16.cont [3/8] 0, 128
      %1912 = vxpose.xlu0.c.b16.cont [4/8] 0, 128
      %1913 = vxpose.xlu0.c.b16.cont [5/8] 0, 128
      %1914 = vxpose.xlu0.c.b16.cont [6/8] 0, 128
      %1915 = vxpose.xlu0.c.b16.cont [7/8] 0, 128
      %1916 = vxpose.xlu0.c.b16.end [8/8] 0, 128
      %v1917 = vpop.trf.xlu0
      %v1918 = vpop.trf.xlu0
      %v1919 = vpop.trf.xlu0
      %v1920 = vpop.trf.xlu0
      %v1921 = vpop.trf.xlu0
      %v1922 = vpop.trf.xlu0
      %v1923 = vpop.trf.xlu0
      %v1924 = vpop.trf.xlu0
      %vm1925 = vcmask 130048
      %v1927 = vsel %vm1925, %v1901, 0
      %v1930 = vsel %vm1925, %v1902, 0
      %v1933 = vsel %vm1925, %v1903, 0
      %v1936 = vsel %vm1925, %v1904, 0
      %v1939 = vsel %vm1925, %v1905, 0
      %v1942 = vsel %vm1925, %v1906, 0
      %v1945 = vsel %vm1925, %v1907, 0
      %v1948 = vsel %vm1925, %v1908, 0
      %v1951 = vsel %vm1925, %v1917, 0
      %v1954 = vsel %vm1925, %v1918, 0
      %v1957 = vsel %vm1925, %v1919, 0
      %v1960 = vsel %vm1925, %v1920, 0
      %v1963 = vsel %vm1925, %v1921, 0
      %v1966 = vsel %vm1925, %v1922, 0
      %v1969 = vsel %vm1925, %v1923, 0
      %v1972 = vsel %vm1925, %v1924, 0
      %1974 = vmatprep.subr.bf16.mxu0 %v1888
      %1975 = vmatpush1.bf16.msra.mxu0 %v1887
      %1976 = vmatprep.subr.bf16.mxu0 0
      %1977 = vmatpush1.bf16.msra.mxu0 0
      %1978 = vmatprep.subr.bf16.mxu0 0
      %1979 = vmatpush1.bf16.msra.mxu0 0
      %1980 = vmatprep.subr.bf16.mxu0 0
      %1981 = vmatpush1.bf16.msra.mxu0 0
      %1982 = vmatprep.subr.bf16.mxu0 0
      %1983 = vmatpush1.bf16.msra.mxu0 0
      %1984 = vmatprep.subr.bf16.mxu0 0
      %1985 = vmatpush1.bf16.msra.mxu0 0
      %1986 = vmatprep.subr.bf16.mxu0 0
      %1987 = vmatpush1.bf16.msra.mxu0 0
      %1988 = vmatprep.subr.bf16.mxu0 0
      %1989 = vmatpush1.bf16.msra.mxu0 0
      %1990 = vmatprep.subr.bf16.mxu0 0
      %1991 = vmatpush1.bf16.msra.mxu0 0
      %1992 = vmatprep.subr.bf16.mxu0 0
      %1993 = vmatpush1.bf16.msra.mxu0 0
      %1994 = vmatprep.subr.bf16.mxu0 0
      %1995 = vmatpush1.bf16.msra.mxu0 0
      %1996 = vmatprep.subr.bf16.mxu0 0
      %1997 = vmatpush1.bf16.msra.mxu0 0
      %1998 = vmatprep.subr.bf16.mxu0 0
      %1999 = vmatpush1.bf16.msra.mxu0 0
      %2000 = vmatprep.subr.bf16.mxu0 0
      %2001 = vmatpush1.bf16.msra.mxu0 0
      %2002 = vmatprep.subr.bf16.mxu0 0
      %2003 = vmatpush1.bf16.msra.mxu0 0
      %2004 = vmatprep.subr.bf16.mxu0 0
      %2005 = vmatpush1.bf16.msra.mxu0 0
      %2006 = vmatprep.mubr.bf16.mxu0 0
      %2007 = vmatmul.mubr.bf16.gmra.mrb[0].mxu0 %v1927
      %v2008 = vpop.f32.mrb[0].mxu0
      %v2009 = vadd.f32 0.0, %v2008
      %v2010 = vpop.f32.mrb[0].mxu0
      %v2011 = vadd.f32 0.0, %v2010
      %v2012 = vpop.f32.mrb[0].mxu0
      %v2013 = vadd.f32 0.0, %v2012
      %v2014 = vpop.f32.mrb[0].mxu0
      %v2015 = vadd.f32 0.0, %v2014
      %2016 = vmatprep.mubr.bf16.mxu0 0
      %2017 = vmatmul.mubr.bf16.gmra.mrb[0].mxu0 %v1930
      %v2018 = vpop.f32.mrb[0].mxu0
      %v2019 = vadd.f32 0.0, %v2018
      %v2020 = vpop.f32.mrb[0].mxu0
      %v2021 = vadd.f32 0.0, %v2020
      %v2022 = vpop.f32.mrb[0].mxu0
      %v2023 = vadd.f32 0.0, %v2022
      %v2024 = vpop.f32.mrb[0].mxu0
      %v2025 = vadd.f32 0.0, %v2024
      %2026 = vmatprep.mubr.bf16.mxu0 0
      %2027 = vmatmul.mubr.bf16.gmra.mrb[0].mxu0 %v1933
      %v2028 = vpop.f32.mrb[0].mxu0
      %v2029 = vadd.f32 0.0, %v2028
      %v2030 = vpop.f32.mrb[0].mxu0
      %v2031 = vadd.f32 0.0, %v2030
      %v2032 = vpop.f32.mrb[0].mxu0
      %v2033 = vadd.f32 0.0, %v2032
      %v2034 = vpop.f32.mrb[0].mxu0
      %v2035 = vadd.f32 0.0, %v2034
      %2036 = vmatprep.mubr.bf16.mxu0 0
      %2037 = vmatmul.mubr.bf16.gmra.mrb[0].mxu0 %v1936
      %v2038 = vpop.f32.mrb[0].mxu0
      %v2039 = vadd.f32 0.0, %v2038
      %v2040 = vpop.f32.mrb[0].mxu0
      %v2041 = vadd.f32 0.0, %v2040
      %v2042 = vpop.f32.mrb[0].mxu0
      %v2043 = vadd.f32 0.0, %v2042
      %v2044 = vpop.f32.mrb[0].mxu0
      %v2045 = vadd.f32 0.0, %v2044
      %2046 = vmatprep.mubr.bf16.mxu0 0
      %2047 = vmatmul.mubr.bf16.gmra.mrb[0].mxu0 %v1939
      %v2048 = vpop.f32.mrb[0].mxu0
      %v2049 = vadd.f32 0.0, %v2048
      %v2050 = vpop.f32.mrb[0].mxu0
      %v2051 = vadd.f32 0.0, %v2050
      %v2052 = vpop.f32.mrb[0].mxu0
      %v2053 = vadd.f32 0.0, %v2052
      %v2054 = vpop.f32.mrb[0].mxu0
      %v2055 = vadd.f32 0.0, %v2054
      %2056 = vmatprep.mubr.bf16.mxu0 0
      %2057 = vmatmul.mubr.bf16.gmra.mrb[0].mxu0 %v1942
      %v2058 = vpop.f32.mrb[0].mxu0
      %v2059 = vadd.f32 0.0, %v2058
      %v2060 = vpop.f32.mrb[0].mxu0
      %v2061 = vadd.f32 0.0, %v2060
      %v2062 = vpop.f32.mrb[0].mxu0
      %v2063 = vadd.f32 0.0, %v2062
      %v2064 = vpop.f32.mrb[0].mxu0
      %v2065 = vadd.f32 0.0, %v2064
      %2066 = vmatprep.mubr.bf16.mxu0 0
      %2067 = vmatmul.mubr.bf16.gmra.mrb[0].mxu0 %v1945
      %v2068 = vpop.f32.mrb[0].mxu0
      %v2069 = vadd.f32 0.0, %v2068
      %v2070 = vpop.f32.mrb[0].mxu0
      %v2071 = vadd.f32 0.0, %v2070
      %v2072 = vpop.f32.mrb[0].mxu0
      %v2073 = vadd.f32 0.0, %v2072
      %v2074 = vpop.f32.mrb[0].mxu0
      %v2075 = vadd.f32 0.0, %v2074
      %2076 = vmatprep.mubr.bf16.mxu0 0
      %2077 = vmatmul.mubr.bf16.gmra.mrb[0].mxu0 %v1948
      %v2078 = vpop.f32.mrb[0].mxu0
      %v2079 = vadd.f32 0.0, %v2078
      %v2080 = vpop.f32.mrb[0].mxu0
      %v2081 = vadd.f32 0.0, %v2080
      %v2082 = vpop.f32.mrb[0].mxu0
      %v2083 = vadd.f32 0.0, %v2082
      %v2084 = vpop.f32.mrb[0].mxu0
      %v2085 = vadd.f32 0.0, %v2084
      %2086 = vmatprep.mubr.bf16.mxu0 0
      %2087 = vmatmul.mubr.bf16.gmra.mrb[0].mxu0 %v1951
      %v2088 = vpop.f32.mrb[0].mxu0
      %v2089 = vadd.f32 0.0, %v2088
      %v2090 = vpop.f32.mrb[0].mxu0
      %v2091 = vadd.f32 0.0, %v2090
      %v2092 = vpop.f32.mrb[0].mxu0
      %v2093 = vadd.f32 0.0, %v2092
      %v2094 = vpop.f32.mrb[0].mxu0
      %v2095 = vadd.f32 0.0, %v2094
      %2096 = vmatprep.mubr.bf16.mxu0 0
      %2097 = vmatmul.mubr.bf16.gmra.mrb[0].mxu0 %v1954
      %v2098 = vpop.f32.mrb[0].mxu0
      %v2099 = vadd.f32 0.0, %v2098
      %v2100 = vpop.f32.mrb[0].mxu0
      %v2101 = vadd.f32 0.0, %v2100
      %v2102 = vpop.f32.mrb[0].mxu0
      %v2103 = vadd.f32 0.0, %v2102
      %v2104 = vpop.f32.mrb[0].mxu0
      %v2105 = vadd.f32 0.0, %v2104
      %2106 = vmatprep.mubr.bf16.mxu0 0
      %2107 = vmatmul.mubr.bf16.gmra.mrb[0].mxu0 %v1957
      %v2108 = vpop.f32.mrb[0].mxu0
      %v2109 = vadd.f32 0.0, %v2108
      %v2110 = vpop.f32.mrb[0].mxu0
      %v2111 = vadd.f32 0.0, %v2110
      %v2112 = vpop.f32.mrb[0].mxu0
      %v2113 = vadd.f32 0.0, %v2112
      %v2114 = vpop.f32.mrb[0].mxu0
      %v2115 = vadd.f32 0.0, %v2114
      %2116 = vmatprep.mubr.bf16.mxu0 0
      %2117 = vmatmul.mubr.bf16.gmra.mrb[0].mxu0 %v1960
      %v2118 = vpop.f32.mrb[0].mxu0
      %v2119 = vadd.f32 0.0, %v2118
      %v2120 = vpop.f32.mrb[0].mxu0
      %v2121 = vadd.f32 0.0, %v2120
      %v2122 = vpop.f32.mrb[0].mxu0
      %v2123 = vadd.f32 0.0, %v2122
      %v2124 = vpop.f32.mrb[0].mxu0
      %v2125 = vadd.f32 0.0, %v2124
      %2126 = vmatprep.mubr.bf16.mxu0 0
      %2127 = vmatmul.mubr.bf16.gmra.mrb[0].mxu0 %v1963
      %v2128 = vpop.f32.mrb[0].mxu0
      %v2129 = vadd.f32 0.0, %v2128
      %v2130 = vpop.f32.mrb[0].mxu0
      %v2131 = vadd.f32 0.0, %v2130
      %v2132 = vpop.f32.mrb[0].mxu0
      %v2133 = vadd.f32 0.0, %v2132
      %v2134 = vpop.f32.mrb[0].mxu0
      %v2135 = vadd.f32 0.0, %v2134
      %2136 = vmatprep.mubr.bf16.mxu0 0
      %2137 = vmatmul.mubr.bf16.gmra.mrb[0].mxu0 %v1966
      %v2138 = vpop.f32.mrb[0].mxu0
      %v2139 = vadd.f32 0.0, %v2138
      %v2140 = vpop.f32.mrb[0].mxu0
      %v2141 = vadd.f32 0.0, %v2140
      %v2142 = vpop.f32.mrb[0].mxu0
      %v2143 = vadd.f32 0.0, %v2142
      %v2144 = vpop.f32.mrb[0].mxu0
      %v2145 = vadd.f32 0.0, %v2144
      %2146 = vmatprep.mubr.bf16.mxu0 0
      %2147 = vmatmul.mubr.bf16.gmra.mrb[0].mxu0 %v1969
      %v2148 = vpop.f32.mrb[0].mxu0
      %v2149 = vadd.f32 0.0, %v2148
      %v2150 = vpop.f32.mrb[0].mxu0
      %v2151 = vadd.f32 0.0, %v2150
      %v2152 = vpop.f32.mrb[0].mxu0
      %v2153 = vadd.f32 0.0, %v2152
      %v2154 = vpop.f32.mrb[0].mxu0
      %v2155 = vadd.f32 0.0, %v2154
      %2156 = vmatprep.mubr.bf16.mxu0 0
      %2157 = vmatmul.mubr.bf16.gmra.mrb[0].mxu0 %v1972
      %v2158 = vpop.f32.mrb[0].mxu0
      %v2159 = vadd.f32 0.0, %v2158
      %v2160 = vpop.f32.mrb[0].mxu0
      %v2161 = vadd.f32 0.0, %v2160
      %v2162 = vpop.f32.mrb[0].mxu0
      %v2163 = vadd.f32 0.0, %v2162
      %v2164 = vpop.f32.mrb[0].mxu0
      %v2165 = vadd.f32 0.0, %v2164
      %2166 = vdwg.mxu0
      %v2167 = vmax.f32 %v2009, %v2019
      %v2168 = vmax.f32 %v2013, %v2023
      %v2169 = vmax.f32 %v2167, %v2029
      %v2170 = vmax.f32 %v2168, %v2033
      %v2171 = vmax.f32 %v2169, %v2039
      %v2172 = vmax.f32 %v2170, %v2043
      %v2173 = vmax.f32 %v2171, %v2049
      %v2174 = vmax.f32 %v2172, %v2053
      %v2175 = vmax.f32 %v2173, %v2059
      %v2176 = vmax.f32 %v2174, %v2063
      %v2177 = vmax.f32 %v2175, %v2069
      %v2178 = vmax.f32 %v2176, %v2073
      %v2179 = vmax.f32 %v2177, %v2079
      %v2180 = vmax.f32 %v2178, %v2083
      %v2181 = vmax.f32 %v2179, %v2089
      %v2182 = vmax.f32 %v2180, %v2093
      %v2183 = vmax.f32 %v2181, %v2099
      %v2184 = vmax.f32 %v2182, %v2103
      %v2185 = vmax.f32 %v2183, %v2109
      %v2186 = vmax.f32 %v2184, %v2113
      %v2187 = vmax.f32 %v2185, %v2119
      %v2188 = vmax.f32 %v2186, %v2123
      %v2189 = vmax.f32 %v2187, %v2129
      %v2190 = vmax.f32 %v2188, %v2133
      %v2191 = vmax.f32 %v2189, %v2139
      %v2192 = vmax.f32 %v2190, %v2143
      %v2193 = vmax.f32 %v2191, %v2149
      %v2194 = vmax.f32 %v2192, %v2153
      %v2195 = vmax.f32 %v2193, %v2159
      %v2196 = vmax.f32 %v2194, %v2163
      %v2197 = vmax.f32 %v2195, %v2196
      %v2198 = vrot.slane %v2197, 4
      %v2199 = vmax.f32 %v2197, %v2198
      %v2200 = vrot.slane %v2199, 2
      %v2201 = vmax.f32 %v2199, %v2200
      %v2202 = vrot.slane %v2201, 1
      %v2203 = vmax.f32 %v2201, %v2202
      %v2204 = vmax.f32 %v2011, %v2021
      %v2205 = vmax.f32 %v2015, %v2025
      %v2206 = vmax.f32 %v2204, %v2031
      %v2207 = vmax.f32 %v2205, %v2035
      %v2208 = vmax.f32 %v2206, %v2041
      %v2209 = vmax.f32 %v2207, %v2045
      %v2210 = vmax.f32 %v2208, %v2051
      %v2211 = vmax.f32 %v2209, %v2055
      %v2212 = vmax.f32 %v2210, %v2061
      %v2213 = vmax.f32 %v2211, %v2065
      %v2214 = vmax.f32 %v2212, %v2071
      %v2215 = vmax.f32 %v2213, %v2075
      %v2216 = vmax.f32 %v2214, %v2081
      %v2217 = vmax.f32 %v2215, %v2085
      %v2218 = vmax.f32 %v2216, %v2091
      %v2219 = vmax.f32 %v2217, %v2095
      %v2220 = vmax.f32 %v2218, %v2101
      %v2221 = vmax.f32 %v2219, %v2105
      %v2222 = vmax.f32 %v2220, %v2111
      %v2223 = vmax.f32 %v2221, %v2115
      %v2224 = vmax.f32 %v2222, %v2121
      %v2225 = vmax.f32 %v2223, %v2125
      %v2226 = vmax.f32 %v2224, %v2131
      %v2227 = vmax.f32 %v2225, %v2135
      %v2228 = vmax.f32 %v2226, %v2141
      %v2229 = vmax.f32 %v2227, %v2145
      %v2230 = vmax.f32 %v2228, %v2151
      %v2231 = vmax.f32 %v2229, %v2155
      %v2232 = vmax.f32 %v2230, %v2161
      %v2233 = vmax.f32 %v2231, %v2165
      %v2234 = vmax.f32 %v2232, %v2233
      %v2235 = vrot.slane %v2234, 4
      %v2236 = vmax.f32 %v2234, %v2235
      %v2237 = vrot.slane %v2236, 2
      %v2238 = vmax.f32 %v2236, %v2237
      %v2239 = vrot.slane %v2238, 1
      %v2240 = vmax.f32 %v2238, %v2239
      %v2241 = vsub.f32 %v2009, %v2203
      %v2242 = vsub.f32 %v2011, %v2240
      %v2243 = vsub.f32 %v2013, %v2203
      %v2244 = vsub.f32 %v2015, %v2240
      %v2245 = vsub.f32 %v2019, %v2203
      %v2246 = vsub.f32 %v2021, %v2240
      %v2247 = vsub.f32 %v2023, %v2203
      %v2248 = vsub.f32 %v2025, %v2240
      %v2249 = vsub.f32 %v2029, %v2203
      %v2250 = vsub.f32 %v2031, %v2240
      %v2251 = vsub.f32 %v2033, %v2203
      %v2252 = vsub.f32 %v2035, %v2240
      %v2253 = vsub.f32 %v2039, %v2203
      %v2254 = vsub.f32 %v2041, %v2240
      %v2255 = vsub.f32 %v2043, %v2203
      %v2256 = vsub.f32 %v2045, %v2240
      %v2257 = vsub.f32 %v2049, %v2203
      %v2258 = vsub.f32 %v2051, %v2240
      %v2259 = vsub.f32 %v2053, %v2203
      %v2260 = vsub.f32 %v2055, %v2240
      %v2261 = vsub.f32 %v2059, %v2203
      %v2262 = vsub.f32 %v2061, %v2240
      %v2263 = vsub.f32 %v2063, %v2203
      %v2264 = vsub.f32 %v2065, %v2240
      %v2265 = vsub.f32 %v2069, %v2203
      %v2266 = vsub.f32 %v2071, %v2240
      %v2267 = vsub.f32 %v2073, %v2203
      %v2268 = vsub.f32 %v2075, %v2240
      %v2269 = vsub.f32 %v2079, %v2203
      %v2270 = vsub.f32 %v2081, %v2240
      %v2271 = vsub.f32 %v2083, %v2203
      %v2272 = vsub.f32 %v2085, %v2240
      %v2273 = vsub.f32 %v2089, %v2203
      %v2274 = vsub.f32 %v2091, %v2240
      %v2275 = vsub.f32 %v2093, %v2203
      %v2276 = vsub.f32 %v2095, %v2240
      %v2277 = vsub.f32 %v2099, %v2203
      %v2278 = vsub.f32 %v2101, %v2240
      %v2279 = vsub.f32 %v2103, %v2203
      %v2280 = vsub.f32 %v2105, %v2240
      %v2281 = vsub.f32 %v2109, %v2203
      %v2282 = vsub.f32 %v2111, %v2240
      %v2283 = vsub.f32 %v2113, %v2203
      %v2284 = vsub.f32 %v2115, %v2240
      %v2285 = vsub.f32 %v2119, %v2203
      %v2286 = vsub.f32 %v2121, %v2240
      %v2287 = vsub.f32 %v2123, %v2203
      %v2288 = vsub.f32 %v2125, %v2240
      %v2289 = vsub.f32 %v2129, %v2203
      %v2290 = vsub.f32 %v2131, %v2240
      %v2291 = vsub.f32 %v2133, %v2203
      %v2292 = vsub.f32 %v2135, %v2240
      %v2293 = vsub.f32 %v2139, %v2203
      %v2294 = vsub.f32 %v2141, %v2240
      %v2295 = vsub.f32 %v2143, %v2203
      %v2296 = vsub.f32 %v2145, %v2240
      %v2297 = vsub.f32 %v2149, %v2203
      %v2298 = vsub.f32 %v2151, %v2240
      %v2299 = vsub.f32 %v2153, %v2203
      %v2300 = vsub.f32 %v2155, %v2240
      %v2301 = vsub.f32 %v2159, %v2203
      %v2302 = vsub.f32 %v2161, %v2240
      %v2303 = vsub.f32 %v2163, %v2203
      %v2304 = vsub.f32 %v2165, %v2240
      %v2305 = vmul.f32 %v2241, 1.442695
      %v2306 = vpow.pop %v2305
      %v2307 = vmul.f32 %v2242, 1.442695
      %v2308 = vpow.pop %v2307
      %v2309 = vmul.f32 %v2243, 1.442695
      %v2310 = vpow.pop %v2309
      %v2311 = vmul.f32 %v2244, 1.442695
      %v2312 = vpow.pop %v2311
      %v2313 = vmul.f32 %v2245, 1.442695
      %v2314 = vpow.pop %v2313
      %v2315 = vmul.f32 %v2246, 1.442695
      %v2316 = vpow.pop %v2315
      %v2317 = vmul.f32 %v2247, 1.442695
      %v2318 = vpow.pop %v2317
      %v2319 = vmul.f32 %v2248, 1.442695
      %v2320 = vpow.pop %v2319
      %v2321 = vmul.f32 %v2249, 1.442695
      %v2322 = vpow.pop %v2321
      %v2323 = vmul.f32 %v2250, 1.442695
      %v2324 = vpow.pop %v2323
      %v2325 = vmul.f32 %v2251, 1.442695
      %v2326 = vpow.pop %v2325
      %v2327 = vmul.f32 %v2252, 1.442695
      %v2328 = vpow.pop %v2327
      %v2329 = vmul.f32 %v2253, 1.442695
      %v2330 = vpow.pop %v2329
      %v2331 = vmul.f32 %v2254, 1.442695
      %v2332 = vpow.pop %v2331
      %v2333 = vmul.f32 %v2255, 1.442695
      %v2334 = vpow.pop %v2333
      %v2335 = vmul.f32 %v2256, 1.442695
      %v2336 = vpow.pop %v2335
      %v2337 = vmul.f32 %v2257, 1.442695
      %v2338 = vpow.pop %v2337
      %v2339 = vmul.f32 %v2258, 1.442695
      %v2340 = vpow.pop %v2339
      %v2341 = vmul.f32 %v2259, 1.442695
      %v2342 = vpow.pop %v2341
      %v2343 = vmul.f32 %v2260, 1.442695
      %v2344 = vpow.pop %v2343
      %v2345 = vmul.f32 %v2261, 1.442695
      %v2346 = vpow.pop %v2345
      %v2347 = vmul.f32 %v2262, 1.442695
      %v2348 = vpow.pop %v2347
      %v2349 = vmul.f32 %v2263, 1.442695
      %v2350 = vpow.pop %v2349
      %v2351 = vmul.f32 %v2264, 1.442695
      %v2352 = vpow.pop %v2351
      %v2353 = vmul.f32 %v2265, 1.442695
      %v2354 = vpow.pop %v2353
      %v2355 = vmul.f32 %v2266, 1.442695
      %v2356 = vpow.pop %v2355
      %v2357 = vmul.f32 %v2267, 1.442695
      %v2358 = vpow.pop %v2357
      %v2359 = vmul.f32 %v2268, 1.442695
      %v2360 = vpow.pop %v2359
      %v2361 = vmul.f32 %v2269, 1.442695
      %v2362 = vpow.pop %v2361
      %v2363 = vmul.f32 %v2270, 1.442695
      %v2364 = vpow.pop %v2363
      %v2365 = vmul.f32 %v2271, 1.442695
      %v2366 = vpow.pop %v2365
      %v2367 = vmul.f32 %v2272, 1.442695
      %v2368 = vpow.pop %v2367
      %v2369 = vmul.f32 %v2273, 1.442695
      %v2370 = vpow.pop %v2369
      %v2371 = vmul.f32 %v2274, 1.442695
      %v2372 = vpow.pop %v2371
      %v2373 = vmul.f32 %v2275, 1.442695
      %v2374 = vpow.pop %v2373
      %v2375 = vmul.f32 %v2276, 1.442695
      %v2376 = vpow.pop %v2375
      %v2377 = vmul.f32 %v2277, 1.442695
      %v2378 = vpow.pop %v2377
      %v2379 = vmul.f32 %v2278, 1.442695
      %v2380 = vpow.pop %v2379
      %v2381 = vmul.f32 %v2279, 1.442695
      %v2382 = vpow.pop %v2381
      %v2383 = vmul.f32 %v2280, 1.442695
      %v2384 = vpow.pop %v2383
      %v2385 = vmul.f32 %v2281, 1.442695
      %v2386 = vpow.pop %v2385
      %v2387 = vmul.f32 %v2282, 1.442695
      %v2388 = vpow.pop %v2387
      %v2389 = vmul.f32 %v2283, 1.442695
      %v2390 = vpow.pop %v2389
      %v2391 = vmul.f32 %v2284, 1.442695
      %v2392 = vpow.pop %v2391
      %v2393 = vmul.f32 %v2285, 1.442695
      %v2394 = vpow.pop %v2393
      %v2395 = vmul.f32 %v2286, 1.442695
      %v2396 = vpow.pop %v2395
      %v2397 = vmul.f32 %v2287, 1.442695
      %v2398 = vpow.pop %v2397
      %v2399 = vmul.f32 %v2288, 1.442695
      %v2400 = vpow.pop %v2399
      %v2401 = vmul.f32 %v2289, 1.442695
      %v2402 = vpow.pop %v2401
      %v2403 = vmul.f32 %v2290, 1.442695
      %v2404 = vpow.pop %v2403
      %v2405 = vmul.f32 %v2291, 1.442695
      %v2406 = vpow.pop %v2405
      %v2407 = vmul.f32 %v2292, 1.442695
      %v2408 = vpow.pop %v2407
      %v2409 = vmul.f32 %v2293, 1.442695
      %v2410 = vpow.pop %v2409
      %v2411 = vmul.f32 %v2294, 1.442695
      %v2412 = vpow.pop %v2411
      %v2413 = vmul.f32 %v2295, 1.442695
      %v2414 = vpow.pop %v2413
      %v2415 = vmul.f32 %v2296, 1.442695
      %v2416 = vpow.pop %v2415
      %v2417 = vmul.f32 %v2297, 1.442695
      %v2418 = vpow.pop %v2417
      %v2419 = vmul.f32 %v2298, 1.442695
      %v2420 = vpow.pop %v2419
      %v2421 = vmul.f32 %v2299, 1.442695
      %v2422 = vpow.pop %v2421
      %v2423 = vmul.f32 %v2300, 1.442695
      %v2424 = vpow.pop %v2423
      %v2425 = vmul.f32 %v2301, 1.442695
      %v2426 = vpow.pop %v2425
      %v2427 = vmul.f32 %v2302, 1.442695
      %v2428 = vpow.pop %v2427
      %v2429 = vmul.f32 %v2303, 1.442695
      %v2430 = vpow.pop %v2429
      %v2431 = vmul.f32 %v2304, 1.442695
      %v2432 = vpow.pop %v2431
      %v2433 = vadd.f32 %v2306, %v2310
      %v2434 = vadd.f32 %v2433, %v2314
      %v2435 = vadd.f32 %v2434, %v2318
      %v2436 = vadd.f32 %v2435, %v2322
      %v2437 = vadd.f32 %v2436, %v2326
      %v2438 = vadd.f32 %v2437, %v2330
      %v2439 = vadd.f32 %v2438, %v2334
      %v2440 = vadd.f32 %v2439, %v2338
      %v2441 = vadd.f32 %v2440, %v2342
      %v2442 = vadd.f32 %v2441, %v2346
      %v2443 = vadd.f32 %v2442, %v2350
      %v2444 = vadd.f32 %v2443, %v2354
      %v2445 = vadd.f32 %v2444, %v2358
      %v2446 = vadd.f32 %v2445, %v2362
      %v2447 = vadd.f32 %v2446, %v2366
      %v2448 = vadd.f32 %v2447, %v2370
      %v2449 = vadd.f32 %v2448, %v2374
      %v2450 = vadd.f32 %v2449, %v2378
      %v2451 = vadd.f32 %v2450, %v2382
      %v2452 = vadd.f32 %v2451, %v2386
      %v2453 = vadd.f32 %v2452, %v2390
      %v2454 = vadd.f32 %v2453, %v2394
      %v2455 = vadd.f32 %v2454, %v2398
      %v2456 = vadd.f32 %v2455, %v2402
      %v2457 = vadd.f32 %v2456, %v2406
      %v2458 = vadd.f32 %v2457, %v2410
      %v2459 = vadd.f32 %v2458, %v2414
      %v2460 = vadd.f32 %v2459, %v2418
      %v2461 = vadd.f32 %v2460, %v2422
      %v2462 = vadd.f32 %v2461, %v2426
      %v2463 = vadd.f32 %v2462, %v2430
      %v2464 = vrot.slane %v2463, 4
      %v2465 = vadd.f32 %v2463, %v2464
      %v2466 = vrot.slane %v2465, 2
      %v2467 = vadd.f32 %v2465, %v2466
      %v2468 = vrot.slane %v2467, 1
      %v2469 = vadd.f32 %v2467, %v2468
      %v2470 = vadd.f32 %v2308, %v2312
      %v2471 = vadd.f32 %v2470, %v2316
      %v2472 = vadd.f32 %v2471, %v2320
      %v2473 = vadd.f32 %v2472, %v2324
      %v2474 = vadd.f32 %v2473, %v2328
      %v2475 = vadd.f32 %v2474, %v2332
      %v2476 = vadd.f32 %v2475, %v2336
      %v2477 = vadd.f32 %v2476, %v2340
      %v2478 = vadd.f32 %v2477, %v2344
      %v2479 = vadd.f32 %v2478, %v2348
      %v2480 = vadd.f32 %v2479, %v2352
      %v2481 = vadd.f32 %v2480, %v2356
      %v2482 = vadd.f32 %v2481, %v2360
      %v2483 = vadd.f32 %v2482, %v2364
      %v2484 = vadd.f32 %v2483, %v2368
      %v2485 = vadd.f32 %v2484, %v2372
      %v2486 = vadd.f32 %v2485, %v2376
      %v2487 = vadd.f32 %v2486, %v2380
      %v2488 = vadd.f32 %v2487, %v2384
      %v2489 = vadd.f32 %v2488, %v2388
      %v2490 = vadd.f32 %v2489, %v2392
      %v2491 = vadd.f32 %v2490, %v2396
      %v2492 = vadd.f32 %v2491, %v2400
      %v2493 = vadd.f32 %v2492, %v2404
      %v2494 = vadd.f32 %v2493, %v2408
      %v2495 = vadd.f32 %v2494, %v2412
      %v2496 = vadd.f32 %v2495, %v2416
      %v2497 = vadd.f32 %v2496, %v2420
      %v2498 = vadd.f32 %v2497, %v2424
      %v2499 = vadd.f32 %v2498, %v2428
      %v2500 = vadd.f32 %v2499, %v2432
      %v2501 = vrot.slane %v2500, 4
      %v2502 = vadd.f32 %v2500, %v2501
      %v2503 = vrot.slane %v2502, 2
      %v2504 = vadd.f32 %v2502, %v2503
      %v2505 = vrot.slane %v2504, 1
      %v2506 = vadd.f32 %v2504, %v2505
      %v2507 = vpack.c.bf16 %v2310, %v2306
      %v2508 = vpack.c.bf16 %v2312, %v2308
      %v2509 = vpack.c.bf16 %v2318, %v2314
      %v2510 = vpack.c.bf16 %v2320, %v2316
      %v2511 = vpack.c.bf16 %v2326, %v2322
      %v2512 = vpack.c.bf16 %v2328, %v2324
      %v2513 = vpack.c.bf16 %v2334, %v2330
      %v2514 = vpack.c.bf16 %v2336, %v2332
      %v2515 = vpack.c.bf16 %v2342, %v2338
      %v2516 = vpack.c.bf16 %v2344, %v2340
      %v2517 = vpack.c.bf16 %v2350, %v2346
      %v2518 = vpack.c.bf16 %v2352, %v2348
      %v2519 = vpack.c.bf16 %v2358, %v2354
      %v2520 = vpack.c.bf16 %v2360, %v2356
      %v2521 = vpack.c.bf16 %v2366, %v2362
      %v2522 = vpack.c.bf16 %v2368, %v2364
      %v2523 = vpack.c.bf16 %v2374, %v2370
      %v2524 = vpack.c.bf16 %v2376, %v2372
      %v2525 = vpack.c.bf16 %v2382, %v2378
      %v2526 = vpack.c.bf16 %v2384, %v2380
      %v2527 = vpack.c.bf16 %v2390, %v2386
      %v2528 = vpack.c.bf16 %v2392, %v2388
      %v2529 = vpack.c.bf16 %v2398, %v2394
      %v2530 = vpack.c.bf16 %v2400, %v2396
      %v2531 = vpack.c.bf16 %v2406, %v2402
      %v2532 = vpack.c.bf16 %v2408, %v2404
      %v2533 = vpack.c.bf16 %v2414, %v2410
      %v2534 = vpack.c.bf16 %v2416, %v2412
      %v2535 = vpack.c.bf16 %v2422, %v2418
      %v2536 = vpack.c.bf16 %v2424, %v2420
      %v2537 = vpack.c.bf16 %v2430, %v2426
      %v2538 = vpack.c.bf16 %v2432, %v2428
      %2539 = vmatprep.subr.bf16.mxu0 %v2508
      %2540 = vmatpush1.bf16.msra.mxu0 %v2507
      %2541 = vmatprep.subr.bf16.mxu0 %v2510
      %2542 = vmatpush1.bf16.msra.mxu0 %v2509
      %2543 = vmatprep.subr.bf16.mxu0 %v2512
      %2544 = vmatpush1.bf16.msra.mxu0 %v2511
      %2545 = vmatprep.subr.bf16.mxu0 %v2514
      %2546 = vmatpush1.bf16.msra.mxu0 %v2513
      %2547 = vmatprep.subr.bf16.mxu0 %v2516
      %2548 = vmatpush1.bf16.msra.mxu0 %v2515
      %2549 = vmatprep.subr.bf16.mxu0 %v2518
      %2550 = vmatpush1.bf16.msra.mxu0 %v2517
      %2551 = vmatprep.subr.bf16.mxu0 %v2520
      %2552 = vmatpush1.bf16.msra.mxu0 %v2519
      %2553 = vmatprep.subr.bf16.mxu0 %v2522
      %2554 = vmatpush1.bf16.msra.mxu0 %v2521
      %2555 = vmatprep.subr.bf16.mxu0 %v2524
      %2556 = vmatpush1.bf16.msra.mxu0 %v2523
      %2557 = vmatprep.subr.bf16.mxu0 %v2526
      %2558 = vmatpush1.bf16.msra.mxu0 %v2525
      %2559 = vmatprep.subr.bf16.mxu0 %v2528
      %2560 = vmatpush1.bf16.msra.mxu0 %v2527
      %2561 = vmatprep.subr.bf16.mxu0 %v2530
      %2562 = vmatpush1.bf16.msra.mxu0 %v2529
      %2563 = vmatprep.subr.bf16.mxu0 %v2532
      %2564 = vmatpush1.bf16.msra.mxu0 %v2531
      %2565 = vmatprep.subr.bf16.mxu0 %v2534
      %2566 = vmatpush1.bf16.msra.mxu0 %v2533
      %2567 = vmatprep.subr.bf16.mxu0 %v2536
      %2568 = vmatpush1.bf16.msra.mxu0 %v2535
      %2569 = vmatprep.subr.bf16.mxu0 %v2538
      %2570 = vmatpush1.bf16.msra.mxu0 %v2537
      %2571 = vmatprep.mubr.bf16.mxu0 %v1892
      %2572 = vmatmul.mubr.bf16.gmra.mrb[0].mxu0 %v1891
      %v2573 = vpop.f32.mrb[0].mxu0
      %v2574 = vadd.f32 0.0, %v2573
      %v2575 = vpop.f32.mrb[0].mxu0
      %v2576 = vadd.f32 0.0, %v2575
      %v2577 = vpop.f32.mrb[0].mxu0
      %v2578 = vadd.f32 0.0, %v2577
      %v2579 = vpop.f32.mrb[0].mxu0
      %v2580 = vadd.f32 0.0, %v2579
      %2581 = vdwg.mxu0
      %v2582 = vrcp.pop %v2469
      %v2583 = vrcp.pop %v2506
      %v2584 = vmul.f32 %v2574, %v2582
      %v2585 = vmul.f32 %v2576, %v2583
      %v2586 = vmul.f32 %v2578, %v2582
      %v2587 = vmul.f32 %v2580, %v2583
      %v2588 = vpack.c.bf16 %v2586, %v2584
      %v2589 = vpack.c.bf16 %v2587, %v2585
      %2590 = vst [vmem:[#allocation3] sm:$0xff] %v2588
      %2591 = vst [vmem:[#allocation3 + $0x8] sm:$0xff] %v2589
      %v2592 = vld [vmem:[#allocation2 + $0x30] sm:$0xff]
      %v2593 = vld [vmem:[#allocation2 + $0x38] sm:$0xff]
      %v2594 = vld [vmem:[#allocation2 + $0x40] sm:$0xff]
      %v2595 = vld [vmem:[#allocation2 + $0x48] sm:$0xff]
      %v2596 = vld [vmem:[#allocation2 + $0x50] sm:$0xff]
      %v2597 = vld [vmem:[#allocation2 + $0x58] sm:$0xff]
      %2598 = vxpose.xlu0.c.b16.start [1/8] %v2594, 128
      %2599 = vxpose.xlu0.c.b16.cont [2/8] 0, 128
      %2600 = vxpose.xlu0.c.b16.cont [3/8] 0, 128
      %2601 = vxpose.xlu0.c.b16.cont [4/8] 0, 128
      %2602 = vxpose.xlu0.c.b16.cont [5/8] 0, 128
      %2603 = vxpose.xlu0.c.b16.cont [6/8] 0, 128
      %2604 = vxpose.xlu0.c.b16.cont [7/8] 0, 128
      %2605 = vxpose.xlu0.c.b16.end [8/8] 0, 128
      %v2606 = vpop.trf.xlu0
      %v2607 = vpop.trf.xlu0
      %v2608 = vpop.trf.xlu0
      %v2609 = vpop.trf.xlu0
      %v2610 = vpop.trf.xlu0
      %v2611 = vpop.trf.xlu0
      %v2612 = vpop.trf.xlu0
      %v2613 = vpop.trf.xlu0
      %2614 = vxpose.xlu0.c.b16.start [1/8] %v2595, 128
      %2615 = vxpose.xlu0.c.b16.cont [2/8] 0, 128
      %2616 = vxpose.xlu0.c.b16.cont [3/8] 0, 128
      %2617 = vxpose.xlu0.c.b16.cont [4/8] 0, 128
      %2618 = vxpose.xlu0.c.b16.cont [5/8] 0, 128
      %2619 = vxpose.xlu0.c.b16.cont [6/8] 0, 128
      %2620 = vxpose.xlu0.c.b16.cont [7/8] 0, 128
      %2621 = vxpose.xlu0.c.b16.end [8/8] 0, 128
      %v2622 = vpop.trf.xlu0
      %v2623 = vpop.trf.xlu0
      %v2624 = vpop.trf.xlu0
      %v2625 = vpop.trf.xlu0
      %v2626 = vpop.trf.xlu0
      %v2627 = vpop.trf.xlu0
      %v2628 = vpop.trf.xlu0
      %v2629 = vpop.trf.xlu0
      %v2631 = vsel %vm1925, %v2606, 0
      %v2634 = vsel %vm1925, %v2607, 0
      %v2637 = vsel %vm1925, %v2608, 0
      %v2640 = vsel %vm1925, %v2609, 0
      %v2643 = vsel %vm1925, %v2610, 0
      %v2646 = vsel %vm1925, %v2611, 0
      %v2649 = vsel %vm1925, %v2612, 0
      %v2652 = vsel %vm1925, %v2613, 0
      %v2655 = vsel %vm1925, %v2622, 0
      %v2658 = vsel %vm1925, %v2623, 0
      %v2661 = vsel %vm1925, %v2624, 0
      %v2664 = vsel %vm1925, %v2625, 0
      %v2667 = vsel %vm1925, %v2626, 0
      %v2670 = vsel %vm1925, %v2627, 0
      %v2673 = vsel %vm1925, %v2628, 0
      %v2676 = vsel %vm1925, %v2629, 0
      %2678 = vmatprep.subr.bf16.mxu0 %v2593
      %2679 = vmatpush1.bf16.msra.mxu0 %v2592
      %2680 = vmatprep.subr.bf16.mxu0 0
      %2681 = vmatpush1.bf16.msra.mxu0 0
      %2682 = vmatprep.subr.bf16.mxu0 0
      %2683 = vmatpush1.bf16.msra.mxu0 0
      %2684 = vmatprep.subr.bf16.mxu0 0
      %2685 = vmatpush1.bf16.msra.mxu0 0
      %2686 = vmatprep.subr.bf16.mxu0 0
      %2687 = vmatpush1.bf16.msra.mxu0 0
      %2688 = vmatprep.subr.bf16.mxu0 0
      %2689 = vmatpush1.bf16.msra.mxu0 0
      %2690 = vmatprep.subr.bf16.mxu0 0
      %2691 = vmatpush1.bf16.msra.mxu0 0
      %2692 = vmatprep.subr.bf16.mxu0 0
      %2693 = vmatpush1.bf16.msra.mxu0 0
      %2694 = vmatprep.subr.bf16.mxu0 0
      %2695 = vmatpush1.bf16.msra.mxu0 0
      %2696 = vmatprep.subr.bf16.mxu0 0
      %2697 = vmatpush1.bf16.msra.mxu0 0
      %2698 = vmatprep.subr.bf16.mxu0 0
      %2699 = vmatpush1.bf16.msra.mxu0 0
      %2700 = vmatprep.subr.bf16.mxu0 0
      %2701 = vmatpush1.bf16.msra.mxu0 0
      %2702 = vmatprep.subr.bf16.mxu0 0
      %2703 = vmatpush1.bf16.msra.mxu0 0
      %2704 = vmatprep.subr.bf16.mxu0 0
      %2705 = vmatpush1.bf16.msra.mxu0 0
      %2706 = vmatprep.subr.bf16.mxu0 0
      %2707 = vmatpush1.bf16.msra.mxu0 0
      %2708 = vmatprep.subr.bf16.mxu0 0
      %2709 = vmatpush1.bf16.msra.mxu0 0
      %2710 = vmatprep.mubr.bf16.mxu0 0
      %2711 = vmatmul.mubr.bf16.gmra.mrb[0].mxu0 %v2631
      %v2712 = vpop.f32.mrb[0].mxu0
      %v2713 = vadd.f32 0.0, %v2712
      %v2714 = vpop.f32.mrb[0].mxu0
      %v2715 = vadd.f32 0.0, %v2714
      %v2716 = vpop.f32.mrb[0].mxu0
      %v2717 = vadd.f32 0.0, %v2716
      %v2718 = vpop.f32.mrb[0].mxu0
      %v2719 = vadd.f32 0.0, %v2718
      %2720 = vmatprep.mubr.bf16.mxu0 0
      %2721 = vmatmul.mubr.bf16.gmra.mrb[0].mxu0 %v2634
      %v2722 = vpop.f32.mrb[0].mxu0
      %v2723 = vadd.f32 0.0, %v2722
      %v2724 = vpop.f32.mrb[0].mxu0
      %v2725 = vadd.f32 0.0, %v2724
      %v2726 = vpop.f32.mrb[0].mxu0
      %v2727 = vadd.f32 0.0, %v2726
      %v2728 = vpop.f32.mrb[0].mxu0
      %v2729 = vadd.f32 0.0, %v2728
      %2730 = vmatprep.mubr.bf16.mxu0 0
      %2731 = vmatmul.mubr.bf16.gmra.mrb[0].mxu0 %v2637
      %v2732 = vpop.f32.mrb[0].mxu0
      %v2733 = vadd.f32 0.0, %v2732
      %v2734 = vpop.f32.mrb[0].mxu0
      %v2735 = vadd.f32 0.0, %v2734
      %v2736 = vpop.f32.mrb[0].mxu0
      %v2737 = vadd.f32 0.0, %v2736
      %v2738 = vpop.f32.mrb[0].mxu0
      %v2739 = vadd.f32 0.0, %v2738
      %2740 = vmatprep.mubr.bf16.mxu0 0
      %2741 = vmatmul.mubr.bf16.gmra.mrb[0].mxu0 %v2640
      %v2742 = vpop.f32.mrb[0].mxu0
      %v2743 = vadd.f32 0.0, %v2742
      %v2744 = vpop.f32.mrb[0].mxu0
      %v2745 = vadd.f32 0.0, %v2744
      %v2746 = vpop.f32.mrb[0].mxu0
      %v2747 = vadd.f32 0.0, %v2746
      %v2748 = vpop.f32.mrb[0].mxu0
      %v2749 = vadd.f32 0.0, %v2748
      %2750 = vmatprep.mubr.bf16.mxu0 0
      %2751 = vmatmul.mubr.bf16.gmra.mrb[0].mxu0 %v2643
      %v2752 = vpop.f32.mrb[0].mxu0
      %v2753 = vadd.f32 0.0, %v2752
      %v2754 = vpop.f32.mrb[0].mxu0
      %v2755 = vadd.f32 0.0, %v2754
      %v2756 = vpop.f32.mrb[0].mxu0
      %v2757 = vadd.f32 0.0, %v2756
      %v2758 = vpop.f32.mrb[0].mxu0
      %v2759 = vadd.f32 0.0, %v2758
      %2760 = vmatprep.mubr.bf16.mxu0 0
      %2761 = vmatmul.mubr.bf16.gmra.mrb[0].mxu0 %v2646
      %v2762 = vpop.f32.mrb[0].mxu0
      %v2763 = vadd.f32 0.0, %v2762
      %v2764 = vpop.f32.mrb[0].mxu0
      %v2765 = vadd.f32 0.0, %v2764
      %v2766 = vpop.f32.mrb[0].mxu0
      %v2767 = vadd.f32 0.0, %v2766
      %v2768 = vpop.f32.mrb[0].mxu0
      %v2769 = vadd.f32 0.0, %v2768
      %2770 = vmatprep.mubr.bf16.mxu0 0
      %2771 = vmatmul.mubr.bf16.gmra.mrb[0].mxu0 %v2649
      %v2772 = vpop.f32.mrb[0].mxu0
      %v2773 = vadd.f32 0.0, %v2772
      %v2774 = vpop.f32.mrb[0].mxu0
      %v2775 = vadd.f32 0.0, %v2774
      %v2776 = vpop.f32.mrb[0].mxu0
      %v2777 = vadd.f32 0.0, %v2776
      %v2778 = vpop.f32.mrb[0].mxu0
      %v2779 = vadd.f32 0.0, %v2778
      %2780 = vmatprep.mubr.bf16.mxu0 0
      %2781 = vmatmul.mubr.bf16.gmra.mrb[0].mxu0 %v2652
      %v2782 = vpop.f32.mrb[0].mxu0
      %v2783 = vadd.f32 0.0, %v2782
      %v2784 = vpop.f32.mrb[0].mxu0
      %v2785 = vadd.f32 0.0, %v2784
      %v2786 = vpop.f32.mrb[0].mxu0
      %v2787 = vadd.f32 0.0, %v2786
      %v2788 = vpop.f32.mrb[0].mxu0
      %v2789 = vadd.f32 0.0, %v2788
      %2790 = vmatprep.mubr.bf16.mxu0 0
      %2791 = vmatmul.mubr.bf16.gmra.mrb[0].mxu0 %v2655
      %v2792 = vpop.f32.mrb[0].mxu0
      %v2793 = vadd.f32 0.0, %v2792
      %v2794 = vpop.f32.mrb[0].mxu0
      %v2795 = vadd.f32 0.0, %v2794
      %v2796 = vpop.f32.mrb[0].mxu0
      %v2797 = vadd.f32 0.0, %v2796
      %v2798 = vpop.f32.mrb[0].mxu0
      %v2799 = vadd.f32 0.0, %v2798
      %2800 = vmatprep.mubr.bf16.mxu0 0
      %2801 = vmatmul.mubr.bf16.gmra.mrb[0].mxu0 %v2658
      %v2802 = vpop.f32.mrb[0].mxu0
      %v2803 = vadd.f32 0.0, %v2802
      %v2804 = vpop.f32.mrb[0].mxu0
      %v2805 = vadd.f32 0.0, %v2804
      %v2806 = vpop.f32.mrb[0].mxu0
      %v2807 = vadd.f32 0.0, %v2806
      %v2808 = vpop.f32.mrb[0].mxu0
      %v2809 = vadd.f32 0.0, %v2808
      %2810 = vmatprep.mubr.bf16.mxu0 0
      %2811 = vmatmul.mubr.bf16.gmra.mrb[0].mxu0 %v2661
      %v2812 = vpop.f32.mrb[0].mxu0
      %v2813 = vadd.f32 0.0, %v2812
      %v2814 = vpop.f32.mrb[0].mxu0
      %v2815 = vadd.f32 0.0, %v2814
      %v2816 = vpop.f32.mrb[0].mxu0
      %v2817 = vadd.f32 0.0, %v2816
      %v2818 = vpop.f32.mrb[0].mxu0
      %v2819 = vadd.f32 0.0, %v2818
      %2820 = vmatprep.mubr.bf16.mxu0 0
      %2821 = vmatmul.mubr.bf16.gmra.mrb[0].mxu0 %v2664
      %v2822 = vpop.f32.mrb[0].mxu0
      %v2823 = vadd.f32 0.0, %v2822
      %v2824 = vpop.f32.mrb[0].mxu0
      %v2825 = vadd.f32 0.0, %v2824
      %v2826 = vpop.f32.mrb[0].mxu0
      %v2827 = vadd.f32 0.0, %v2826
      %v2828 = vpop.f32.mrb[0].mxu0
      %v2829 = vadd.f32 0.0, %v2828
      %2830 = vmatprep.mubr.bf16.mxu0 0
      %2831 = vmatmul.mubr.bf16.gmra.mrb[0].mxu0 %v2667
      %v2832 = vpop.f32.mrb[0].mxu0
      %v2833 = vadd.f32 0.0, %v2832
      %v2834 = vpop.f32.mrb[0].mxu0
      %v2835 = vadd.f32 0.0, %v2834
      %v2836 = vpop.f32.mrb[0].mxu0
      %v2837 = vadd.f32 0.0, %v2836
      %v2838 = vpop.f32.mrb[0].mxu0
      %v2839 = vadd.f32 0.0, %v2838
      %2840 = vmatprep.mubr.bf16.mxu0 0
      %2841 = vmatmul.mubr.bf16.gmra.mrb[0].mxu0 %v2670
      %v2842 = vpop.f32.mrb[0].mxu0
      %v2843 = vadd.f32 0.0, %v2842
      %v2844 = vpop.f32.mrb[0].mxu0
      %v2845 = vadd.f32 0.0, %v2844
      %v2846 = vpop.f32.mrb[0].mxu0
      %v2847 = vadd.f32 0.0, %v2846
      %v2848 = vpop.f32.mrb[0].mxu0
      %v2849 = vadd.f32 0.0, %v2848
      %2850 = vmatprep.mubr.bf16.mxu0 0
      %2851 = vmatmul.mubr.bf16.gmra.mrb[0].mxu0 %v2673
      %v2852 = vpop.f32.mrb[0].mxu0
      %v2853 = vadd.f32 0.0, %v2852
      %v2854 = vpop.f32.mrb[0].mxu0
      %v2855 = vadd.f32 0.0, %v2854
      %v2856 = vpop.f32.mrb[0].mxu0
      %v2857 = vadd.f32 0.0, %v2856
      %v2858 = vpop.f32.mrb[0].mxu0
      %v2859 = vadd.f32 0.0, %v2858
      %2860 = vmatprep.mubr.bf16.mxu0 0
      %2861 = vmatmul.mubr.bf16.gmra.mrb[0].mxu0 %v2676
      %v2862 = vpop.f32.mrb[0].mxu0
      %v2863 = vadd.f32 0.0, %v2862
      %v2864 = vpop.f32.mrb[0].mxu0
      %v2865 = vadd.f32 0.0, %v2864
      %v2866 = vpop.f32.mrb[0].mxu0
      %v2867 = vadd.f32 0.0, %v2866
      %v2868 = vpop.f32.mrb[0].mxu0
      %v2869 = vadd.f32 0.0, %v2868
      %2870 = vdwg.mxu0
      %v2871 = vmax.f32 %v2713, %v2723
      %v2872 = vmax.f32 %v2717, %v2727
      %v2873 = vmax.f32 %v2871, %v2733
      %v2874 = vmax.f32 %v2872, %v2737
      %v2875 = vmax.f32 %v2873, %v2743
      %v2876 = vmax.f32 %v2874, %v2747
      %v2877 = vmax.f32 %v2875, %v2753
      %v2878 = vmax.f32 %v2876, %v2757
      %v2879 = vmax.f32 %v2877, %v2763
      %v2880 = vmax.f32 %v2878, %v2767
      %v2881 = vmax.f32 %v2879, %v2773
      %v2882 = vmax.f32 %v2880, %v2777
      %v2883 = vmax.f32 %v2881, %v2783
      %v2884 = vmax.f32 %v2882, %v2787
      %v2885 = vmax.f32 %v2883, %v2793
      %v2886 = vmax.f32 %v2884, %v2797
      %v2887 = vmax.f32 %v2885, %v2803
      %v2888 = vmax.f32 %v2886, %v2807
      %v2889 = vmax.f32 %v2887, %v2813
      %v2890 = vmax.f32 %v2888, %v2817
      %v2891 = vmax.f32 %v2889, %v2823
      %v2892 = vmax.f32 %v2890, %v2827
      %v2893 = vmax.f32 %v2891, %v2833
      %v2894 = vmax.f32 %v2892, %v2837
      %v2895 = vmax.f32 %v2893, %v2843
      %v2896 = vmax.f32 %v2894, %v2847
      %v2897 = vmax.f32 %v2895, %v2853
      %v2898 = vmax.f32 %v2896, %v2857
      %v2899 = vmax.f32 %v2897, %v2863
      %v2900 = vmax.f32 %v2898, %v2867
      %v2901 = vmax.f32 %v2899, %v2900
      %v2902 = vrot.slane %v2901, 4
      %v2903 = vmax.f32 %v2901, %v2902
      %v2904 = vrot.slane %v2903, 2
      %v2905 = vmax.f32 %v2903, %v2904
      %v2906 = vrot.slane %v2905, 1
      %v2907 = vmax.f32 %v2905, %v2906
      %v2908 = vmax.f32 %v2715, %v2725
      %v2909 = vmax.f32 %v2719, %v2729
      %v2910 = vmax.f32 %v2908, %v2735
      %v2911 = vmax.f32 %v2909, %v2739
      %v2912 = vmax.f32 %v2910, %v2745
      %v2913 = vmax.f32 %v2911, %v2749
      %v2914 = vmax.f32 %v2912, %v2755
      %v2915 = vmax.f32 %v2913, %v2759
      %v2916 = vmax.f32 %v2914, %v2765
      %v2917 = vmax.f32 %v2915, %v2769
      %v2918 = vmax.f32 %v2916, %v2775
      %v2919 = vmax.f32 %v2917, %v2779
      %v2920 = vmax.f32 %v2918, %v2785
      %v2921 = vmax.f32 %v2919, %v2789
      %v2922 = vmax.f32 %v2920, %v2795
      %v2923 = vmax.f32 %v2921, %v2799
      %v2924 = vmax.f32 %v2922, %v2805
      %v2925 = vmax.f32 %v2923, %v2809
      %v2926 = vmax.f32 %v2924, %v2815
      %v2927 = vmax.f32 %v2925, %v2819
      %v2928 = vmax.f32 %v2926, %v2825
      %v2929 = vmax.f32 %v2927, %v2829
      %v2930 = vmax.f32 %v2928, %v2835
      %v2931 = vmax.f32 %v2929, %v2839
      %v2932 = vmax.f32 %v2930, %v2845
      %v2933 = vmax.f32 %v2931, %v2849
      %v2934 = vmax.f32 %v2932, %v2855
      %v2935 = vmax.f32 %v2933, %v2859
      %v2936 = vmax.f32 %v2934, %v2865
      %v2937 = vmax.f32 %v2935, %v2869
      %v2938 = vmax.f32 %v2936, %v2937
      %v2939 = vrot.slane %v2938, 4
      %v2940 = vmax.f32 %v2938, %v2939
      %v2941 = vrot.slane %v2940, 2
      %v2942 = vmax.f32 %v2940, %v2941
      %v2943 = vrot.slane %v2942, 1
      %v2944 = vmax.f32 %v2942, %v2943
      %v2945 = vsub.f32 %v2713, %v2907
      %v2946 = vsub.f32 %v2715, %v2944
      %v2947 = vsub.f32 %v2717, %v2907
      %v2948 = vsub.f32 %v2719, %v2944
      %v2949 = vsub.f32 %v2723, %v2907
      %v2950 = vsub.f32 %v2725, %v2944
      %v2951 = vsub.f32 %v2727, %v2907
      %v2952 = vsub.f32 %v2729, %v2944
      %v2953 = vsub.f32 %v2733, %v2907
      %v2954 = vsub.f32 %v2735, %v2944
      %v2955 = vsub.f32 %v2737, %v2907
      %v2956 = vsub.f32 %v2739, %v2944
      %v2957 = vsub.f32 %v2743, %v2907
      %v2958 = vsub.f32 %v2745, %v2944
      %v2959 = vsub.f32 %v2747, %v2907
      %v2960 = vsub.f32 %v2749, %v2944
      %v2961 = vsub.f32 %v2753, %v2907
      %v2962 = vsub.f32 %v2755, %v2944
      %v2963 = vsub.f32 %v2757, %v2907
      %v2964 = vsub.f32 %v2759, %v2944
      %v2965 = vsub.f32 %v2763, %v2907
      %v2966 = vsub.f32 %v2765, %v2944
      %v2967 = vsub.f32 %v2767, %v2907
      %v2968 = vsub.f32 %v2769, %v2944
      %v2969 = vsub.f32 %v2773, %v2907
      %v2970 = vsub.f32 %v2775, %v2944
      %v2971 = vsub.f32 %v2777, %v2907
      %v2972 = vsub.f32 %v2779, %v2944
      %v2973 = vsub.f32 %v2783, %v2907
      %v2974 = vsub.f32 %v2785, %v2944
      %v2975 = vsub.f32 %v2787, %v2907
      %v2976 = vsub.f32 %v2789, %v2944
      %v2977 = vsub.f32 %v2793, %v2907
      %v2978 = vsub.f32 %v2795, %v2944
      %v2979 = vsub.f32 %v2797, %v2907
      %v2980 = vsub.f32 %v2799, %v2944
      %v2981 = vsub.f32 %v2803, %v2907
      %v2982 = vsub.f32 %v2805, %v2944
      %v2983 = vsub.f32 %v2807, %v2907
      %v2984 = vsub.f32 %v2809, %v2944
      %v2985 = vsub.f32 %v2813, %v2907
      %v2986 = vsub.f32 %v2815, %v2944
      %v2987 = vsub.f32 %v2817, %v2907
      %v2988 = vsub.f32 %v2819, %v2944
      %v2989 = vsub.f32 %v2823, %v2907
      %v2990 = vsub.f32 %v2825, %v2944
      %v2991 = vsub.f32 %v2827, %v2907
      %v2992 = vsub.f32 %v2829, %v2944
      %v2993 = vsub.f32 %v2833, %v2907
      %v2994 = vsub.f32 %v2835, %v2944
      %v2995 = vsub.f32 %v2837, %v2907
      %v2996 = vsub.f32 %v2839, %v2944
      %v2997 = vsub.f32 %v2843, %v2907
      %v2998 = vsub.f32 %v2845, %v2944
      %v2999 = vsub.f32 %v2847, %v2907
      %v3000 = vsub.f32 %v2849, %v2944
      %v3001 = vsub.f32 %v2853, %v2907
      %v3002 = vsub.f32 %v2855, %v2944
      %v3003 = vsub.f32 %v2857, %v2907
      %v3004 = vsub.f32 %v2859, %v2944
      %v3005 = vsub.f32 %v2863, %v2907
      %v3006 = vsub.f32 %v2865, %v2944
      %v3007 = vsub.f32 %v2867, %v2907
      %v3008 = vsub.f32 %v2869, %v2944
      %v3009 = vmul.f32 %v2945, 1.442695
      %v3010 = vpow.pop %v3009
      %v3011 = vmul.f32 %v2946, 1.442695
      %v3012 = vpow.pop %v3011
      %v3013 = vmul.f32 %v2947, 1.442695
      %v3014 = vpow.pop %v3013
      %v3015 = vmul.f32 %v2948, 1.442695
      %v3016 = vpow.pop %v3015
      %v3017 = vmul.f32 %v2949, 1.442695
      %v3018 = vpow.pop %v3017
      %v3019 = vmul.f32 %v2950, 1.442695
      %v3020 = vpow.pop %v3019
      %v3021 = vmul.f32 %v2951, 1.442695
      %v3022 = vpow.pop %v3021
      %v3023 = vmul.f32 %v2952, 1.442695
      %v3024 = vpow.pop %v3023
      %v3025 = vmul.f32 %v2953, 1.442695
      %v3026 = vpow.pop %v3025
      %v3027 = vmul.f32 %v2954, 1.442695
      %v3028 = vpow.pop %v3027
      %v3029 = vmul.f32 %v2955, 1.442695
      %v3030 = vpow.pop %v3029
      %v3031 = vmul.f32 %v2956, 1.442695
      %v3032 = vpow.pop %v3031
      %v3033 = vmul.f32 %v2957, 1.442695
      %v3034 = vpow.pop %v3033
      %v3035 = vmul.f32 %v2958, 1.442695
      %v3036 = vpow.pop %v3035
      %v3037 = vmul.f32 %v2959, 1.442695
      %v3038 = vpow.pop %v3037
      %v3039 = vmul.f32 %v2960, 1.442695
      %v3040 = vpow.pop %v3039
      %v3041 = vmul.f32 %v2961, 1.442695
      %v3042 = vpow.pop %v3041
      %v3043 = vmul.f32 %v2962, 1.442695
      %v3044 = vpow.pop %v3043
      %v3045 = vmul.f32 %v2963, 1.442695
      %v3046 = vpow.pop %v3045
      %v3047 = vmul.f32 %v2964, 1.442695
      %v3048 = vpow.pop %v3047
      %v3049 = vmul.f32 %v2965, 1.442695
      %v3050 = vpow.pop %v3049
      %v3051 = vmul.f32 %v2966, 1.442695
      %v3052 = vpow.pop %v3051
      %v3053 = vmul.f32 %v2967, 1.442695
      %v3054 = vpow.pop %v3053
      %v3055 = vmul.f32 %v2968, 1.442695
      %v3056 = vpow.pop %v3055
      %v3057 = vmul.f32 %v2969, 1.442695
      %v3058 = vpow.pop %v3057
      %v3059 = vmul.f32 %v2970, 1.442695
      %v3060 = vpow.pop %v3059
      %v3061 = vmul.f32 %v2971, 1.442695
      %v3062 = vpow.pop %v3061
      %v3063 = vmul.f32 %v2972, 1.442695
      %v3064 = vpow.pop %v3063
      %v3065 = vmul.f32 %v2973, 1.442695
      %v3066 = vpow.pop %v3065
      %v3067 = vmul.f32 %v2974, 1.442695
      %v3068 = vpow.pop %v3067
      %v3069 = vmul.f32 %v2975, 1.442695
      %v3070 = vpow.pop %v3069
      %v3071 = vmul.f32 %v2976, 1.442695
      %v3072 = vpow.pop %v3071
      %v3073 = vmul.f32 %v2977, 1.442695
      %v3074 = vpow.pop %v3073
      %v3075 = vmul.f32 %v2978, 1.442695
      %v3076 = vpow.pop %v3075
      %v3077 = vmul.f32 %v2979, 1.442695
      %v3078 = vpow.pop %v3077
      %v3079 = vmul.f32 %v2980, 1.442695
      %v3080 = vpow.pop %v3079
      %v3081 = vmul.f32 %v2981, 1.442695
      %v3082 = vpow.pop %v3081
      %v3083 = vmul.f32 %v2982, 1.442695
      %v3084 = vpow.pop %v3083
      %v3085 = vmul.f32 %v2983, 1.442695
      %v3086 = vpow.pop %v3085
      %v3087 = vmul.f32 %v2984, 1.442695
      %v3088 = vpow.pop %v3087
      %v3089 = vmul.f32 %v2985, 1.442695
      %v3090 = vpow.pop %v3089
      %v3091 = vmul.f32 %v2986, 1.442695
      %v3092 = vpow.pop %v3091
      %v3093 = vmul.f32 %v2987, 1.442695
      %v3094 = vpow.pop %v3093
      %v3095 = vmul.f32 %v2988, 1.442695
      %v3096 = vpow.pop %v3095
      %v3097 = vmul.f32 %v2989, 1.442695
      %v3098 = vpow.pop %v3097
      %v3099 = vmul.f32 %v2990, 1.442695
      %v3100 = vpow.pop %v3099
      %v3101 = vmul.f32 %v2991, 1.442695
      %v3102 = vpow.pop %v3101
      %v3103 = vmul.f32 %v2992, 1.442695
      %v3104 = vpow.pop %v3103
      %v3105 = vmul.f32 %v2993, 1.442695
      %v3106 = vpow.pop %v3105
      %v3107 = vmul.f32 %v2994, 1.442695
      %v3108 = vpow.pop %v3107
      %v3109 = vmul.f32 %v2995, 1.442695
      %v3110 = vpow.pop %v3109
      %v3111 = vmul.f32 %v2996, 1.442695
      %v3112 = vpow.pop %v3111
      %v3113 = vmul.f32 %v2997, 1.442695
      %v3114 = vpow.pop %v3113
      %v3115 = vmul.f32 %v2998, 1.442695
      %v3116 = vpow.pop %v3115
      %v3117 = vmul.f32 %v2999, 1.442695
      %v3118 = vpow.pop %v3117
      %v3119 = vmul.f32 %v3000, 1.442695
      %v3120 = vpow.pop %v3119
      %v3121 = vmul.f32 %v3001, 1.442695
      %v3122 = vpow.pop %v3121
      %v3123 = vmul.f32 %v3002, 1.442695
      %v3124 = vpow.pop %v3123
      %v3125 = vmul.f32 %v3003, 1.442695
      %v3126 = vpow.pop %v3125
      %v3127 = vmul.f32 %v3004, 1.442695
      %v3128 = vpow.pop %v3127
      %v3129 = vmul.f32 %v3005, 1.442695
      %v3130 = vpow.pop %v3129
      %v3131 = vmul.f32 %v3006, 1.442695
      %v3132 = vpow.pop %v3131
      %v3133 = vmul.f32 %v3007, 1.442695
      %v3134 = vpow.pop %v3133
      %v3135 = vmul.f32 %v3008, 1.442695
      %v3136 = vpow.pop %v3135
      %v3137 = vadd.f32 %v3010, %v3014
      %v3138 = vadd.f32 %v3137, %v3018
      %v3139 = vadd.f32 %v3138, %v3022
      %v3140 = vadd.f32 %v3139, %v3026
      %v3141 = vadd.f32 %v3140, %v3030
      %v3142 = vadd.f32 %v3141, %v3034
      %v3143 = vadd.f32 %v3142, %v3038
      %v3144 = vadd.f32 %v3143, %v3042
      %v3145 = vadd.f32 %v3144, %v3046
      %v3146 = vadd.f32 %v3145, %v3050
      %v3147 = vadd.f32 %v3146, %v3054
      %v3148 = vadd.f32 %v3147, %v3058
      %v3149 = vadd.f32 %v3148, %v3062
      %v3150 = vadd.f32 %v3149, %v3066
      %v3151 = vadd.f32 %v3150, %v3070
      %v3152 = vadd.f32 %v3151, %v3074
      %v3153 = vadd.f32 %v3152, %v3078
      %v3154 = vadd.f32 %v3153, %v3082
      %v3155 = vadd.f32 %v3154, %v3086
      %v3156 = vadd.f32 %v3155, %v3090
      %v3157 = vadd.f32 %v3156, %v3094
      %v3158 = vadd.f32 %v3157, %v3098
      %v3159 = vadd.f32 %v3158, %v3102
      %v3160 = vadd.f32 %v3159, %v3106
      %v3161 = vadd.f32 %v3160, %v3110
      %v3162 = vadd.f32 %v3161, %v3114
      %v3163 = vadd.f32 %v3162, %v3118
      %v3164 = vadd.f32 %v3163, %v3122
      %v3165 = vadd.f32 %v3164, %v3126
      %v3166 = vadd.f32 %v3165, %v3130
      %v3167 = vadd.f32 %v3166, %v3134
      %v3168 = vrot.slane %v3167, 4
      %v3169 = vadd.f32 %v3167, %v3168
      %v3170 = vrot.slane %v3169, 2
      %v3171 = vadd.f32 %v3169, %v3170
      %v3172 = vrot.slane %v3171, 1
      %v3173 = vadd.f32 %v3171, %v3172
      %v3174 = vadd.f32 %v3012, %v3016
      %v3175 = vadd.f32 %v3174, %v3020
      %v3176 = vadd.f32 %v3175, %v3024
      %v3177 = vadd.f32 %v3176, %v3028
      %v3178 = vadd.f32 %v3177, %v3032
      %v3179 = vadd.f32 %v3178, %v3036
      %v3180 = vadd.f32 %v3179, %v3040
      %v3181 = vadd.f32 %v3180, %v3044
      %v3182 = vadd.f32 %v3181, %v3048
      %v3183 = vadd.f32 %v3182, %v3052
      %v3184 = vadd.f32 %v3183, %v3056
      %v3185 = vadd.f32 %v3184, %v3060
      %v3186 = vadd.f32 %v3185, %v3064
      %v3187 = vadd.f32 %v3186, %v3068
      %v3188 = vadd.f32 %v3187, %v3072
      %v3189 = vadd.f32 %v3188, %v3076
      %v3190 = vadd.f32 %v3189, %v3080
      %v3191 = vadd.f32 %v3190, %v3084
      %v3192 = vadd.f32 %v3191, %v3088
      %v3193 = vadd.f32 %v3192, %v3092
      %v3194 = vadd.f32 %v3193, %v3096
      %v3195 = vadd.f32 %v3194, %v3100
      %v3196 = vadd.f32 %v3195, %v3104
      %v3197 = vadd.f32 %v3196, %v3108
      %v3198 = vadd.f32 %v3197, %v3112
      %v3199 = vadd.f32 %v3198, %v3116
      %v3200 = vadd.f32 %v3199, %v3120
      %v3201 = vadd.f32 %v3200, %v3124
      %v3202 = vadd.f32 %v3201, %v3128
      %v3203 = vadd.f32 %v3202, %v3132
      %v3204 = vadd.f32 %v3203, %v3136
      %v3205 = vrot.slane %v3204, 4
      %v3206 = vadd.f32 %v3204, %v3205
      %v3207 = vrot.slane %v3206, 2
      %v3208 = vadd.f32 %v3206, %v3207
      %v3209 = vrot.slane %v3208, 1
      %v3210 = vadd.f32 %v3208, %v3209
      %v3211 = vpack.c.bf16 %v3014, %v3010
      %v3212 = vpack.c.bf16 %v3016, %v3012
      %v3213 = vpack.c.bf16 %v3022, %v3018
      %v3214 = vpack.c.bf16 %v3024, %v3020
      %v3215 = vpack.c.bf16 %v3030, %v3026
      %v3216 = vpack.c.bf16 %v3032, %v3028
      %v3217 = vpack.c.bf16 %v3038, %v3034
      %v3218 = vpack.c.bf16 %v3040, %v3036
      %v3219 = vpack.c.bf16 %v3046, %v3042
      %v3220 = vpack.c.bf16 %v3048, %v3044
      %v3221 = vpack.c.bf16 %v3054, %v3050
      %v3222 = vpack.c.bf16 %v3056, %v3052
      %v3223 = vpack.c.bf16 %v3062, %v3058
      %v3224 = vpack.c.bf16 %v3064, %v3060
      %v3225 = vpack.c.bf16 %v3070, %v3066
      %v3226 = vpack.c.bf16 %v3072, %v3068
      %v3227 = vpack.c.bf16 %v3078, %v3074
      %v3228 = vpack.c.bf16 %v3080, %v3076
      %v3229 = vpack.c.bf16 %v3086, %v3082
      %v3230 = vpack.c.bf16 %v3088, %v3084
      %v3231 = vpack.c.bf16 %v3094, %v3090
      %v3232 = vpack.c.bf16 %v3096, %v3092
      %v3233 = vpack.c.bf16 %v3102, %v3098
      %v3234 = vpack.c.bf16 %v3104, %v3100
      %v3235 = vpack.c.bf16 %v3110, %v3106
      %v3236 = vpack.c.bf16 %v3112, %v3108
      %v3237 = vpack.c.bf16 %v3118, %v3114
      %v3238 = vpack.c.bf16 %v3120, %v3116
      %v3239 = vpack.c.bf16 %v3126, %v3122
      %v3240 = vpack.c.bf16 %v3128, %v3124
      %v3241 = vpack.c.bf16 %v3134, %v3130
      %v3242 = vpack.c.bf16 %v3136, %v3132
      %3243 = vmatprep.subr.bf16.mxu0 %v3212
      %3244 = vmatpush1.bf16.msra.mxu0 %v3211
      %3245 = vmatprep.subr.bf16.mxu0 %v3214
      %3246 = vmatpush1.bf16.msra.mxu0 %v3213
      %3247 = vmatprep.subr.bf16.mxu0 %v3216
      %3248 = vmatpush1.bf16.msra.mxu0 %v3215
      %3249 = vmatprep.subr.bf16.mxu0 %v3218
      %3250 = vmatpush1.bf16.msra.mxu0 %v3217
      %3251 = vmatprep.subr.bf16.mxu0 %v3220
      %3252 = vmatpush1.bf16.msra.mxu0 %v3219
      %3253 = vmatprep.subr.bf16.mxu0 %v3222
      %3254 = vmatpush1.bf16.msra.mxu0 %v3221
      %3255 = vmatprep.subr.bf16.mxu0 %v3224
      %3256 = vmatpush1.bf16.msra.mxu0 %v3223
      %3257 = vmatprep.subr.bf16.mxu0 %v3226
      %3258 = vmatpush1.bf16.msra.mxu0 %v3225
      %3259 = vmatprep.subr.bf16.mxu0 %v3228
      %3260 = vmatpush1.bf16.msra.mxu0 %v3227
      %3261 = vmatprep.subr.bf16.mxu0 %v3230
      %3262 = vmatpush1.bf16.msra.mxu0 %v3229
      %3263 = vmatprep.subr.bf16.mxu0 %v3232
      %3264 = vmatpush1.bf16.msra.mxu0 %v3231
      %3265 = vmatprep.subr.bf16.mxu0 %v3234
      %3266 = vmatpush1.bf16.msra.mxu0 %v3233
      %3267 = vmatprep.subr.bf16.mxu0 %v3236
      %3268 = vmatpush1.bf16.msra.mxu0 %v3235
      %3269 = vmatprep.subr.bf16.mxu0 %v3238
      %3270 = vmatpush1.bf16.msra.mxu0 %v3237
      %3271 = vmatprep.subr.bf16.mxu0 %v3240
      %3272 = vmatpush1.bf16.msra.mxu0 %v3239
      %3273 = vmatprep.subr.bf16.mxu0 %v3242
      %3274 = vmatpush1.bf16.msra.mxu0 %v3241
      %3275 = vmatprep.mubr.bf16.mxu0 %v2597
      %3276 = vmatmul.mubr.bf16.gmra.mrb[0].mxu0 %v2596
      %v3277 = vpop.f32.mrb[0].mxu0
      %v3278 = vadd.f32 0.0, %v3277
      %v3279 = vpop.f32.mrb[0].mxu0
      %v3280 = vadd.f32 0.0, %v3279
      %v3281 = vpop.f32.mrb[0].mxu0
      %v3282 = vadd.f32 0.0, %v3281
      %v3283 = vpop.f32.mrb[0].mxu0
      %v3284 = vadd.f32 0.0, %v3283
      %3285 = vdwg.mxu0
      %v3286 = vrcp.pop %v3173
      %v3287 = vrcp.pop %v3210
      %v3288 = vmul.f32 %v3278, %v3286
      %v3289 = vmul.f32 %v3280, %v3287
      %v3290 = vmul.f32 %v3282, %v3286
      %v3291 = vmul.f32 %v3284, %v3287
      %v3292 = vpack.c.bf16 %v3290, %v3288
      %v3293 = vpack.c.bf16 %v3291, %v3289
      %3294 = vst [vmem:[#allocation3 + $0x10] sm:$0xff] %v3292
      %3295 = vst [vmem:[#allocation3 + $0x18] sm:$0xff] %v3293
      %v3296 = vld [vmem:[#allocation2 + $0x60] sm:$0xff]
      %v3297 = vld [vmem:[#allocation2 + $0x68] sm:$0xff]
      %v3298 = vld [vmem:[#allocation2 + $0x70] sm:$0xff]
      %v3299 = vld [vmem:[#allocation2 + $0x78] sm:$0xff]
      %v3300 = vld [vmem:[#allocation2 + $0x80] sm:$0xff]
      %v3301 = vld [vmem:[#allocation2 + $0x88] sm:$0xff]
      %3302 = vxpose.xlu0.c.b16.start [1/8] %v3298, 128
      %3303 = vxpose.xlu0.c.b16.cont [2/8] 0, 128
      %3304 = vxpose.xlu0.c.b16.cont [3/8] 0, 128
      %3305 = vxpose.xlu0.c.b16.cont [4/8] 0, 128
      %3306 = vxpose.xlu0.c.b16.cont [5/8] 0, 128
      %3307 = vxpose.xlu0.c.b16.cont [6/8] 0, 128
      %3308 = vxpose.xlu0.c.b16.cont [7/8] 0, 128
      %3309 = vxpose.xlu0.c.b16.end [8/8] 0, 128
      %v3310 = vpop.trf.xlu0
      %v3311 = vpop.trf.xlu0
      %v3312 = vpop.trf.xlu0
      %v3313 = vpop.trf.xlu0
      %v3314 = vpop.trf.xlu0
      %v3315 = vpop.trf.xlu0
      %v3316 = vpop.trf.xlu0
      %v3317 = vpop.trf.xlu0
      %3318 = vxpose.xlu0.c.b16.start [1/8] %v3299, 128
      %3319 = vxpose.xlu0.c.b16.cont [2/8] 0, 128
      %3320 = vxpose.xlu0.c.b16.cont [3/8] 0, 128
      %3321 = vxpose.xlu0.c.b16.cont [4/8] 0, 128
      %3322 = vxpose.xlu0.c.b16.cont [5/8] 0, 128
      %3323 = vxpose.xlu0.c.b16.cont [6/8] 0, 128
      %3324 = vxpose.xlu0.c.b16.cont [7/8] 0, 128
      %3325 = vxpose.xlu0.c.b16.end [8/8] 0, 128
      %v3326 = vpop.trf.xlu0
      %v3327 = vpop.trf.xlu0
      %v3328 = vpop.trf.xlu0
      %v3329 = vpop.trf.xlu0
      %v3330 = vpop.trf.xlu0
      %v3331 = vpop.trf.xlu0
      %v3332 = vpop.trf.xlu0
      %v3333 = vpop.trf.xlu0
      %v3335 = vsel %vm1925, %v3310, 0
      %v3338 = vsel %vm1925, %v3311, 0
      %v3341 = vsel %vm1925, %v3312, 0
      %v3344 = vsel %vm1925, %v3313, 0
      %v3347 = vsel %vm1925, %v3314, 0
      %v3350 = vsel %vm1925, %v3315, 0
      %v3353 = vsel %vm1925, %v3316, 0
      %v3356 = vsel %vm1925, %v3317, 0
      %v3359 = vsel %vm1925, %v3326, 0
      %v3362 = vsel %vm1925, %v3327, 0
      %v3365 = vsel %vm1925, %v3328, 0
      %v3368 = vsel %vm1925, %v3329, 0
      %v3371 = vsel %vm1925, %v3330, 0
      %v3374 = vsel %vm1925, %v3331, 0
      %v3377 = vsel %vm1925, %v3332, 0
      %v3380 = vsel %vm1925, %v3333, 0
      %3382 = vmatprep.subr.bf16.mxu0 %v3297
      %3383 = vmatpush1.bf16.msra.mxu0 %v3296
      %3384 = vmatprep.subr.bf16.mxu0 0
      %3385 = vmatpush1.bf16.msra.mxu0 0
      %3386 = vmatprep.subr.bf16.mxu0 0
      %3387 = vmatpush1.bf16.msra.mxu0 0
      %3388 = vmatprep.subr.bf16.mxu0 0
      %3389 = vmatpush1.bf16.msra.mxu0 0
      %3390 = vmatprep.subr.bf16.mxu0 0
      %3391 = vmatpush1.bf16.msra.mxu0 0
      %3392 = vmatprep.subr.bf16.mxu0 0
      %3393 = vmatpush1.bf16.msra.mxu0 0
      %3394 = vmatprep.subr.bf16.mxu0 0
      %3395 = vmatpush1.bf16.msra.mxu0 0
      %3396 = vmatprep.subr.bf16.mxu0 0
      %3397 = vmatpush1.bf16.msra.mxu0 0
      %3398 = vmatprep.subr.bf16.mxu0 0
      %3399 = vmatpush1.bf16.msra.mxu0 0
      %3400 = vmatprep.subr.bf16.mxu0 0
      %3401 = vmatpush1.bf16.msra.mxu0 0
      %3402 = vmatprep.subr.bf16.mxu0 0
      %3403 = vmatpush1.bf16.msra.mxu0 0
      %3404 = vmatprep.subr.bf16.mxu0 0
      %3405 = vmatpush1.bf16.msra.mxu0 0
      %3406 = vmatprep.subr.bf16.mxu0 0
      %3407 = vmatpush1.bf16.msra.mxu0 0
      %3408 = vmatprep.subr.bf16.mxu0 0
      %3409 = vmatpush1.bf16.msra.mxu0 0
      %3410 = vmatprep.subr.bf16.mxu0 0
      %3411 = vmatpush1.bf16.msra.mxu0 0
      %3412 = vmatprep.subr.bf16.mxu0 0
      %3413 = vmatpush1.bf16.msra.mxu0 0
      %3414 = vmatprep.mubr.bf16.mxu0 0
      %3415 = vmatmul.mubr.bf16.gmra.mrb[0].mxu0 %v3335
      %v3416 = vpop.f32.mrb[0].mxu0
      %v3417 = vadd.f32 0.0, %v3416
      %v3418 = vpop.f32.mrb[0].mxu0
      %v3419 = vadd.f32 0.0, %v3418
      %v3420 = vpop.f32.mrb[0].mxu0
      %v3421 = vadd.f32 0.0, %v3420
      %v3422 = vpop.f32.mrb[0].mxu0
      %v3423 = vadd.f32 0.0, %v3422
      %3424 = vmatprep.mubr.bf16.mxu0 0
      %3425 = vmatmul.mubr.bf16.gmra.mrb[0].mxu0 %v3338
      %v3426 = vpop.f32.mrb[0].mxu0
      %v3427 = vadd.f32 0.0, %v3426
      %v3428 = vpop.f32.mrb[0].mxu0
      %v3429 = vadd.f32 0.0, %v3428
      %v3430 = vpop.f32.mrb[0].mxu0
      %v3431 = vadd.f32 0.0, %v3430
      %v3432 = vpop.f32.mrb[0].mxu0
      %v3433 = vadd.f32 0.0, %v3432
      %3434 = vmatprep.mubr.bf16.mxu0 0
      %3435 = vmatmul.mubr.bf16.gmra.mrb[0].mxu0 %v3341
      %v3436 = vpop.f32.mrb[0].mxu0
      %v3437 = vadd.f32 0.0, %v3436
      %v3438 = vpop.f32.mrb[0].mxu0
      %v3439 = vadd.f32 0.0, %v3438
      %v3440 = vpop.f32.mrb[0].mxu0
      %v3441 = vadd.f32 0.0, %v3440
      %v3442 = vpop.f32.mrb[0].mxu0
      %v3443 = vadd.f32 0.0, %v3442
      %3444 = vmatprep.mubr.bf16.mxu0 0
      %3445 = vmatmul.mubr.bf16.gmra.mrb[0].mxu0 %v3344
      %v3446 = vpop.f32.mrb[0].mxu0
      %v3447 = vadd.f32 0.0, %v3446
      %v3448 = vpop.f32.mrb[0].mxu0
      %v3449 = vadd.f32 0.0, %v3448
      %v3450 = vpop.f32.mrb[0].mxu0
      %v3451 = vadd.f32 0.0, %v3450
      %v3452 = vpop.f32.mrb[0].mxu0
      %v3453 = vadd.f32 0.0, %v3452
      %3454 = vmatprep.mubr.bf16.mxu0 0
      %3455 = vmatmul.mubr.bf16.gmra.mrb[0].mxu0 %v3347
      %v3456 = vpop.f32.mrb[0].mxu0
      %v3457 = vadd.f32 0.0, %v3456
      %v3458 = vpop.f32.mrb[0].mxu0
      %v3459 = vadd.f32 0.0, %v3458
      %v3460 = vpop.f32.mrb[0].mxu0
      %v3461 = vadd.f32 0.0, %v3460
      %v3462 = vpop.f32.mrb[0].mxu0
      %v3463 = vadd.f32 0.0, %v3462
      %3464 = vmatprep.mubr.bf16.mxu0 0
      %3465 = vmatmul.mubr.bf16.gmra.mrb[0].mxu0 %v3350
      %v3466 = vpop.f32.mrb[0].mxu0
      %v3467 = vadd.f32 0.0, %v3466
      %v3468 = vpop.f32.mrb[0].mxu0
      %v3469 = vadd.f32 0.0, %v3468
      %v3470 = vpop.f32.mrb[0].mxu0
      %v3471 = vadd.f32 0.0, %v3470
      %v3472 = vpop.f32.mrb[0].mxu0
      %v3473 = vadd.f32 0.0, %v3472
      %3474 = vmatprep.mubr.bf16.mxu0 0
      %3475 = vmatmul.mubr.bf16.gmra.mrb[0].mxu0 %v3353
      %v3476 = vpop.f32.mrb[0].mxu0
      %v3477 = vadd.f32 0.0, %v3476
      %v3478 = vpop.f32.mrb[0].mxu0
      %v3479 = vadd.f32 0.0, %v3478
      %v3480 = vpop.f32.mrb[0].mxu0
      %v3481 = vadd.f32 0.0, %v3480
      %v3482 = vpop.f32.mrb[0].mxu0
      %v3483 = vadd.f32 0.0, %v3482
      %3484 = vmatprep.mubr.bf16.mxu0 0
      %3485 = vmatmul.mubr.bf16.gmra.mrb[0].mxu0 %v3356
      %v3486 = vpop.f32.mrb[0].mxu0
      %v3487 = vadd.f32 0.0, %v3486
      %v3488 = vpop.f32.mrb[0].mxu0
      %v3489 = vadd.f32 0.0, %v3488
      %v3490 = vpop.f32.mrb[0].mxu0
      %v3491 = vadd.f32 0.0, %v3490
      %v3492 = vpop.f32.mrb[0].mxu0
      %v3493 = vadd.f32 0.0, %v3492
      %3494 = vmatprep.mubr.bf16.mxu0 0
      %3495 = vmatmul.mubr.bf16.gmra.mrb[0].mxu0 %v3359
      %v3496 = vpop.f32.mrb[0].mxu0
      %v3497 = vadd.f32 0.0, %v3496
      %v3498 = vpop.f32.mrb[0].mxu0
      %v3499 = vadd.f32 0.0, %v3498
      %v3500 = vpop.f32.mrb[0].mxu0
      %v3501 = vadd.f32 0.0, %v3500
      %v3502 = vpop.f32.mrb[0].mxu0
      %v3503 = vadd.f32 0.0, %v3502
      %3504 = vmatprep.mubr.bf16.mxu0 0
      %3505 = vmatmul.mubr.bf16.gmra.mrb[0].mxu0 %v3362
      %v3506 = vpop.f32.mrb[0].mxu0
      %v3507 = vadd.f32 0.0, %v3506
      %v3508 = vpop.f32.mrb[0].mxu0
      %v3509 = vadd.f32 0.0, %v3508
      %v3510 = vpop.f32.mrb[0].mxu0
      %v3511 = vadd.f32 0.0, %v3510
      %v3512 = vpop.f32.mrb[0].mxu0
      %v3513 = vadd.f32 0.0, %v3512
      %3514 = vmatprep.mubr.bf16.mxu0 0
      %3515 = vmatmul.mubr.bf16.gmra.mrb[0].mxu0 %v3365
      %v3516 = vpop.f32.mrb[0].mxu0
      %v3517 = vadd.f32 0.0, %v3516
      %v3518 = vpop.f32.mrb[0].mxu0
      %v3519 = vadd.f32 0.0, %v3518
      %v3520 = vpop.f32.mrb[0].mxu0
      %v3521 = vadd.f32 0.0, %v3520
      %v3522 = vpop.f32.mrb[0].mxu0
      %v3523 = vadd.f32 0.0, %v3522
      %3524 = vmatprep.mubr.bf16.mxu0 0
      %3525 = vmatmul.mubr.bf16.gmra.mrb[0].mxu0 %v3368
      %v3526 = vpop.f32.mrb[0].mxu0
      %v3527 = vadd.f32 0.0, %v3526
      %v3528 = vpop.f32.mrb[0].mxu0
      %v3529 = vadd.f32 0.0, %v3528
      %v3530 = vpop.f32.mrb[0].mxu0
      %v3531 = vadd.f32 0.0, %v3530
      %v3532 = vpop.f32.mrb[0].mxu0
      %v3533 = vadd.f32 0.0, %v3532
      %3534 = vmatprep.mubr.bf16.mxu0 0
      %3535 = vmatmul.mubr.bf16.gmra.mrb[0].mxu0 %v3371
      %v3536 = vpop.f32.mrb[0].mxu0
      %v3537 = vadd.f32 0.0, %v3536
      %v3538 = vpop.f32.mrb[0].mxu0
      %v3539 = vadd.f32 0.0, %v3538
      %v3540 = vpop.f32.mrb[0].mxu0
      %v3541 = vadd.f32 0.0, %v3540
      %v3542 = vpop.f32.mrb[0].mxu0
      %v3543 = vadd.f32 0.0, %v3542
      %3544 = vmatprep.mubr.bf16.mxu0 0
      %3545 = vmatmul.mubr.bf16.gmra.mrb[0].mxu0 %v3374
      %v3546 = vpop.f32.mrb[0].mxu0
      %v3547 = vadd.f32 0.0, %v3546
      %v3548 = vpop.f32.mrb[0].mxu0
      %v3549 = vadd.f32 0.0, %v3548
      %v3550 = vpop.f32.mrb[0].mxu0
      %v3551 = vadd.f32 0.0, %v3550
      %v3552 = vpop.f32.mrb[0].mxu0
      %v3553 = vadd.f32 0.0, %v3552
      %3554 = vmatprep.mubr.bf16.mxu0 0
      %3555 = vmatmul.mubr.bf16.gmra.mrb[0].mxu0 %v3377
      %v3556 = vpop.f32.mrb[0].mxu0
      %v3557 = vadd.f32 0.0, %v3556
      %v3558 = vpop.f32.mrb[0].mxu0
      %v3559 = vadd.f32 0.0, %v3558
      %v3560 = vpop.f32.mrb[0].mxu0
      %v3561 = vadd.f32 0.0, %v3560
      %v3562 = vpop.f32.mrb[0].mxu0
      %v3563 = vadd.f32 0.0, %v3562
      %3564 = vmatprep.mubr.bf16.mxu0 0
      %3565 = vmatmul.mubr.bf16.gmra.mrb[0].mxu0 %v3380
      %v3566 = vpop.f32.mrb[0].mxu0
      %v3567 = vadd.f32 0.0, %v3566
      %v3568 = vpop.f32.mrb[0].mxu0
      %v3569 = vadd.f32 0.0, %v3568
      %v3570 = vpop.f32.mrb[0].mxu0
      %v3571 = vadd.f32 0.0, %v3570
      %v3572 = vpop.f32.mrb[0].mxu0
      %v3573 = vadd.f32 0.0, %v3572
      %3574 = vdwg.mxu0
      %v3575 = vmax.f32 %v3417, %v3427
      %v3576 = vmax.f32 %v3421, %v3431
      %v3577 = vmax.f32 %v3575, %v3437
      %v3578 = vmax.f32 %v3576, %v3441
      %v3579 = vmax.f32 %v3577, %v3447
      %v3580 = vmax.f32 %v3578, %v3451
      %v3581 = vmax.f32 %v3579, %v3457
      %v3582 = vmax.f32 %v3580, %v3461
      %v3583 = vmax.f32 %v3581, %v3467
      %v3584 = vmax.f32 %v3582, %v3471
      %v3585 = vmax.f32 %v3583, %v3477
      %v3586 = vmax.f32 %v3584, %v3481
      %v3587 = vmax.f32 %v3585, %v3487
      %v3588 = vmax.f32 %v3586, %v3491
      %v3589 = vmax.f32 %v3587, %v3497
      %v3590 = vmax.f32 %v3588, %v3501
      %v3591 = vmax.f32 %v3589, %v3507
      %v3592 = vmax.f32 %v3590, %v3511
      %v3593 = vmax.f32 %v3591, %v3517
      %v3594 = vmax.f32 %v3592, %v3521
      %v3595 = vmax.f32 %v3593, %v3527
      %v3596 = vmax.f32 %v3594, %v3531
      %v3597 = vmax.f32 %v3595, %v3537
      %v3598 = vmax.f32 %v3596, %v3541
      %v3599 = vmax.f32 %v3597, %v3547
      %v3600 = vmax.f32 %v3598, %v3551
      %v3601 = vmax.f32 %v3599, %v3557
      %v3602 = vmax.f32 %v3600, %v3561
      %v3603 = vmax.f32 %v3601, %v3567
      %v3604 = vmax.f32 %v3602, %v3571
      %v3605 = vmax.f32 %v3603, %v3604
      %v3606 = vrot.slane %v3605, 4
      %v3607 = vmax.f32 %v3605, %v3606
      %v3608 = vrot.slane %v3607, 2
      %v3609 = vmax.f32 %v3607, %v3608
      %v3610 = vrot.slane %v3609, 1
      %v3611 = vmax.f32 %v3609, %v3610
      %v3612 = vmax.f32 %v3419, %v3429
      %v3613 = vmax.f32 %v3423, %v3433
      %v3614 = vmax.f32 %v3612, %v3439
      %v3615 = vmax.f32 %v3613, %v3443
      %v3616 = vmax.f32 %v3614, %v3449
      %v3617 = vmax.f32 %v3615, %v3453
      %v3618 = vmax.f32 %v3616, %v3459
      %v3619 = vmax.f32 %v3617, %v3463
      %v3620 = vmax.f32 %v3618, %v3469
      %v3621 = vmax.f32 %v3619, %v3473
      %v3622 = vmax.f32 %v3620, %v3479
      %v3623 = vmax.f32 %v3621, %v3483
      %v3624 = vmax.f32 %v3622, %v3489
      %v3625 = vmax.f32 %v3623, %v3493
      %v3626 = vmax.f32 %v3624, %v3499
      %v3627 = vmax.f32 %v3625, %v3503
      %v3628 = vmax.f32 %v3626, %v3509
      %v3629 = vmax.f32 %v3627, %v3513
      %v3630 = vmax.f32 %v3628, %v3519
      %v3631 = vmax.f32 %v3629, %v3523
      %v3632 = vmax.f32 %v3630, %v3529
      %v3633 = vmax.f32 %v3631, %v3533
      %v3634 = vmax.f32 %v3632, %v3539
      %v3635 = vmax.f32 %v3633, %v3543
      %v3636 = vmax.f32 %v3634, %v3549
      %v3637 = vmax.f32 %v3635, %v3553
      %v3638 = vmax.f32 %v3636, %v3559
      %v3639 = vmax.f32 %v3637, %v3563
      %v3640 = vmax.f32 %v3638, %v3569
      %v3641 = vmax.f32 %v3639, %v3573
      %v3642 = vmax.f32 %v3640, %v3641
      %v3643 = vrot.slane %v3642, 4
      %v3644 = vmax.f32 %v3642, %v3643
      %v3645 = vrot.slane %v3644, 2
      %v3646 = vmax.f32 %v3644, %v3645
      %v3647 = vrot.slane %v3646, 1
      %v3648 = vmax.f32 %v3646, %v3647
      %v3649 = vsub.f32 %v3417, %v3611
      %v3650 = vsub.f32 %v3419, %v3648
      %v3651 = vsub.f32 %v3421, %v3611
      %v3652 = vsub.f32 %v3423, %v3648
      %v3653 = vsub.f32 %v3427, %v3611
      %v3654 = vsub.f32 %v3429, %v3648
      %v3655 = vsub.f32 %v3431, %v3611
      %v3656 = vsub.f32 %v3433, %v3648
      %v3657 = vsub.f32 %v3437, %v3611
      %v3658 = vsub.f32 %v3439, %v3648
      %v3659 = vsub.f32 %v3441, %v3611
      %v3660 = vsub.f32 %v3443, %v3648
      %v3661 = vsub.f32 %v3447, %v3611
      %v3662 = vsub.f32 %v3449, %v3648
      %v3663 = vsub.f32 %v3451, %v3611
      %v3664 = vsub.f32 %v3453, %v3648
      %v3665 = vsub.f32 %v3457, %v3611
      %v3666 = vsub.f32 %v3459, %v3648
      %v3667 = vsub.f32 %v3461, %v3611
      %v3668 = vsub.f32 %v3463, %v3648
      %v3669 = vsub.f32 %v3467, %v3611
      %v3670 = vsub.f32 %v3469, %v3648
      %v3671 = vsub.f32 %v3471, %v3611
      %v3672 = vsub.f32 %v3473, %v3648
      %v3673 = vsub.f32 %v3477, %v3611
      %v3674 = vsub.f32 %v3479, %v3648
      %v3675 = vsub.f32 %v3481, %v3611
      %v3676 = vsub.f32 %v3483, %v3648
      %v3677 = vsub.f32 %v3487, %v3611
      %v3678 = vsub.f32 %v3489, %v3648
      %v3679 = vsub.f32 %v3491, %v3611
      %v3680 = vsub.f32 %v3493, %v3648
      %v3681 = vsub.f32 %v3497, %v3611
      %v3682 = vsub.f32 %v3499, %v3648
      %v3683 = vsub.f32 %v3501, %v3611
      %v3684 = vsub.f32 %v3503, %v3648
      %v3685 = vsub.f32 %v3507, %v3611
      %v3686 = vsub.f32 %v3509, %v3648
      %v3687 = vsub.f32 %v3511, %v3611
      %v3688 = vsub.f32 %v3513, %v3648
      %v3689 = vsub.f32 %v3517, %v3611
      %v3690 = vsub.f32 %v3519, %v3648
      %v3691 = vsub.f32 %v3521, %v3611
      %v3692 = vsub.f32 %v3523, %v3648
      %v3693 = vsub.f32 %v3527, %v3611
      %v3694 = vsub.f32 %v3529, %v3648
      %v3695 = vsub.f32 %v3531, %v3611
      %v3696 = vsub.f32 %v3533, %v3648
      %v3697 = vsub.f32 %v3537, %v3611
      %v3698 = vsub.f32 %v3539, %v3648
      %v3699 = vsub.f32 %v3541, %v3611
      %v3700 = vsub.f32 %v3543, %v3648
      %v3701 = vsub.f32 %v3547, %v3611
      %v3702 = vsub.f32 %v3549, %v3648
      %v3703 = vsub.f32 %v3551, %v3611
      %v3704 = vsub.f32 %v3553, %v3648
      %v3705 = vsub.f32 %v3557, %v3611
      %v3706 = vsub.f32 %v3559, %v3648
      %v3707 = vsub.f32 %v3561, %v3611
      %v3708 = vsub.f32 %v3563, %v3648
      %v3709 = vsub.f32 %v3567, %v3611
      %v3710 = vsub.f32 %v3569, %v3648
      %v3711 = vsub.f32 %v3571, %v3611
      %v3712 = vsub.f32 %v3573, %v3648
      %v3713 = vmul.f32 %v3649, 1.442695
      %v3714 = vpow.pop %v3713
      %v3715 = vmul.f32 %v3650, 1.442695
      %v3716 = vpow.pop %v3715
      %v3717 = vmul.f32 %v3651, 1.442695
      %v3718 = vpow.pop %v3717
      %v3719 = vmul.f32 %v3652, 1.442695
      %v3720 = vpow.pop %v3719
      %v3721 = vmul.f32 %v3653, 1.442695
      %v3722 = vpow.pop %v3721
      %v3723 = vmul.f32 %v3654, 1.442695
      %v3724 = vpow.pop %v3723
      %v3725 = vmul.f32 %v3655, 1.442695
      %v3726 = vpow.pop %v3725
      %v3727 = vmul.f32 %v3656, 1.442695
      %v3728 = vpow.pop %v3727
      %v3729 = vmul.f32 %v3657, 1.442695
      %v3730 = vpow.pop %v3729
      %v3731 = vmul.f32 %v3658, 1.442695
      %v3732 = vpow.pop %v3731
      %v3733 = vmul.f32 %v3659, 1.442695
      %v3734 = vpow.pop %v3733
      %v3735 = vmul.f32 %v3660, 1.442695
      %v3736 = vpow.pop %v3735
      %v3737 = vmul.f32 %v3661, 1.442695
      %v3738 = vpow.pop %v3737
      %v3739 = vmul.f32 %v3662, 1.442695
      %v3740 = vpow.pop %v3739
      %v3741 = vmul.f32 %v3663, 1.442695
      %v3742 = vpow.pop %v3741
      %v3743 = vmul.f32 %v3664, 1.442695
      %v3744 = vpow.pop %v3743
      %v3745 = vmul.f32 %v3665, 1.442695
      %v3746 = vpow.pop %v3745
      %v3747 = vmul.f32 %v3666, 1.442695
      %v3748 = vpow.pop %v3747
      %v3749 = vmul.f32 %v3667, 1.442695
      %v3750 = vpow.pop %v3749
      %v3751 = vmul.f32 %v3668, 1.442695
      %v3752 = vpow.pop %v3751
      %v3753 = vmul.f32 %v3669, 1.442695
      %v3754 = vpow.pop %v3753
      %v3755 = vmul.f32 %v3670, 1.442695
      %v3756 = vpow.pop %v3755
      %v3757 = vmul.f32 %v3671, 1.442695
      %v3758 = vpow.pop %v3757
      %v3759 = vmul.f32 %v3672, 1.442695
      %v3760 = vpow.pop %v3759
      %v3761 = vmul.f32 %v3673, 1.442695
      %v3762 = vpow.pop %v3761
      %v3763 = vmul.f32 %v3674, 1.442695
      %v3764 = vpow.pop %v3763
      %v3765 = vmul.f32 %v3675, 1.442695
      %v3766 = vpow.pop %v3765
      %v3767 = vmul.f32 %v3676, 1.442695
      %v3768 = vpow.pop %v3767
      %v3769 = vmul.f32 %v3677, 1.442695
      %v3770 = vpow.pop %v3769
      %v3771 = vmul.f32 %v3678, 1.442695
      %v3772 = vpow.pop %v3771
      %v3773 = vmul.f32 %v3679, 1.442695
      %v3774 = vpow.pop %v3773
      %v3775 = vmul.f32 %v3680, 1.442695
      %v3776 = vpow.pop %v3775
      %v3777 = vmul.f32 %v3681, 1.442695
      %v3778 = vpow.pop %v3777
      %v3779 = vmul.f32 %v3682, 1.442695
      %v3780 = vpow.pop %v3779
      %v3781 = vmul.f32 %v3683, 1.442695
      %v3782 = vpow.pop %v3781
      %v3783 = vmul.f32 %v3684, 1.442695
      %v3784 = vpow.pop %v3783
      %v3785 = vmul.f32 %v3685, 1.442695
      %v3786 = vpow.pop %v3785
      %v3787 = vmul.f32 %v3686, 1.442695
      %v3788 = vpow.pop %v3787
      %v3789 = vmul.f32 %v3687, 1.442695
      %v3790 = vpow.pop %v3789
      %v3791 = vmul.f32 %v3688, 1.442695
      %v3792 = vpow.pop %v3791
      %v3793 = vmul.f32 %v3689, 1.442695
      %v3794 = vpow.pop %v3793
      %v3795 = vmul.f32 %v3690, 1.442695
      %v3796 = vpow.pop %v3795
      %v3797 = vmul.f32 %v3691, 1.442695
      %v3798 = vpow.pop %v3797
      %v3799 = vmul.f32 %v3692, 1.442695
      %v3800 = vpow.pop %v3799
      %v3801 = vmul.f32 %v3693, 1.442695
      %v3802 = vpow.pop %v3801
      %v3803 = vmul.f32 %v3694, 1.442695
      %v3804 = vpow.pop %v3803
      %v3805 = vmul.f32 %v3695, 1.442695
      %v3806 = vpow.pop %v3805
      %v3807 = vmul.f32 %v3696, 1.442695
      %v3808 = vpow.pop %v3807
      %v3809 = vmul.f32 %v3697, 1.442695
      %v3810 = vpow.pop %v3809
      %v3811 = vmul.f32 %v3698, 1.442695
      %v3812 = vpow.pop %v3811
      %v3813 = vmul.f32 %v3699, 1.442695
      %v3814 = vpow.pop %v3813
      %v3815 = vmul.f32 %v3700, 1.442695
      %v3816 = vpow.pop %v3815
      %v3817 = vmul.f32 %v3701, 1.442695
      %v3818 = vpow.pop %v3817
      %v3819 = vmul.f32 %v3702, 1.442695
      %v3820 = vpow.pop %v3819
      %v3821 = vmul.f32 %v3703, 1.442695
      %v3822 = vpow.pop %v3821
      %v3823 = vmul.f32 %v3704, 1.442695
      %v3824 = vpow.pop %v3823
      %v3825 = vmul.f32 %v3705, 1.442695
      %v3826 = vpow.pop %v3825
      %v3827 = vmul.f32 %v3706, 1.442695
      %v3828 = vpow.pop %v3827
      %v3829 = vmul.f32 %v3707, 1.442695
      %v3830 = vpow.pop %v3829
      %v3831 = vmul.f32 %v3708, 1.442695
      %v3832 = vpow.pop %v3831
      %v3833 = vmul.f32 %v3709, 1.442695
      %v3834 = vpow.pop %v3833
      %v3835 = vmul.f32 %v3710, 1.442695
      %v3836 = vpow.pop %v3835
      %v3837 = vmul.f32 %v3711, 1.442695
      %v3838 = vpow.pop %v3837
      %v3839 = vmul.f32 %v3712, 1.442695
      %v3840 = vpow.pop %v3839
      %v3841 = vadd.f32 %v3714, %v3718
      %v3842 = vadd.f32 %v3841, %v3722
      %v3843 = vadd.f32 %v3842, %v3726
      %v3844 = vadd.f32 %v3843, %v3730
      %v3845 = vadd.f32 %v3844, %v3734
      %v3846 = vadd.f32 %v3845, %v3738
      %v3847 = vadd.f32 %v3846, %v3742
      %v3848 = vadd.f32 %v3847, %v3746
      %v3849 = vadd.f32 %v3848, %v3750
      %v3850 = vadd.f32 %v3849, %v3754
      %v3851 = vadd.f32 %v3850, %v3758
      %v3852 = vadd.f32 %v3851, %v3762
      %v3853 = vadd.f32 %v3852, %v3766
      %v3854 = vadd.f32 %v3853, %v3770
      %v3855 = vadd.f32 %v3854, %v3774
      %v3856 = vadd.f32 %v3855, %v3778
      %v3857 = vadd.f32 %v3856, %v3782
      %v3858 = vadd.f32 %v3857, %v3786
      %v3859 = vadd.f32 %v3858, %v3790
      %v3860 = vadd.f32 %v3859, %v3794
      %v3861 = vadd.f32 %v3860, %v3798
      %v3862 = vadd.f32 %v3861, %v3802
      %v3863 = vadd.f32 %v3862, %v3806
      %v3864 = vadd.f32 %v3863, %v3810
      %v3865 = vadd.f32 %v3864, %v3814
      %v3866 = vadd.f32 %v3865, %v3818
      %v3867 = vadd.f32 %v3866, %v3822
      %v3868 = vadd.f32 %v3867, %v3826
      %v3869 = vadd.f32 %v3868, %v3830
      %v3870 = vadd.f32 %v3869, %v3834
      %v3871 = vadd.f32 %v3870, %v3838
      %v3872 = vrot.slane %v3871, 4
      %v3873 = vadd.f32 %v3871, %v3872
      %v3874 = vrot.slane %v3873, 2
      %v3875 = vadd.f32 %v3873, %v3874
      %v3876 = vrot.slane %v3875, 1
      %v3877 = vadd.f32 %v3875, %v3876
      %v3878 = vadd.f32 %v3716, %v3720
      %v3879 = vadd.f32 %v3878, %v3724
      %v3880 = vadd.f32 %v3879, %v3728
      %v3881 = vadd.f32 %v3880, %v3732
      %v3882 = vadd.f32 %v3881, %v3736
      %v3883 = vadd.f32 %v3882, %v3740
      %v3884 = vadd.f32 %v3883, %v3744
      %v3885 = vadd.f32 %v3884, %v3748
      %v3886 = vadd.f32 %v3885, %v3752
      %v3887 = vadd.f32 %v3886, %v3756
      %v3888 = vadd.f32 %v3887, %v3760
      %v3889 = vadd.f32 %v3888, %v3764
      %v3890 = vadd.f32 %v3889, %v3768
      %v3891 = vadd.f32 %v3890, %v3772
      %v3892 = vadd.f32 %v3891, %v3776
      %v3893 = vadd.f32 %v3892, %v3780
      %v3894 = vadd.f32 %v3893, %v3784
      %v3895 = vadd.f32 %v3894, %v3788
      %v3896 = vadd.f32 %v3895, %v3792
      %v3897 = vadd.f32 %v3896, %v3796
      %v3898 = vadd.f32 %v3897, %v3800
      %v3899 = vadd.f32 %v3898, %v3804
      %v3900 = vadd.f32 %v3899, %v3808
      %v3901 = vadd.f32 %v3900, %v3812
      %v3902 = vadd.f32 %v3901, %v3816
      %v3903 = vadd.f32 %v3902, %v3820
      %v3904 = vadd.f32 %v3903, %v3824
      %v3905 = vadd.f32 %v3904, %v3828
      %v3906 = vadd.f32 %v3905, %v3832
      %v3907 = vadd.f32 %v3906, %v3836
      %v3908 = vadd.f32 %v3907, %v3840
      %v3909 = vrot.slane %v3908, 4
      %v3910 = vadd.f32 %v3908, %v3909
      %v3911 = vrot.slane %v3910, 2
      %v3912 = vadd.f32 %v3910, %v3911
      %v3913 = vrot.slane %v3912, 1
      %v3914 = vadd.f32 %v3912, %v3913
      %v3915 = vpack.c.bf16 %v3718, %v3714
      %v3916 = vpack.c.bf16 %v3720, %v3716
      %v3917 = vpack.c.bf16 %v3726, %v3722
      %v3918 = vpack.c.bf16 %v3728, %v3724
      %v3919 = vpack.c.bf16 %v3734, %v3730
      %v3920 = vpack.c.bf16 %v3736, %v3732
      %v3921 = vpack.c.bf16 %v3742, %v3738
      %v3922 = vpack.c.bf16 %v3744, %v3740
      %v3923 = vpack.c.bf16 %v3750, %v3746
      %v3924 = vpack.c.bf16 %v3752, %v3748
      %v3925 = vpack.c.bf16 %v3758, %v3754
      %v3926 = vpack.c.bf16 %v3760, %v3756
      %v3927 = vpack.c.bf16 %v3766, %v3762
      %v3928 = vpack.c.bf16 %v3768, %v3764
      %v3929 = vpack.c.bf16 %v3774, %v3770
      %v3930 = vpack.c.bf16 %v3776, %v3772
      %v3931 = vpack.c.bf16 %v3782, %v3778
      %v3932 = vpack.c.bf16 %v3784, %v3780
      %v3933 = vpack.c.bf16 %v3790, %v3786
      %v3934 = vpack.c.bf16 %v3792, %v3788
      %v3935 = vpack.c.bf16 %v3798, %v3794
      %v3936 = vpack.c.bf16 %v3800, %v3796
      %v3937 = vpack.c.bf16 %v3806, %v3802
      %v3938 = vpack.c.bf16 %v3808, %v3804
      %v3939 = vpack.c.bf16 %v3814, %v3810
      %v3940 = vpack.c.bf16 %v3816, %v3812
      %v3941 = vpack.c.bf16 %v3822, %v3818
      %v3942 = vpack.c.bf16 %v3824, %v3820
      %v3943 = vpack.c.bf16 %v3830, %v3826
      %v3944 = vpack.c.bf16 %v3832, %v3828
      %v3945 = vpack.c.bf16 %v3838, %v3834
      %v3946 = vpack.c.bf16 %v3840, %v3836
      %3947 = vmatprep.subr.bf16.mxu0 %v3916
      %3948 = vmatpush1.bf16.msra.mxu0 %v3915
      %3949 = vmatprep.subr.bf16.mxu0 %v3918
      %3950 = vmatpush1.bf16.msra.mxu0 %v3917
      %3951 = vmatprep.subr.bf16.mxu0 %v3920
      %3952 = vmatpush1.bf16.msra.mxu0 %v3919
      %3953 = vmatprep.subr.bf16.mxu0 %v3922
      %3954 = vmatpush1.bf16.msra.mxu0 %v3921
      %3955 = vmatprep.subr.bf16.mxu0 %v3924
      %3956 = vmatpush1.bf16.msra.mxu0 %v3923
      %3957 = vmatprep.subr.bf16.mxu0 %v3926
      %3958 = vmatpush1.bf16.msra.mxu0 %v3925
      %3959 = vmatprep.subr.bf16.mxu0 %v3928
      %3960 = vmatpush1.bf16.msra.mxu0 %v3927
      %3961 = vmatprep.subr.bf16.mxu0 %v3930
      %3962 = vmatpush1.bf16.msra.mxu0 %v3929
      %3963 = vmatprep.subr.bf16.mxu0 %v3932
      %3964 = vmatpush1.bf16.msra.mxu0 %v3931
      %3965 = vmatprep.subr.bf16.mxu0 %v3934
      %3966 = vmatpush1.bf16.msra.mxu0 %v3933
      %3967 = vmatprep.subr.bf16.mxu0 %v3936
      %3968 = vmatpush1.bf16.msra.mxu0 %v3935
      %3969 = vmatprep.subr.bf16.mxu0 %v3938
      %3970 = vmatpush1.bf16.msra.mxu0 %v3937
      %3971 = vmatprep.subr.bf16.mxu0 %v3940
      %3972 = vmatpush1.bf16.msra.mxu0 %v3939
      %3973 = vmatprep.subr.bf16.mxu0 %v3942
      %3974 = vmatpush1.bf16.msra.mxu0 %v3941
      %3975 = vmatprep.subr.bf16.mxu0 %v3944
      %3976 = vmatpush1.bf16.msra.mxu0 %v3943
      %3977 = vmatprep.subr.bf16.mxu0 %v3946
      %3978 = vmatpush1.bf16.msra.mxu0 %v3945
      %3979 = vmatprep.mubr.bf16.mxu0 %v3301
      %3980 = vmatmul.mubr.bf16.gmra.mrb[0].mxu0 %v3300
      %v3981 = vpop.f32.mrb[0].mxu0
      %v3982 = vadd.f32 0.0, %v3981
      %v3983 = vpop.f32.mrb[0].mxu0
      %v3984 = vadd.f32 0.0, %v3983
      %v3985 = vpop.f32.mrb[0].mxu0
      %v3986 = vadd.f32 0.0, %v3985
      %v3987 = vpop.f32.mrb[0].mxu0
      %v3988 = vadd.f32 0.0, %v3987
      %3989 = vdwg.mxu0
      %v3990 = vrcp.pop %v3877
      %v3991 = vrcp.pop %v3914
      %v3992 = vmul.f32 %v3982, %v3990
      %v3993 = vmul.f32 %v3984, %v3991
      %v3994 = vmul.f32 %v3986, %v3990
      %v3995 = vmul.f32 %v3988, %v3991
      %v3996 = vpack.c.bf16 %v3994, %v3992
      %v3997 = vpack.c.bf16 %v3995, %v3993
      %3998 = vst [vmem:[#allocation3 + $0x20] sm:$0xff] %v3996
      %3999 = vst [vmem:[#allocation3 + $0x28] sm:$0xff] %v3997
      %v4000 = vld [vmem:[#allocation2 + $0x90] sm:$0xff]
      %v4001 = vld [vmem:[#allocation2 + $0x98] sm:$0xff]
      %v4002 = vld [vmem:[#allocation2 + $0xa0] sm:$0xff]
      %v4003 = vld [vmem:[#allocation2 + $0xa8] sm:$0xff]
      %v4004 = vld [vmem:[#allocation2 + $0xb0] sm:$0xff]
      %v4005 = vld [vmem:[#allocation2 + $0xb8] sm:$0xff]
      %4006 = vxpose.xlu0.c.b16.start [1/8] %v4002, 128
      %4007 = vxpose.xlu0.c.b16.cont [2/8] 0, 128
      %4008 = vxpose.xlu0.c.b16.cont [3/8] 0, 128
      %4009 = vxpose.xlu0.c.b16.cont [4/8] 0, 128
      %4010 = vxpose.xlu0.c.b16.cont [5/8] 0, 128
      %4011 = vxpose.xlu0.c.b16.cont [6/8] 0, 128
      %4012 = vxpose.xlu0.c.b16.cont [7/8] 0, 128
      %4013 = vxpose.xlu0.c.b16.end [8/8] 0, 128
      %v4014 = vpop.trf.xlu0
      %v4015 = vpop.trf.xlu0
      %v4016 = vpop.trf.xlu0
      %v4017 = vpop.trf.xlu0
      %v4018 = vpop.trf.xlu0
      %v4019 = vpop.trf.xlu0
      %v4020 = vpop.trf.xlu0
      %v4021 = vpop.trf.xlu0
      %4022 = vxpose.xlu0.c.b16.start [1/8] %v4003, 128
      %4023 = vxpose.xlu0.c.b16.cont [2/8] 0, 128
      %4024 = vxpose.xlu0.c.b16.cont [3/8] 0, 128
      %4025 = vxpose.xlu0.c.b16.cont [4/8] 0, 128
      %4026 = vxpose.xlu0.c.b16.cont [5/8] 0, 128
      %4027 = vxpose.xlu0.c.b16.cont [6/8] 0, 128
      %4028 = vxpose.xlu0.c.b16.cont [7/8] 0, 128
      %4029 = vxpose.xlu0.c.b16.end [8/8] 0, 128
      %v4030 = vpop.trf.xlu0
      %v4031 = vpop.trf.xlu0
      %v4032 = vpop.trf.xlu0
      %v4033 = vpop.trf.xlu0
      %v4034 = vpop.trf.xlu0
      %v4035 = vpop.trf.xlu0
      %v4036 = vpop.trf.xlu0
      %v4037 = vpop.trf.xlu0
      %v4039 = vsel %vm1925, %v4014, 0
      %v4042 = vsel %vm1925, %v4015, 0
      %v4045 = vsel %vm1925, %v4016, 0
      %v4048 = vsel %vm1925, %v4017, 0
      %v4051 = vsel %vm1925, %v4018, 0
      %v4054 = vsel %vm1925, %v4019, 0
      %v4057 = vsel %vm1925, %v4020, 0
      %v4060 = vsel %vm1925, %v4021, 0
      %v4063 = vsel %vm1925, %v4030, 0
      %v4066 = vsel %vm1925, %v4031, 0
      %v4069 = vsel %vm1925, %v4032, 0
      %v4072 = vsel %vm1925, %v4033, 0
      %v4075 = vsel %vm1925, %v4034, 0
      %v4078 = vsel %vm1925, %v4035, 0
      %v4081 = vsel %vm1925, %v4036, 0
      %v4084 = vsel %vm1925, %v4037, 0
      %4086 = vmatprep.subr.bf16.mxu0 %v4001
      %4087 = vmatpush1.bf16.msra.mxu0 %v4000
      %4088 = vmatprep.subr.bf16.mxu0 0
      %4089 = vmatpush1.bf16.msra.mxu0 0
      %4090 = vmatprep.subr.bf16.mxu0 0
      %4091 = vmatpush1.bf16.msra.mxu0 0
      %4092 = vmatprep.subr.bf16.mxu0 0
      %4093 = vmatpush1.bf16.msra.mxu0 0
      %4094 = vmatprep.subr.bf16.mxu0 0
      %4095 = vmatpush1.bf16.msra.mxu0 0
      %4096 = vmatprep.subr.bf16.mxu0 0
      %4097 = vmatpush1.bf16.msra.mxu0 0
      %4098 = vmatprep.subr.bf16.mxu0 0
      %4099 = vmatpush1.bf16.msra.mxu0 0
      %4100 = vmatprep.subr.bf16.mxu0 0
      %4101 = vmatpush1.bf16.msra.mxu0 0
      %4102 = vmatprep.subr.bf16.mxu0 0
      %4103 = vmatpush1.bf16.msra.mxu0 0
      %4104 = vmatprep.subr.bf16.mxu0 0
      %4105 = vmatpush1.bf16.msra.mxu0 0
      %4106 = vmatprep.subr.bf16.mxu0 0
      %4107 = vmatpush1.bf16.msra.mxu0 0
      %4108 = vmatprep.subr.bf16.mxu0 0
      %4109 = vmatpush1.bf16.msra.mxu0 0
      %4110 = vmatprep.subr.bf16.mxu0 0
      %4111 = vmatpush1.bf16.msra.mxu0 0
      %4112 = vmatprep.subr.bf16.mxu0 0
      %4113 = vmatpush1.bf16.msra.mxu0 0
      %4114 = vmatprep.subr.bf16.mxu0 0
      %4115 = vmatpush1.bf16.msra.mxu0 0
      %4116 = vmatprep.subr.bf16.mxu0 0
      %4117 = vmatpush1.bf16.msra.mxu0 0
      %4118 = vmatprep.mubr.bf16.mxu0 0
      %4119 = vmatmul.mubr.bf16.gmra.mrb[0].mxu0 %v4039
      %v4120 = vpop.f32.mrb[0].mxu0
      %v4121 = vadd.f32 0.0, %v4120
      %v4122 = vpop.f32.mrb[0].mxu0
      %v4123 = vadd.f32 0.0, %v4122
      %v4124 = vpop.f32.mrb[0].mxu0
      %v4125 = vadd.f32 0.0, %v4124
      %v4126 = vpop.f32.mrb[0].mxu0
      %v4127 = vadd.f32 0.0, %v4126
      %4128 = vmatprep.mubr.bf16.mxu0 0
      %4129 = vmatmul.mubr.bf16.gmra.mrb[0].mxu0 %v4042
      %v4130 = vpop.f32.mrb[0].mxu0
      %v4131 = vadd.f32 0.0, %v4130
      %v4132 = vpop.f32.mrb[0].mxu0
      %v4133 = vadd.f32 0.0, %v4132
      %v4134 = vpop.f32.mrb[0].mxu0
      %v4135 = vadd.f32 0.0, %v4134
      %v4136 = vpop.f32.mrb[0].mxu0
      %v4137 = vadd.f32 0.0, %v4136
      %4138 = vmatprep.mubr.bf16.mxu0 0
      %4139 = vmatmul.mubr.bf16.gmra.mrb[0].mxu0 %v4045
      %v4140 = vpop.f32.mrb[0].mxu0
      %v4141 = vadd.f32 0.0, %v4140
      %v4142 = vpop.f32.mrb[0].mxu0
      %v4143 = vadd.f32 0.0, %v4142
      %v4144 = vpop.f32.mrb[0].mxu0
      %v4145 = vadd.f32 0.0, %v4144
      %v4146 = vpop.f32.mrb[0].mxu0
      %v4147 = vadd.f32 0.0, %v4146
      %4148 = vmatprep.mubr.bf16.mxu0 0
      %4149 = vmatmul.mubr.bf16.gmra.mrb[0].mxu0 %v4048
      %v4150 = vpop.f32.mrb[0].mxu0
      %v4151 = vadd.f32 0.0, %v4150
      %v4152 = vpop.f32.mrb[0].mxu0
      %v4153 = vadd.f32 0.0, %v4152
      %v4154 = vpop.f32.mrb[0].mxu0
      %v4155 = vadd.f32 0.0, %v4154
      %v4156 = vpop.f32.mrb[0].mxu0
      %v4157 = vadd.f32 0.0, %v4156
      %4158 = vmatprep.mubr.bf16.mxu0 0
      %4159 = vmatmul.mubr.bf16.gmra.mrb[0].mxu0 %v4051
      %v4160 = vpop.f32.mrb[0].mxu0
      %v4161 = vadd.f32 0.0, %v4160
      %v4162 = vpop.f32.mrb[0].mxu0
      %v4163 = vadd.f32 0.0, %v4162
      %v4164 = vpop.f32.mrb[0].mxu0
      %v4165 = vadd.f32 0.0, %v4164
      %v4166 = vpop.f32.mrb[0].mxu0
      %v4167 = vadd.f32 0.0, %v4166
      %4168 = vmatprep.mubr.bf16.mxu0 0
      %4169 = vmatmul.mubr.bf16.gmra.mrb[0].mxu0 %v4054
      %v4170 = vpop.f32.mrb[0].mxu0
      %v4171 = vadd.f32 0.0, %v4170
      %v4172 = vpop.f32.mrb[0].mxu0
      %v4173 = vadd.f32 0.0, %v4172
      %v4174 = vpop.f32.mrb[0].mxu0
      %v4175 = vadd.f32 0.0, %v4174
      %v4176 = vpop.f32.mrb[0].mxu0
      %v4177 = vadd.f32 0.0, %v4176
      %4178 = vmatprep.mubr.bf16.mxu0 0
      %4179 = vmatmul.mubr.bf16.gmra.mrb[0].mxu0 %v4057
      %v4180 = vpop.f32.mrb[0].mxu0
      %v4181 = vadd.f32 0.0, %v4180
      %v4182 = vpop.f32.mrb[0].mxu0
      %v4183 = vadd.f32 0.0, %v4182
      %v4184 = vpop.f32.mrb[0].mxu0
      %v4185 = vadd.f32 0.0, %v4184
      %v4186 = vpop.f32.mrb[0].mxu0
      %v4187 = vadd.f32 0.0, %v4186
      %4188 = vmatprep.mubr.bf16.mxu0 0
      %4189 = vmatmul.mubr.bf16.gmra.mrb[0].mxu0 %v4060
      %v4190 = vpop.f32.mrb[0].mxu0
      %v4191 = vadd.f32 0.0, %v4190
      %v4192 = vpop.f32.mrb[0].mxu0
      %v4193 = vadd.f32 0.0, %v4192
      %v4194 = vpop.f32.mrb[0].mxu0
      %v4195 = vadd.f32 0.0, %v4194
      %v4196 = vpop.f32.mrb[0].mxu0
      %v4197 = vadd.f32 0.0, %v4196
      %4198 = vmatprep.mubr.bf16.mxu0 0
      %4199 = vmatmul.mubr.bf16.gmra.mrb[0].mxu0 %v4063
      %v4200 = vpop.f32.mrb[0].mxu0
      %v4201 = vadd.f32 0.0, %v4200
      %v4202 = vpop.f32.mrb[0].mxu0
      %v4203 = vadd.f32 0.0, %v4202
      %v4204 = vpop.f32.mrb[0].mxu0
      %v4205 = vadd.f32 0.0, %v4204
      %v4206 = vpop.f32.mrb[0].mxu0
      %v4207 = vadd.f32 0.0, %v4206
      %4208 = vmatprep.mubr.bf16.mxu0 0
      %4209 = vmatmul.mubr.bf16.gmra.mrb[0].mxu0 %v4066
      %v4210 = vpop.f32.mrb[0].mxu0
      %v4211 = vadd.f32 0.0, %v4210
      %v4212 = vpop.f32.mrb[0].mxu0
      %v4213 = vadd.f32 0.0, %v4212
      %v4214 = vpop.f32.mrb[0].mxu0
      %v4215 = vadd.f32 0.0, %v4214
      %v4216 = vpop.f32.mrb[0].mxu0
      %v4217 = vadd.f32 0.0, %v4216
      %4218 = vmatprep.mubr.bf16.mxu0 0
      %4219 = vmatmul.mubr.bf16.gmra.mrb[0].mxu0 %v4069
      %v4220 = vpop.f32.mrb[0].mxu0
      %v4221 = vadd.f32 0.0, %v4220
      %v4222 = vpop.f32.mrb[0].mxu0
      %v4223 = vadd.f32 0.0, %v4222
      %v4224 = vpop.f32.mrb[0].mxu0
      %v4225 = vadd.f32 0.0, %v4224
      %v4226 = vpop.f32.mrb[0].mxu0
      %v4227 = vadd.f32 0.0, %v4226
      %4228 = vmatprep.mubr.bf16.mxu0 0
      %4229 = vmatmul.mubr.bf16.gmra.mrb[0].mxu0 %v4072
      %v4230 = vpop.f32.mrb[0].mxu0
      %v4231 = vadd.f32 0.0, %v4230
      %v4232 = vpop.f32.mrb[0].mxu0
      %v4233 = vadd.f32 0.0, %v4232
      %v4234 = vpop.f32.mrb[0].mxu0
      %v4235 = vadd.f32 0.0, %v4234
      %v4236 = vpop.f32.mrb[0].mxu0
      %v4237 = vadd.f32 0.0, %v4236
      %4238 = vmatprep.mubr.bf16.mxu0 0
      %4239 = vmatmul.mubr.bf16.gmra.mrb[0].mxu0 %v4075
      %v4240 = vpop.f32.mrb[0].mxu0
      %v4241 = vadd.f32 0.0, %v4240
      %v4242 = vpop.f32.mrb[0].mxu0
      %v4243 = vadd.f32 0.0, %v4242
      %v4244 = vpop.f32.mrb[0].mxu0
      %v4245 = vadd.f32 0.0, %v4244
      %v4246 = vpop.f32.mrb[0].mxu0
      %v4247 = vadd.f32 0.0, %v4246
      %4248 = vmatprep.mubr.bf16.mxu0 0
      %4249 = vmatmul.mubr.bf16.gmra.mrb[0].mxu0 %v4078
      %v4250 = vpop.f32.mrb[0].mxu0
      %v4251 = vadd.f32 0.0, %v4250
      %v4252 = vpop.f32.mrb[0].mxu0
      %v4253 = vadd.f32 0.0, %v4252
      %v4254 = vpop.f32.mrb[0].mxu0
      %v4255 = vadd.f32 0.0, %v4254
      %v4256 = vpop.f32.mrb[0].mxu0
      %v4257 = vadd.f32 0.0, %v4256
      %4258 = vmatprep.mubr.bf16.mxu0 0
      %4259 = vmatmul.mubr.bf16.gmra.mrb[0].mxu0 %v4081
      %v4260 = vpop.f32.mrb[0].mxu0
      %v4261 = vadd.f32 0.0, %v4260
      %v4262 = vpop.f32.mrb[0].mxu0
      %v4263 = vadd.f32 0.0, %v4262
      %v4264 = vpop.f32.mrb[0].mxu0
      %v4265 = vadd.f32 0.0, %v4264
      %v4266 = vpop.f32.mrb[0].mxu0
      %v4267 = vadd.f32 0.0, %v4266
      %4268 = vmatprep.mubr.bf16.mxu0 0
      %4269 = vmatmul.mubr.bf16.gmra.mrb[0].mxu0 %v4084
      %v4270 = vpop.f32.mrb[0].mxu0
      %v4271 = vadd.f32 0.0, %v4270
      %v4272 = vpop.f32.mrb[0].mxu0
      %v4273 = vadd.f32 0.0, %v4272
      %v4274 = vpop.f32.mrb[0].mxu0
      %v4275 = vadd.f32 0.0, %v4274
      %v4276 = vpop.f32.mrb[0].mxu0
      %v4277 = vadd.f32 0.0, %v4276
      %4278 = vdwg.mxu0
      %v4279 = vmax.f32 %v4121, %v4131
      %v4280 = vmax.f32 %v4125, %v4135
      %v4281 = vmax.f32 %v4279, %v4141
      %v4282 = vmax.f32 %v4280, %v4145
      %v4283 = vmax.f32 %v4281, %v4151
      %v4284 = vmax.f32 %v4282, %v4155
      %v4285 = vmax.f32 %v4283, %v4161
      %v4286 = vmax.f32 %v4284, %v4165
      %v4287 = vmax.f32 %v4285, %v4171
      %v4288 = vmax.f32 %v4286, %v4175
      %v4289 = vmax.f32 %v4287, %v4181
      %v4290 = vmax.f32 %v4288, %v4185
      %v4291 = vmax.f32 %v4289, %v4191
      %v4292 = vmax.f32 %v4290, %v4195
      %v4293 = vmax.f32 %v4291, %v4201
      %v4294 = vmax.f32 %v4292, %v4205
      %v4295 = vmax.f32 %v4293, %v4211
      %v4296 = vmax.f32 %v4294, %v4215
      %v4297 = vmax.f32 %v4295, %v4221
      %v4298 = vmax.f32 %v4296, %v4225
      %v4299 = vmax.f32 %v4297, %v4231
      %v4300 = vmax.f32 %v4298, %v4235
      %v4301 = vmax.f32 %v4299, %v4241
      %v4302 = vmax.f32 %v4300, %v4245
      %v4303 = vmax.f32 %v4301, %v4251
      %v4304 = vmax.f32 %v4302, %v4255
      %v4305 = vmax.f32 %v4303, %v4261
      %v4306 = vmax.f32 %v4304, %v4265
      %v4307 = vmax.f32 %v4305, %v4271
      %v4308 = vmax.f32 %v4306, %v4275
      %v4309 = vmax.f32 %v4307, %v4308
      %v4310 = vrot.slane %v4309, 4
      %v4311 = vmax.f32 %v4309, %v4310
      %v4312 = vrot.slane %v4311, 2
      %v4313 = vmax.f32 %v4311, %v4312
      %v4314 = vrot.slane %v4313, 1
      %v4315 = vmax.f32 %v4313, %v4314
      %v4316 = vmax.f32 %v4123, %v4133
      %v4317 = vmax.f32 %v4127, %v4137
      %v4318 = vmax.f32 %v4316, %v4143
      %v4319 = vmax.f32 %v4317, %v4147
      %v4320 = vmax.f32 %v4318, %v4153
      %v4321 = vmax.f32 %v4319, %v4157
      %v4322 = vmax.f32 %v4320, %v4163
      %v4323 = vmax.f32 %v4321, %v4167
      %v4324 = vmax.f32 %v4322, %v4173
      %v4325 = vmax.f32 %v4323, %v4177
      %v4326 = vmax.f32 %v4324, %v4183
      %v4327 = vmax.f32 %v4325, %v4187
      %v4328 = vmax.f32 %v4326, %v4193
      %v4329 = vmax.f32 %v4327, %v4197
      %v4330 = vmax.f32 %v4328, %v4203
      %v4331 = vmax.f32 %v4329, %v4207
      %v4332 = vmax.f32 %v4330, %v4213
      %v4333 = vmax.f32 %v4331, %v4217
      %v4334 = vmax.f32 %v4332, %v4223
      %v4335 = vmax.f32 %v4333, %v4227
      %v4336 = vmax.f32 %v4334, %v4233
      %v4337 = vmax.f32 %v4335, %v4237
      %v4338 = vmax.f32 %v4336, %v4243
      %v4339 = vmax.f32 %v4337, %v4247
      %v4340 = vmax.f32 %v4338, %v4253
      %v4341 = vmax.f32 %v4339, %v4257
      %v4342 = vmax.f32 %v4340, %v4263
      %v4343 = vmax.f32 %v4341, %v4267
      %v4344 = vmax.f32 %v4342, %v4273
      %v4345 = vmax.f32 %v4343, %v4277
      %v4346 = vmax.f32 %v4344, %v4345
      %v4347 = vrot.slane %v4346, 4
      %v4348 = vmax.f32 %v4346, %v4347
      %v4349 = vrot.slane %v4348, 2
      %v4350 = vmax.f32 %v4348, %v4349
      %v4351 = vrot.slane %v4350, 1
      %v4352 = vmax.f32 %v4350, %v4351
      %v4353 = vsub.f32 %v4121, %v4315
      %v4354 = vsub.f32 %v4123, %v4352
      %v4355 = vsub.f32 %v4125, %v4315
      %v4356 = vsub.f32 %v4127, %v4352
      %v4357 = vsub.f32 %v4131, %v4315
      %v4358 = vsub.f32 %v4133, %v4352
      %v4359 = vsub.f32 %v4135, %v4315
      %v4360 = vsub.f32 %v4137, %v4352
      %v4361 = vsub.f32 %v4141, %v4315
      %v4362 = vsub.f32 %v4143, %v4352
      %v4363 = vsub.f32 %v4145, %v4315
      %v4364 = vsub.f32 %v4147, %v4352
      %v4365 = vsub.f32 %v4151, %v4315
      %v4366 = vsub.f32 %v4153, %v4352
      %v4367 = vsub.f32 %v4155, %v4315
      %v4368 = vsub.f32 %v4157, %v4352
      %v4369 = vsub.f32 %v4161, %v4315
      %v4370 = vsub.f32 %v4163, %v4352
      %v4371 = vsub.f32 %v4165, %v4315
      %v4372 = vsub.f32 %v4167, %v4352
      %v4373 = vsub.f32 %v4171, %v4315
      %v4374 = vsub.f32 %v4173, %v4352
      %v4375 = vsub.f32 %v4175, %v4315
      %v4376 = vsub.f32 %v4177, %v4352
      %v4377 = vsub.f32 %v4181, %v4315
      %v4378 = vsub.f32 %v4183, %v4352
      %v4379 = vsub.f32 %v4185, %v4315
      %v4380 = vsub.f32 %v4187, %v4352
      %v4381 = vsub.f32 %v4191, %v4315
      %v4382 = vsub.f32 %v4193, %v4352
      %v4383 = vsub.f32 %v4195, %v4315
      %v4384 = vsub.f32 %v4197, %v4352
      %v4385 = vsub.f32 %v4201, %v4315
      %v4386 = vsub.f32 %v4203, %v4352
      %v4387 = vsub.f32 %v4205, %v4315
      %v4388 = vsub.f32 %v4207, %v4352
      %v4389 = vsub.f32 %v4211, %v4315
      %v4390 = vsub.f32 %v4213, %v4352
      %v4391 = vsub.f32 %v4215, %v4315
      %v4392 = vsub.f32 %v4217, %v4352
      %v4393 = vsub.f32 %v4221, %v4315
      %v4394 = vsub.f32 %v4223, %v4352
      %v4395 = vsub.f32 %v4225, %v4315
      %v4396 = vsub.f32 %v4227, %v4352
      %v4397 = vsub.f32 %v4231, %v4315
      %v4398 = vsub.f32 %v4233, %v4352
      %v4399 = vsub.f32 %v4235, %v4315
      %v4400 = vsub.f32 %v4237, %v4352
      %v4401 = vsub.f32 %v4241, %v4315
      %v4402 = vsub.f32 %v4243, %v4352
      %v4403 = vsub.f32 %v4245, %v4315
      %v4404 = vsub.f32 %v4247, %v4352
      %v4405 = vsub.f32 %v4251, %v4315
      %v4406 = vsub.f32 %v4253, %v4352
      %v4407 = vsub.f32 %v4255, %v4315
      %v4408 = vsub.f32 %v4257, %v4352
      %v4409 = vsub.f32 %v4261, %v4315
      %v4410 = vsub.f32 %v4263, %v4352
      %v4411 = vsub.f32 %v4265, %v4315
      %v4412 = vsub.f32 %v4267, %v4352
      %v4413 = vsub.f32 %v4271, %v4315
      %v4414 = vsub.f32 %v4273, %v4352
      %v4415 = vsub.f32 %v4275, %v4315
      %v4416 = vsub.f32 %v4277, %v4352
      %v4417 = vmul.f32 %v4353, 1.442695
      %v4418 = vpow.pop %v4417
      %v4419 = vmul.f32 %v4354, 1.442695
      %v4420 = vpow.pop %v4419
      %v4421 = vmul.f32 %v4355, 1.442695
      %v4422 = vpow.pop %v4421
      %v4423 = vmul.f32 %v4356, 1.442695
      %v4424 = vpow.pop %v4423
      %v4425 = vmul.f32 %v4357, 1.442695
      %v4426 = vpow.pop %v4425
      %v4427 = vmul.f32 %v4358, 1.442695
      %v4428 = vpow.pop %v4427
      %v4429 = vmul.f32 %v4359, 1.442695
      %v4430 = vpow.pop %v4429
      %v4431 = vmul.f32 %v4360, 1.442695
      %v4432 = vpow.pop %v4431
      %v4433 = vmul.f32 %v4361, 1.442695
      %v4434 = vpow.pop %v4433
      %v4435 = vmul.f32 %v4362, 1.442695
      %v4436 = vpow.pop %v4435
      %v4437 = vmul.f32 %v4363, 1.442695
      %v4438 = vpow.pop %v4437
      %v4439 = vmul.f32 %v4364, 1.442695
      %v4440 = vpow.pop %v4439
      %v4441 = vmul.f32 %v4365, 1.442695
      %v4442 = vpow.pop %v4441
      %v4443 = vmul.f32 %v4366, 1.442695
      %v4444 = vpow.pop %v4443
      %v4445 = vmul.f32 %v4367, 1.442695
      %v4446 = vpow.pop %v4445
      %v4447 = vmul.f32 %v4368, 1.442695
      %v4448 = vpow.pop %v4447
      %v4449 = vmul.f32 %v4369, 1.442695
      %v4450 = vpow.pop %v4449
      %v4451 = vmul.f32 %v4370, 1.442695
      %v4452 = vpow.pop %v4451
      %v4453 = vmul.f32 %v4371, 1.442695
      %v4454 = vpow.pop %v4453
      %v4455 = vmul.f32 %v4372, 1.442695
      %v4456 = vpow.pop %v4455
      %v4457 = vmul.f32 %v4373, 1.442695
      %v4458 = vpow.pop %v4457
      %v4459 = vmul.f32 %v4374, 1.442695
      %v4460 = vpow.pop %v4459
      %v4461 = vmul.f32 %v4375, 1.442695
      %v4462 = vpow.pop %v4461
      %v4463 = vmul.f32 %v4376, 1.442695
      %v4464 = vpow.pop %v4463
      %v4465 = vmul.f32 %v4377, 1.442695
      %v4466 = vpow.pop %v4465
      %v4467 = vmul.f32 %v4378, 1.442695
      %v4468 = vpow.pop %v4467
      %v4469 = vmul.f32 %v4379, 1.442695
      %v4470 = vpow.pop %v4469
      %v4471 = vmul.f32 %v4380, 1.442695
      %v4472 = vpow.pop %v4471
      %v4473 = vmul.f32 %v4381, 1.442695
      %v4474 = vpow.pop %v4473
      %v4475 = vmul.f32 %v4382, 1.442695
      %v4476 = vpow.pop %v4475
      %v4477 = vmul.f32 %v4383, 1.442695
      %v4478 = vpow.pop %v4477
      %v4479 = vmul.f32 %v4384, 1.442695
      %v4480 = vpow.pop %v4479
      %v4481 = vmul.f32 %v4385, 1.442695
      %v4482 = vpow.pop %v4481
      %v4483 = vmul.f32 %v4386, 1.442695
      %v4484 = vpow.pop %v4483
      %v4485 = vmul.f32 %v4387, 1.442695
      %v4486 = vpow.pop %v4485
      %v4487 = vmul.f32 %v4388, 1.442695
      %v4488 = vpow.pop %v4487
      %v4489 = vmul.f32 %v4389, 1.442695
      %v4490 = vpow.pop %v4489
      %v4491 = vmul.f32 %v4390, 1.442695
      %v4492 = vpow.pop %v4491
      %v4493 = vmul.f32 %v4391, 1.442695
      %v4494 = vpow.pop %v4493
      %v4495 = vmul.f32 %v4392, 1.442695
      %v4496 = vpow.pop %v4495
      %v4497 = vmul.f32 %v4393, 1.442695
      %v4498 = vpow.pop %v4497
      %v4499 = vmul.f32 %v4394, 1.442695
      %v4500 = vpow.pop %v4499
      %v4501 = vmul.f32 %v4395, 1.442695
      %v4502 = vpow.pop %v4501
      %v4503 = vmul.f32 %v4396, 1.442695
      %v4504 = vpow.pop %v4503
      %v4505 = vmul.f32 %v4397, 1.442695
      %v4506 = vpow.pop %v4505
      %v4507 = vmul.f32 %v4398, 1.442695
      %v4508 = vpow.pop %v4507
      %v4509 = vmul.f32 %v4399, 1.442695
      %v4510 = vpow.pop %v4509
      %v4511 = vmul.f32 %v4400, 1.442695
      %v4512 = vpow.pop %v4511
      %v4513 = vmul.f32 %v4401, 1.442695
      %v4514 = vpow.pop %v4513
      %v4515 = vmul.f32 %v4402, 1.442695
      %v4516 = vpow.pop %v4515
      %v4517 = vmul.f32 %v4403, 1.442695
      %v4518 = vpow.pop %v4517
      %v4519 = vmul.f32 %v4404, 1.442695
      %v4520 = vpow.pop %v4519
      %v4521 = vmul.f32 %v4405, 1.442695
      %v4522 = vpow.pop %v4521
      %v4523 = vmul.f32 %v4406, 1.442695
      %v4524 = vpow.pop %v4523
      %v4525 = vmul.f32 %v4407, 1.442695
      %v4526 = vpow.pop %v4525
      %v4527 = vmul.f32 %v4408, 1.442695
      %v4528 = vpow.pop %v4527
      %v4529 = vmul.f32 %v4409, 1.442695
      %v4530 = vpow.pop %v4529
      %v4531 = vmul.f32 %v4410, 1.442695
      %v4532 = vpow.pop %v4531
      %v4533 = vmul.f32 %v4411, 1.442695
      %v4534 = vpow.pop %v4533
      %v4535 = vmul.f32 %v4412, 1.442695
      %v4536 = vpow.pop %v4535
      %v4537 = vmul.f32 %v4413, 1.442695
      %v4538 = vpow.pop %v4537
      %v4539 = vmul.f32 %v4414, 1.442695
      %v4540 = vpow.pop %v4539
      %v4541 = vmul.f32 %v4415, 1.442695
      %v4542 = vpow.pop %v4541
      %v4543 = vmul.f32 %v4416, 1.442695
      %v4544 = vpow.pop %v4543
      %v4545 = vadd.f32 %v4418, %v4422
      %v4546 = vadd.f32 %v4545, %v4426
      %v4547 = vadd.f32 %v4546, %v4430
      %v4548 = vadd.f32 %v4547, %v4434
      %v4549 = vadd.f32 %v4548, %v4438
      %v4550 = vadd.f32 %v4549, %v4442
      %v4551 = vadd.f32 %v4550, %v4446
      %v4552 = vadd.f32 %v4551, %v4450
      %v4553 = vadd.f32 %v4552, %v4454
      %v4554 = vadd.f32 %v4553, %v4458
      %v4555 = vadd.f32 %v4554, %v4462
      %v4556 = vadd.f32 %v4555, %v4466
      %v4557 = vadd.f32 %v4556, %v4470
      %v4558 = vadd.f32 %v4557, %v4474
      %v4559 = vadd.f32 %v4558, %v4478
      %v4560 = vadd.f32 %v4559, %v4482
      %v4561 = vadd.f32 %v4560, %v4486
      %v4562 = vadd.f32 %v4561, %v4490
      %v4563 = vadd.f32 %v4562, %v4494
      %v4564 = vadd.f32 %v4563, %v4498
      %v4565 = vadd.f32 %v4564, %v4502
      %v4566 = vadd.f32 %v4565, %v4506
      %v4567 = vadd.f32 %v4566, %v4510
      %v4568 = vadd.f32 %v4567, %v4514
      %v4569 = vadd.f32 %v4568, %v4518
      %v4570 = vadd.f32 %v4569, %v4522
      %v4571 = vadd.f32 %v4570, %v4526
      %v4572 = vadd.f32 %v4571, %v4530
      %v4573 = vadd.f32 %v4572, %v4534
      %v4574 = vadd.f32 %v4573, %v4538
      %v4575 = vadd.f32 %v4574, %v4542
      %v4576 = vrot.slane %v4575, 4
      %v4577 = vadd.f32 %v4575, %v4576
      %v4578 = vrot.slane %v4577, 2
      %v4579 = vadd.f32 %v4577, %v4578
      %v4580 = vrot.slane %v4579, 1
      %v4581 = vadd.f32 %v4579, %v4580
      %v4582 = vadd.f32 %v4420, %v4424
      %v4583 = vadd.f32 %v4582, %v4428
      %v4584 = vadd.f32 %v4583, %v4432
      %v4585 = vadd.f32 %v4584, %v4436
      %v4586 = vadd.f32 %v4585, %v4440
      %v4587 = vadd.f32 %v4586, %v4444
      %v4588 = vadd.f32 %v4587, %v4448
      %v4589 = vadd.f32 %v4588, %v4452
      %v4590 = vadd.f32 %v4589, %v4456
      %v4591 = vadd.f32 %v4590, %v4460
      %v4592 = vadd.f32 %v4591, %v4464
      %v4593 = vadd.f32 %v4592, %v4468
      %v4594 = vadd.f32 %v4593, %v4472
      %v4595 = vadd.f32 %v4594, %v4476
      %v4596 = vadd.f32 %v4595, %v4480
      %v4597 = vadd.f32 %v4596, %v4484
      %v4598 = vadd.f32 %v4597, %v4488
      %v4599 = vadd.f32 %v4598, %v4492
      %v4600 = vadd.f32 %v4599, %v4496
      %v4601 = vadd.f32 %v4600, %v4500
      %v4602 = vadd.f32 %v4601, %v4504
      %v4603 = vadd.f32 %v4602, %v4508
      %v4604 = vadd.f32 %v4603, %v4512
      %v4605 = vadd.f32 %v4604, %v4516
      %v4606 = vadd.f32 %v4605, %v4520
      %v4607 = vadd.f32 %v4606, %v4524
      %v4608 = vadd.f32 %v4607, %v4528
      %v4609 = vadd.f32 %v4608, %v4532
      %v4610 = vadd.f32 %v4609, %v4536
      %v4611 = vadd.f32 %v4610, %v4540
      %v4612 = vadd.f32 %v4611, %v4544
      %v4613 = vrot.slane %v4612, 4
      %v4614 = vadd.f32 %v4612, %v4613
      %v4615 = vrot.slane %v4614, 2
      %v4616 = vadd.f32 %v4614, %v4615
      %v4617 = vrot.slane %v4616, 1
      %v4618 = vadd.f32 %v4616, %v4617
      %v4619 = vpack.c.bf16 %v4422, %v4418
      %v4620 = vpack.c.bf16 %v4424, %v4420
      %v4621 = vpack.c.bf16 %v4430, %v4426
      %v4622 = vpack.c.bf16 %v4432, %v4428
      %v4623 = vpack.c.bf16 %v4438, %v4434
      %v4624 = vpack.c.bf16 %v4440, %v4436
      %v4625 = vpack.c.bf16 %v4446, %v4442
      %v4626 = vpack.c.bf16 %v4448, %v4444
      %v4627 = vpack.c.bf16 %v4454, %v4450
      %v4628 = vpack.c.bf16 %v4456, %v4452
      %v4629 = vpack.c.bf16 %v4462, %v4458
      %v4630 = vpack.c.bf16 %v4464, %v4460
      %v4631 = vpack.c.bf16 %v4470, %v4466
      %v4632 = vpack.c.bf16 %v4472, %v4468
      %v4633 = vpack.c.bf16 %v4478, %v4474
      %v4634 = vpack.c.bf16 %v4480, %v4476
      %v4635 = vpack.c.bf16 %v4486, %v4482
      %v4636 = vpack.c.bf16 %v4488, %v4484
      %v4637 = vpack.c.bf16 %v4494, %v4490
      %v4638 = vpack.c.bf16 %v4496, %v4492
      %v4639 = vpack.c.bf16 %v4502, %v4498
      %v4640 = vpack.c.bf16 %v4504, %v4500
      %v4641 = vpack.c.bf16 %v4510, %v4506
      %v4642 = vpack.c.bf16 %v4512, %v4508
      %v4643 = vpack.c.bf16 %v4518, %v4514
      %v4644 = vpack.c.bf16 %v4520, %v4516
      %v4645 = vpack.c.bf16 %v4526, %v4522
      %v4646 = vpack.c.bf16 %v4528, %v4524
      %v4647 = vpack.c.bf16 %v4534, %v4530
      %v4648 = vpack.c.bf16 %v4536, %v4532
      %v4649 = vpack.c.bf16 %v4542, %v4538
      %v4650 = vpack.c.bf16 %v4544, %v4540
      %4651 = vmatprep.subr.bf16.mxu0 %v4620
      %4652 = vmatpush1.bf16.msra.mxu0 %v4619
      %4653 = vmatprep.subr.bf16.mxu0 %v4622
      %4654 = vmatpush1.bf16.msra.mxu0 %v4621
      %4655 = vmatprep.subr.bf16.mxu0 %v4624
      %4656 = vmatpush1.bf16.msra.mxu0 %v4623
      %4657 = vmatprep.subr.bf16.mxu0 %v4626
      %4658 = vmatpush1.bf16.msra.mxu0 %v4625
      %4659 = vmatprep.subr.bf16.mxu0 %v4628
      %4660 = vmatpush1.bf16.msra.mxu0 %v4627
      %4661 = vmatprep.subr.bf16.mxu0 %v4630
      %4662 = vmatpush1.bf16.msra.mxu0 %v4629
      %4663 = vmatprep.subr.bf16.mxu0 %v4632
      %4664 = vmatpush1.bf16.msra.mxu0 %v4631
      %4665 = vmatprep.subr.bf16.mxu0 %v4634
      %4666 = vmatpush1.bf16.msra.mxu0 %v4633
      %4667 = vmatprep.subr.bf16.mxu0 %v4636
      %4668 = vmatpush1.bf16.msra.mxu0 %v4635
      %4669 = vmatprep.subr.bf16.mxu0 %v4638
      %4670 = vmatpush1.bf16.msra.mxu0 %v4637
      %4671 = vmatprep.subr.bf16.mxu0 %v4640
      %4672 = vmatpush1.bf16.msra.mxu0 %v4639
      %4673 = vmatprep.subr.bf16.mxu0 %v4642
      %4674 = vmatpush1.bf16.msra.mxu0 %v4641
      %4675 = vmatprep.subr.bf16.mxu0 %v4644
      %4676 = vmatpush1.bf16.msra.mxu0 %v4643
      %4677 = vmatprep.subr.bf16.mxu0 %v4646
      %4678 = vmatpush1.bf16.msra.mxu0 %v4645
      %4679 = vmatprep.subr.bf16.mxu0 %v4648
      %4680 = vmatpush1.bf16.msra.mxu0 %v4647
      %4681 = vmatprep.subr.bf16.mxu0 %v4650
      %4682 = vmatpush1.bf16.msra.mxu0 %v4649
      %4683 = vmatprep.mubr.bf16.mxu0 %v4005
      %4684 = vmatmul.mubr.bf16.gmra.mrb[0].mxu0 %v4004
      %v4685 = vpop.f32.mrb[0].mxu0
      %v4686 = vadd.f32 0.0, %v4685
      %v4687 = vpop.f32.mrb[0].mxu0
      %v4688 = vadd.f32 0.0, %v4687
      %v4689 = vpop.f32.mrb[0].mxu0
      %v4690 = vadd.f32 0.0, %v4689
      %v4691 = vpop.f32.mrb[0].mxu0
      %v4692 = vadd.f32 0.0, %v4691
      %4693 = vdwg.mxu0
      %v4694 = vrcp.pop %v4581
      %v4695 = vrcp.pop %v4618
      %v4696 = vmul.f32 %v4686, %v4694
      %v4697 = vmul.f32 %v4688, %v4695
      %v4698 = vmul.f32 %v4690, %v4694
      %v4699 = vmul.f32 %v4692, %v4695
      %v4700 = vpack.c.bf16 %v4698, %v4696
      %v4701 = vpack.c.bf16 %v4699, %v4697
      %4702 = vst [vmem:[#allocation3 + $0x30] sm:$0xff] %v4700
      %4703 = vst [vmem:[#allocation3 + $0x38] sm:$0xff] %v4701
      %v4704 = vld [vmem:[%s9] sm:$0xf]
      %v4705 = vld [vmem:[%s9 + $0x4] sm:$0xf]
      %v4706 = vld [vmem:[%s9 + $0x8] sm:$0xf]
      %v4707 = vld [vmem:[%s9 + $0xc] sm:$0xf]
      %v4708 = vld [vmem:[%s9 + $0x10] sm:$0xf]
      %v4709 = vld [vmem:[%s9 + $0x14] sm:$0xf]
      %v4710 = vld [vmem:[%s9 + $0x18] sm:$0xf]
      %v4711 = vld [vmem:[%s9 + $0x1c] sm:$0xf]
      %v4712 = vld [vmem:[#allocation3] sm:$0xff]
      %v4713 = vld [vmem:[#allocation3 + $0x8] sm:$0xff]
      %v4714 = vld [vmem:[#allocation3 + $0x10] sm:$0xff]
      %v4715 = vld [vmem:[#allocation3 + $0x18] sm:$0xff]
      %v4716 = vld [vmem:[#allocation3 + $0x20] sm:$0xff]
      %v4717 = vld [vmem:[#allocation3 + $0x28] sm:$0xff]
      %v4718 = vld [vmem:[#allocation3 + $0x30] sm:$0xff]
      %v4719 = vld [vmem:[#allocation3 + $0x38] sm:$0xff]
      %v4720 = vld [vmem:[%s10] sm:$0xff]
      %v4721 = vld [vmem:[%s10 + $0x8] sm:$0xff]
      %v4722 = vld [vmem:[%s10 + $0x10] sm:$0xff]
      %v4723 = vld [vmem:[%s10 + $0x18] sm:$0xff]
      %v4724 = vld [vmem:[%s10 + $0x20] sm:$0xff]
      %v4725 = vld [vmem:[%s10 + $0x28] sm:$0xff]
      %v4726 = vld [vmem:[%s10 + $0x30] sm:$0xff]
      %v4727 = vld [vmem:[%s10 + $0x38] sm:$0xff]
      %4729 = vset.pattern.permute.xlu0 0
      %4730 = vperm.xlu0 %4729, %v4720
      %v4731 = vpop.permute.xlu0 %4730
      %4734 = vset.pattern.permute.xlu0 0
      %4735 = vperm.xlu0 %4734, %v4721
      %v4736 = vpop.permute.xlu0 %4735
      %4739 = vset.pattern.permute.xlu0 0
      %4740 = vperm.xlu0 %4739, %v4722
      %v4741 = vpop.permute.xlu0 %4740
      %4744 = vset.pattern.permute.xlu0 0
      %4745 = vperm.xlu0 %4744, %v4723
      %v4746 = vpop.permute.xlu0 %4745
      %4749 = vset.pattern.permute.xlu0 0
      %4750 = vperm.xlu0 %4749, %v4724
      %v4751 = vpop.permute.xlu0 %4750
      %4754 = vset.pattern.permute.xlu0 0
      %4755 = vperm.xlu0 %4754, %v4725
      %v4756 = vpop.permute.xlu0 %4755
      %4759 = vset.pattern.permute.xlu0 0
      %4760 = vperm.xlu0 %4759, %v4726
      %v4761 = vpop.permute.xlu0 %4760
      %4764 = vset.pattern.permute.xlu0 0
      %4765 = vperm.xlu0 %4764, %v4727
      %v4766 = vpop.permute.xlu0 %4765
      %v4776 = vunpack.c.l.b16 %v4704
      %v4777 = vunpack.c.l.b16 %v4705
      %v4778 = vunpack.c.l.b16 %v4706
      %v4779 = vunpack.c.l.b16 %v4707
      %v4780 = vunpack.c.l.b16 %v4708
      %v4781 = vunpack.c.l.b16 %v4709
      %v4782 = vunpack.c.l.b16 %v4710
      %v4783 = vunpack.c.l.b16 %v4711
      %v4784 = vpack.c.b16 %v4777, %v4776
      %v4785 = vpack.c.b16 %v4779, %v4778
      %v4786 = vpack.c.b16 %v4781, %v4780
      %v4787 = vpack.c.b16 %v4783, %v4782
      %v4789 = vsel %vm528, %v4784, 0
      %v4792 = vsel %vm528, %v4785, 0
      %v4795 = vsel %vm528, %v4786, 0
      %v4798 = vsel %vm528, %v4787, 0
      %4800 = vmatprep.subr.bf16.mxu0 %v4713
      %4801 = vmatpush1.bf16.msra.mxu0 %v4712
      %4802 = vmatprep.subr.bf16.mxu0 %v4715
      %4803 = vmatpush1.bf16.msra.mxu0 %v4714
      %4804 = vmatprep.subr.bf16.mxu0 %v4717
      %4805 = vmatpush1.bf16.msra.mxu0 %v4716
      %4806 = vmatprep.subr.bf16.mxu0 %v4719
      %4807 = vmatpush1.bf16.msra.mxu0 %v4718
      %4808 = vmatprep.subr.bf16.mxu0 0
      %4809 = vmatpush1.bf16.msra.mxu0 0
      %4810 = vmatprep.subr.bf16.mxu0 0
      %4811 = vmatpush1.bf16.msra.mxu0 0
      %4812 = vmatprep.subr.bf16.mxu0 0
      %4813 = vmatpush1.bf16.msra.mxu0 0
      %4814 = vmatprep.subr.bf16.mxu0 0
      %4815 = vmatpush1.bf16.msra.mxu0 0
      %4816 = vmatprep.subr.bf16.mxu0 0
      %4817 = vmatpush1.bf16.msra.mxu0 0
      %4818 = vmatprep.subr.bf16.mxu0 0
      %4819 = vmatpush1.bf16.msra.mxu0 0
      %4820 = vmatprep.subr.bf16.mxu0 0
      %4821 = vmatpush1.bf16.msra.mxu0 0
      %4822 = vmatprep.subr.bf16.mxu0 0
      %4823 = vmatpush1.bf16.msra.mxu0 0
      %4824 = vmatprep.subr.bf16.mxu0 0
      %4825 = vmatpush1.bf16.msra.mxu0 0
      %4826 = vmatprep.subr.bf16.mxu0 0
      %4827 = vmatpush1.bf16.msra.mxu0 0
      %4828 = vmatprep.subr.bf16.mxu0 0
      %4829 = vmatpush1.bf16.msra.mxu0 0
      %4830 = vmatprep.subr.bf16.mxu0 0
      %4831 = vmatpush1.bf16.msra.mxu0 0
      %4832 = vmatprep.mubr.bf16.mxu0 0
      %4833 = vmatmul.mubr.bf16.gmra.mrb[0].mxu0 %v4789
      %v4834 = vpop.f32.mrb[0].mxu0
      %v4835 = vadd.f32 %v4731, %v4834
      %v4836 = vpop.f32.mrb[0].mxu0
      %v4837 = vadd.f32 %v4731, %v4836
      %v4838 = vpop.f32.mrb[0].mxu0
      %v4839 = vadd.f32 %v4736, %v4838
      %v4840 = vpop.f32.mrb[0].mxu0
      %v4841 = vadd.f32 %v4736, %v4840
      %4842 = vmatprep.mubr.bf16.mxu0 0
      %4843 = vmatmul.mubr.bf16.gmra.mrb[0].mxu0 %v4792
      %v4844 = vpop.f32.mrb[0].mxu0
      %v4845 = vadd.f32 %v4741, %v4844
      %v4846 = vpop.f32.mrb[0].mxu0
      %v4847 = vadd.f32 %v4741, %v4846
      %v4848 = vpop.f32.mrb[0].mxu0
      %v4849 = vadd.f32 %v4746, %v4848
      %v4850 = vpop.f32.mrb[0].mxu0
      %v4851 = vadd.f32 %v4746, %v4850
      %4852 = vmatprep.mubr.bf16.mxu0 0
      %4853 = vmatmul.mubr.bf16.gmra.mrb[0].mxu0 %v4795
      %v4854 = vpop.f32.mrb[0].mxu0
      %v4855 = vadd.f32 %v4751, %v4854
      %v4856 = vpop.f32.mrb[0].mxu0
      %v4857 = vadd.f32 %v4751, %v4856
      %v4858 = vpop.f32.mrb[0].mxu0
      %v4859 = vadd.f32 %v4756, %v4858
      %v4860 = vpop.f32.mrb[0].mxu0
      %v4861 = vadd.f32 %v4756, %v4860
      %4862 = vmatprep.mubr.bf16.mxu0 0
      %4863 = vmatmul.mubr.bf16.gmra.mrb[0].mxu0 %v4798
      %v4864 = vpop.f32.mrb[0].mxu0
      %v4865 = vadd.f32 %v4761, %v4864
      %v4866 = vpop.f32.mrb[0].mxu0
      %v4867 = vadd.f32 %v4761, %v4866
      %v4868 = vpop.f32.mrb[0].mxu0
      %v4869 = vadd.f32 %v4766, %v4868
      %v4870 = vpop.f32.mrb[0].mxu0
      %v4871 = vadd.f32 %v4766, %v4870
      %4872 = vdwg.mxu0
      %v4873 = vadd.f32 %v408, %v4835
      %v4874 = vadd.f32 %v409, %v4837
      %v4875 = vadd.f32 %v410, %v4839
      %v4876 = vadd.f32 %v411, %v4841
      %v4877 = vadd.f32 %v412, %v4845
      %v4878 = vadd.f32 %v413, %v4847
      %v4879 = vadd.f32 %v414, %v4849
      %v4880 = vadd.f32 %v415, %v4851
      %v4881 = vadd.f32 %v416, %v4855
      %v4882 = vadd.f32 %v417, %v4857
      %v4883 = vadd.f32 %v418, %v4859
      %v4884 = vadd.f32 %v419, %v4861
      %v4885 = vadd.f32 %v420, %v4865
      %v4886 = vadd.f32 %v421, %v4867
      %v4887 = vadd.f32 %v422, %v4869
      %v4888 = vadd.f32 %v423, %v4871
      %4889 = vst [vmem:[%s406] sm:$0xff] %v4873
      %4890 = vst [vmem:[%s406 + $0x8] sm:$0xff] %v4874
      %4891 = vst [vmem:[%s406 + $0x10] sm:$0xff] %v4875
      %4892 = vst [vmem:[%s406 + $0x18] sm:$0xff] %v4876
      %4893 = vst [vmem:[%s406 + $0x20] sm:$0xff] %v4877
      %4894 = vst [vmem:[%s406 + $0x28] sm:$0xff] %v4878
      %4895 = vst [vmem:[%s406 + $0x30] sm:$0xff] %v4879
      %4896 = vst [vmem:[%s406 + $0x38] sm:$0xff] %v4880
      %4897 = vst [vmem:[%s406 + $0x40] sm:$0xff] %v4881
      %4898 = vst [vmem:[%s406 + $0x48] sm:$0xff] %v4882
      %4899 = vst [vmem:[%s406 + $0x50] sm:$0xff] %v4883
      %4900 = vst [vmem:[%s406 + $0x58] sm:$0xff] %v4884
      %4901 = vst [vmem:[%s406 + $0x60] sm:$0xff] %v4885
      %4902 = vst [vmem:[%s406 + $0x68] sm:$0xff] %v4886
      %4903 = vst [vmem:[%s406 + $0x70] sm:$0xff] %v4887
      %4904 = vst [vmem:[%s406 + $0x78] sm:$0xff] %v4888
      %p4905 = scmp.lt.s32.totalorder %s22, 1
      %s4906 = scalar_select %p4905, %s22, 1
      %s4907 = smul.addr %s4906, 16
      %s4908 = smul.addr %s4907, 8
      %s4909 = scalar_lea.vmem %s11, %s4908
      // Predicated region
      $region65: #{cross_attention_block.1} parent=63 // pred_check
        %p4910 = pneg %p281
      $region66: #{cross_attention_block.1} parent=63 // pred_check_branch
        %4912 = sbr.rel (%p4910) target = $region68
      $region67: #{cross_attention_block.1} parent=63 // pred_region
        _
      $region68: #{cross_attention_block.1} parent=63 // pred_fallthru
        _
    $region64: #{cross_attention_block.1} parent=5 // pred_fallthru
      _
    %p4913 = scmp.le.s32.totalorder 2, %s17
    // Predicated region
    $region69: #{cross_attention_block.1} parent=5 // pred_check
      %p4914 = pneg %p4913
    $region70: #{cross_attention_block.1} parent=5 // pred_check_branch
      %4916 = sbr.rel (%p4914) target = $region72
    $region71: #{cross_attention_block.1} parent=5 // pred_region
      %s4917 = ssub.s32 %s17, 2
      // Predicated region
      $region73: #{cross_attention_block.1} parent=71 // pred_check
        %p4918 = pneg %p287
      $region74: #{cross_attention_block.1} parent=71 // pred_check_branch
        %4920 = sbr.rel (%p4918) target = $region76
      $region75: #{cross_attention_block.1} parent=71 // pred_region
        %p4921 = scmp.lt.s32.totalorder %s23, 1
        %s4922 = scalar_select %p4921, %s23, 1
        %s4923 = smul.addr %s4922, 16
        %s4924 = smul.addr %s4923, 8
        %s4925 = scalar_lea.vmem %s11, %s4924
      $region76: #{cross_attention_block.1} parent=71 // pred_fallthru
        _
    $region72: #{cross_attention_block.1} parent=5 // pred_fallthru
      _
  $region6: #{cross_attention_block.1} parent=0 // loop_footer
    %s21 = sadd.s32 1, %s17
  $region7: #{cross_attention_block.1} parent=0 // loop_footer_branch
    %16 = sbr.rel target = $region3
  $region8: #{cross_attention_block.1} parent=0 // loop_exit
    _

</llo_original>
